<compile_context>
chip_gen: v7x
topology: tpu7x:2x2x1
jax: 0.10.0
libtpu: 0.0.40
codegen_flags: <defaults>
</compile_context>

<pallas_src>
import math
import functools

import jax
import jax.numpy as jnp
from jax import lax
from jax.experimental import pallas as pl
from jax.experimental.pallas import tpu as pltpu

# Hard-coded by the PyTorch module: Conv3d(..., dilation=(1,2,2), padding=(0,2,2)) in the spatial mixer.
_SPAT_DIL = 2
_SPAT_PAD = 2
_SQRT_2_OVER_PI = math.sqrt(2.0 / math.pi)


# ----------------------------------------------------------------------------- in-kernel helpers
def _gelu(x):
    # tanh-form GELU (nn.GELU's tanh approximation): the transcendental runs on the EUP slot.
    return 0.5 * x * (1.0 + jnp.tanh(_SQRT_2_OVER_PI * (x + 0.044715 * (x * x * x))))


def _mixer_tail(x, dw_acc, vec, pw_block):
    """dw-bias -> GELU -> BN1 -> residual -> 1x1x1 conv (MXU) -> +bias -> GELU -> BN2.

    x, dw_acc : (D, H, W*C) lane-dense values
    vec       : (6, W*C) = [dw bias, bn1 scale, bn1 bias, pw bias, bn2 scale, bn2 bias], W-tiled
    pw_block  : (W*C, W*C) block-diagonal kron(I_W, Wpw^T)
    """
    D, H, WC = x.shape
    t = _gelu(dw_acc + vec[0])                       # depthwise conv bias + nn.GELU()
    t = t * vec[1] + vec[2]                          # BatchNorm3d #1 (eval, folded affine)
    x1 = t + x                                       # Residual
    y = jnp.dot(x1.reshape(D * H, WC), pw_block,     # 1x1x1 conv as one (64,128)@(128,128) matmul
                preferred_element_type=jnp.float32).reshape(D, H, WC)
    y = _gelu(y + vec[3])                            # conv bias + nn.GELU()
    return y * vec[4] + vec[5]                       # BatchNorm3d #2 (eval, folded affine)


def _fused_mixer_kernel(x_ref, sdw_ref, svec_ref, spw_ref,
                        pdwm_ref, pvec_ref, ppw_ref,
                        out_ref, spat_halo,
                        *, spec_depth, spat_depth, spec_K, spat_Kh, dil, spat_pad):
    _, D, H, WC = x_ref.shape
    pd = spec_K // 2
    ph = spat_pad

    x = x_ref[0]                                     # (D, H, W*C) -- stays resident for all layers

    # -------- Spectral mixer layers: depthwise conv along D (leading axis) ----------------------
    zpad = jnp.zeros((pd, H, WC), jnp.float32)
    for l in range(spec_depth):
        xp = jnp.concatenate([zpad, x, zpad], axis=0)         # in-kernel halo (leading axis, free)
        wdw = sdw_ref[l]                                      # (K, W*C) per-channel taps, W-tiled
        acc = xp[0:D] * wdw[0]
        for k in range(1, spec_K):                            # value slices, single materialization
            acc = acc + xp[k:k + D] * wdw[k]
        x = _mixer_tail(x, acc, svec_ref[l], spw_ref[l])

    # -------- Spatial mixer layers: depthwise dilated conv over (H, W) --------------------------
    # The H halo lives in a zero-initialised VMEM scratch; the W taps + per-channel weights are
    # folded into the (W*C, W*C) matrices in pdwm_ref, so no lane shuffling is ever needed.
    spat_halo[...] = jnp.zeros(spat_halo.shape, jnp.float32)  # zero the margins once per sample
    for l in range(spat_depth):
        spat_halo[:, ph:ph + H, :] = x                        # interior; margins stay zero
        acc = jnp.zeros((D, H, WC), jnp.float32)
        for i in range(spat_Kh):                              # H taps; row offset = i*dil - ph
            if i * dil == ph:
                xh = x                                        # centre tap: skip the scratch read
            else:
                xh = spat_halo[:, i * dil:i * dil + H, :]
            acc = acc + jnp.dot(xh.reshape(D * H, WC), pdwm_ref[l, i],
                                preferred_element_type=jnp.float32).reshape(D, H, WC)
        x = _mixer_tail(x, acc, pvec_ref[l], ppw_ref[l])

    out_ref[0] = x


# ----------------------------------------------------------------------------- parameter packing
def _tile_w(v, W):
    # per-channel vector (C,) -> (W*C,) with value v[c] at lane w*C + c (matches the lane packing)
    return jnp.tile(v.astype(jnp.float32), W)


def _pack_vec(params, W):
    # (L, 6, W*C): [bdw, s1, b1, bpw, s2, b2] per layer, each tiled along W
    keys = ("bdw", "s1", "b1", "bpw", "s2", "b2")
    return jnp.stack([jnp.stack([_tile_w(p[k], W) for k in keys]) for p in params])


def _pack_spec_dw(params, W):
    # p["wdw"]: (C, K) -> (L, K, W*C)
    return jnp.stack([jnp.stack([_tile_w(p["wdw"][:, k], W)
                                 for k in range(p["wdw"].shape[1])]) for p in params])


def _pack_pw(params, W):
    # 1x1x1 conv weight (C_out, C_in) -> block-diagonal (L, W*C, W*C):
    #   B[w*C + ci, w*C + co] = wpw[co, ci]   i.e.  B = kron(I_W, wpw^T)
    eye = jnp.eye(W, dtype=jnp.float32)
    return jnp.stack([jnp.kron(eye, p["wpw"].T.astype(jnp.float32)) for p in params])


def _pack_spat_dw(params, W, dil, pw):
    # Spatial depthwise weight (C, Kh, Kw) -> (L, Kh, W*C, W*C).  For each H-tap i, M_i folds the
    # dilated W-taps, zero padding and per-channel weights:
    #   M_i[w_in*C + ci, w_out*C + co] = (ci == co) * [w_in == w_out + dil*j - pw] * wdw[co, i, j]
    out = []
    for p in params:
        wdw = p["wdw"].astype(jnp.float32)          # (C, Kh, Kw)
        C, Kh, Kw = wdw.shape
        mats = []
        for i in range(Kh):
            M = jnp.zeros((W * C, W * C), jnp.float32)
            for j in range(Kw):
                off = dil * j - pw
                S = jnp.eye(W, k=-off, dtype=jnp.float32)     # S[w_in, w_out] = [w_in == w_out + off]
                M = M + jnp.kron(S, jnp.diag(wdw[:, i, j]))
            mats.append(M)
        out.append(jnp.stack(mats))
    return jnp.stack(out)


# ----------------------------------------------------------------------------- forward wrapper
@jax.jit
def mixer_block_forward(x_ncdhw, spec_params, spat_params):
    """Spectral_Spatial_Mixer_Block.forward — input/output in PyTorch NCDHW layout."""
    N, C, D, H, W = x_ncdhw.shape
    WC = W * C
    x = jnp.transpose(x_ncdhw, (0, 2, 3, 4, 1)).reshape(N, D, H, WC).astype(jnp.float32)

    spec_K = spec_params[0]["wdw"].shape[1]
    spat_Kh = spat_params[0]["wdw"].shape[1]
    pd = spec_K // 2
    assert 2 * pd == spec_K - 1, "spectral kernel size must be odd (size-preserving)"
    assert 2 * _SPAT_PAD - _SPAT_DIL * (spat_Kh - 1) == 0, \
        "spatial conv must preserve H/W (use spat_kernel_size=(1,3,3) with dilation 2, pad 2)"
    Ls, Lp = len(spec_params), len(spat_params)

    sdw = _pack_spec_dw(spec_params, W)                         # (Ls, K, WC)
    svec = _pack_vec(spec_params, W)                            # (Ls, 6, WC)
    spw = _pack_pw(spec_params, W)                              # (Ls, WC, WC)
    pdwm = _pack_spat_dw(spat_params, W, _SPAT_DIL, _SPAT_PAD)  # (Lp, Kh, WC, WC)
    pvec = _pack_vec(spat_params, W)                            # (Lp, 6, WC)
    ppw = _pack_pw(spat_params, W)                              # (Lp, WC, WC)

    def _full(a):  # whole-array block, constant block index -> DMA'd once, stays VMEM-resident
        return pl.BlockSpec(a.shape, lambda n, _nd=a.ndim: (0,) * _nd)

    kernel = functools.partial(
        _fused_mixer_kernel,
        spec_depth=Ls, spat_depth=Lp, spec_K=spec_K, spat_Kh=spat_Kh,
        dil=_SPAT_DIL, spat_pad=_SPAT_PAD)

    out = pl.pallas_call(
        kernel,
        out_shape=jax.ShapeDtypeStruct((N, D, H, WC), jnp.float32),
        grid=(N,),
        in_specs=[pl.BlockSpec((1, D, H, WC), lambda n: (n, 0, 0, 0)),
                  _full(sdw), _full(svec), _full(spw),
                  _full(pdwm), _full(pvec), _full(ppw)],
        out_specs=pl.BlockSpec((1, D, H, WC), lambda n: (n, 0, 0, 0)),
        scratch_shapes=[pltpu.VMEM((D, H + 2 * _SPAT_PAD, WC), jnp.float32)],
        compiler_params=pltpu.CompilerParams(
            dimension_semantics=("parallel",),
            vmem_limit_bytes=32 * 1024 * 1024),
    )(x, sdw, svec, spw, pdwm, pvec, ppw)

    return jnp.transpose(out.reshape(N, D, H, W, C), (0, 4, 1, 2, 3))   # back to NCDHW


# ----------------------------------------------------------------------------- params & reference
def _bn_affine(key, C, eps=1e-5):
    k1, k2, k3, k4 = jax.random.split(key, 4)
    gamma = 1.0 + 0.1 * jax.random.normal(k1, (C,), jnp.float32)
    beta = 0.05 * jax.random.normal(k2, (C,), jnp.float32)
    rmean = 0.05 * jax.random.normal(k3, (C,), jnp.float32)
    rvar = jax.random.uniform(k4, (C,), jnp.float32, 0.5, 1.5)
    scale = gamma / jnp.sqrt(rvar + eps)
    bias = beta - rmean * scale
    return scale, bias


def _init_step(key, C, dw_shape):
    ks = jax.random.split(key, 6)
    fan = 1
    for s in dw_shape:
        fan *= s
    wdw = jax.random.normal(ks[0], (C,) + dw_shape, jnp.float32) / math.sqrt(fan)
    bdw = 0.05 * jax.random.normal(ks[1], (C,), jnp.float32)
    s1, b1 = _bn_affine(ks[2], C)
    wpw = jax.random.normal(ks[3], (C, C), jnp.float32) / math.sqrt(C)   # (C_out, C_in)
    bpw = 0.05 * jax.random.normal(ks[4], (C,), jnp.float32)
    s2, b2 = _bn_affine(ks[5], C)
    return dict(wdw=wdw, bdw=bdw, s1=s1, b1=b1, wpw=wpw, bpw=bpw, s2=s2, b2=b2)


def reference_forward(x, spec_params, spat_params):
    """Pure-JAX (XLA) reference mirroring the PyTorch module (exact erf-GELU), NCDHW."""
    HIGH = lax.Precision.HIGHEST
    C = x.shape[1]

    def chan(v):
        return v[None, :, None, None, None]

    def tail(x, p):
        x = jnp.einsum("ncdhw,oc->nodhw", x, p["wpw"], precision=HIGH) + chan(p["bpw"])
        x = jax.nn.gelu(x, approximate=False)
        return x * chan(p["s2"]) + chan(p["b2"])

    for p in spec_params:
        K = p["wdw"].shape[1]
        pad = K // 2
        w = p["wdw"][:, None, :, None, None]            # (C, 1, K, 1, 1)
        t = lax.conv_general_dilated(x, w, (1, 1, 1), [(pad, pad), (0, 0), (0, 0)],
                                     dimension_numbers=("NCDHW", "OIDHW", "NCDHW"),
                                     feature_group_count=C, precision=HIGH)
        t = jax.nn.gelu(t + chan(p["bdw"]), approximate=False)
        t = t * chan(p["s1"]) + chan(p["b1"])
        x = tail(t + x, p)

    for p in spat_params:
        w = p["wdw"][:, None, None, :, :]               # (C, 1, 1, Kh, Kw)
        t = lax.conv_general_dilated(x, w, (1, 1, 1), [(0, 0), (2, 2), (2, 2)],
                                     rhs_dilation=(1, 2, 2),
                                     dimension_numbers=("NCDHW", "OIDHW", "NCDHW"),
                                     feature_group_count=C, precision=HIGH)
        t = jax.nn.gelu(t + chan(p["bdw"]), approximate=False)
        t = t * chan(p["s1"]) + chan(p["b1"])
        x = tail(t + x, p)
    return x


# ----------------------------------------------------------------------------- main
if __name__ == "__main__":
    N, dim, D, H, W = 2, 16, 8, 8, 8
    depth = 2
    spec_k = 7          # spec_kernel_size=(7, 1, 1)  (module default)
    spat_k = 3          # spat_kernel_size=(1, 3, 3)  (size-preserving with dilation (1,2,2), pad (0,2,2))

    key = jax.random.PRNGKey(0)
    kx, kp = jax.random.split(key)
    x = jax.random.normal(kx, (N, dim, D, H, W), jnp.float32)

    keys = jax.random.split(kp, 2 * depth)
    spec_params = [_init_step(keys[i], dim, (spec_k,)) for i in range(depth)]
    spat_params = [_init_step(keys[depth + i], dim, (spat_k, spat_k)) for i in range(depth)]

    out = jax.block_until_ready(mixer_block_forward(x, spec_params, spat_params))
    ref = jax.block_until_ready(reference_forward(x, spec_params, spat_params))

    assert out.shape == ref.shape == (N, dim, D, H, W)
    max_err = float(jnp.max(jnp.abs(out - ref)))
    scale = float(jnp.max(jnp.abs(ref)))
    # Tolerance accounts for the tanh-form GELU used in-kernel (<=~6e-4 deviation per application,
    # 8 applications across the 4 fused layers) and MXU matmul rounding; any structural bug
    # (wrong tap/shift/weight wiring) produces O(0.1+) errors and is still caught.
    assert max_err <= 2e-2 * max(1.0, scale), f"mismatch: max_err={max_err}, scale={scale}"
    print("KERNEL_OK")
</pallas_src>

<mosaic_0001>
module attributes {stable_mosaic.version = 11 : i64} {
  func.func @_fused_mixer_kernel(%arg0: i32, %arg1: memref<1x8x8x128xf32, #tpu.memory_space<vmem>>, %arg2: memref<2x7x128xf32, #tpu.memory_space<vmem>>, %arg3: memref<2x6x128xf32, #tpu.memory_space<vmem>>, %arg4: memref<2x128x128xf32, #tpu.memory_space<vmem>>, %arg5: memref<2x3x128x128xf32, #tpu.memory_space<vmem>>, %arg6: memref<2x6x128xf32, #tpu.memory_space<vmem>>, %arg7: memref<2x128x128xf32, #tpu.memory_space<vmem>>, %arg8: memref<1x8x8x128xf32, #tpu.memory_space<vmem>>, %arg9: memref<8x12x128xf32, #tpu.memory_space<vmem>>) attributes {dimension_semantics = [#tpu.dimension_semantics<parallel>], iteration_bounds = array<i64: 2>, scalar_prefetch = 0 : i64, scratch_operands = 1 : i64, tpu.core_type = #tpu.core_type<tc>, window_params = [{transform_indices = @transform_0, window_bounds = array<i64: 1, 8, 8, 128>}, {pipeline_mode = #tpu.pipeline_mode<synchronous>, transform_indices = @transform_1, window_bounds = array<i64: 2, 7, 128>}, {pipeline_mode = #tpu.pipeline_mode<synchronous>, transform_indices = @transform_2, window_bounds = array<i64: 2, 6, 128>}, {pipeline_mode = #tpu.pipeline_mode<synchronous>, transform_indices = @transform_3, window_bounds = array<i64: 2, 128, 128>}, {pipeline_mode = #tpu.pipeline_mode<synchronous>, transform_indices = @transform_4, window_bounds = array<i64: 2, 3, 128, 128>}, {pipeline_mode = #tpu.pipeline_mode<synchronous>, transform_indices = @transform_5, window_bounds = array<i64: 2, 6, 128>}, {pipeline_mode = #tpu.pipeline_mode<synchronous>, transform_indices = @transform_6, window_bounds = array<i64: 2, 128, 128>}, {transform_indices = @transform_7, window_bounds = array<i64: 1, 8, 8, 128>}]} {
    %c0 = arith.constant 0 : index
    %c0_0 = arith.constant 0 : index
    %c0_1 = arith.constant 0 : index
    %c0_2 = arith.constant 0 : index
    %0 = vector.load %arg1[%c0, %c0_0, %c0_1, %c0_2] : memref<1x8x8x128xf32, #tpu.memory_space<vmem>>, vector<1x8x8x128xf32>
    %1 = vector.shape_cast %0 : vector<1x8x8x128xf32> to vector<8x8x128xf32>
    %cst = arith.constant 0.000000e+00 : f32
    %2 = vector.broadcast %cst : f32 to vector<3x8x128xf32>
    %3 = tpu.concatenate %2, %1, %2 in 0 : vector<3x8x128xf32>, vector<8x8x128xf32>, vector<3x8x128xf32> -> vector<14x8x128xf32>
    %c0_3 = arith.constant 0 : index
    %c0_4 = arith.constant 0 : index
    %c0_5 = arith.constant 0 : index
    %4 = vector.load %arg2[%c0_3, %c0_4, %c0_5] : memref<2x7x128xf32, #tpu.memory_space<vmem>>, vector<1x7x128xf32>
    %5 = vector.shape_cast %4 : vector<1x7x128xf32> to vector<7x128xf32>
    %6 = vector.extract_strided_slice %3 {offsets = [0, 0, 0], sizes = [8, 8, 128], strides = [1, 1, 1]} : vector<14x8x128xf32> to vector<8x8x128xf32>
    %7 = vector.extract_strided_slice %5 {offsets = [0, 0], sizes = [1, 128], strides = [1, 1]} : vector<7x128xf32> to vector<1x128xf32>
    %8 = vector.shape_cast %7 : vector<1x128xf32> to vector<128xf32>
    %9 = vector.shape_cast %8 : vector<128xf32> to vector<1x1x128xf32>
    %10 = vector.broadcast %9 : vector<1x1x128xf32> to vector<8x8x128xf32>
    %11 = arith.mulf %6, %10 : vector<8x8x128xf32>
    %12 = vector.extract_strided_slice %3 {offsets = [1, 0, 0], sizes = [8, 8, 128], strides = [1, 1, 1]} : vector<14x8x128xf32> to vector<8x8x128xf32>
    %13 = vector.extract_strided_slice %5 {offsets = [1, 0], sizes = [1, 128], strides = [1, 1]} : vector<7x128xf32> to vector<1x128xf32>
    %14 = vector.shape_cast %13 : vector<1x128xf32> to vector<128xf32>
    %15 = vector.shape_cast %14 : vector<128xf32> to vector<1x1x128xf32>
    %16 = vector.broadcast %15 : vector<1x1x128xf32> to vector<8x8x128xf32>
    %17 = arith.mulf %12, %16 : vector<8x8x128xf32>
    %18 = arith.addf %11, %17 : vector<8x8x128xf32>
    %19 = vector.extract_strided_slice %3 {offsets = [2, 0, 0], sizes = [8, 8, 128], strides = [1, 1, 1]} : vector<14x8x128xf32> to vector<8x8x128xf32>
    %20 = vector.extract_strided_slice %5 {offsets = [2, 0], sizes = [1, 128], strides = [1, 1]} : vector<7x128xf32> to vector<1x128xf32>
    %21 = vector.shape_cast %20 : vector<1x128xf32> to vector<128xf32>
    %22 = vector.shape_cast %21 : vector<128xf32> to vector<1x1x128xf32>
    %23 = vector.broadcast %22 : vector<1x1x128xf32> to vector<8x8x128xf32>
    %24 = arith.mulf %19, %23 : vector<8x8x128xf32>
    %25 = arith.addf %18, %24 : vector<8x8x128xf32>
    %26 = vector.extract_strided_slice %3 {offsets = [3, 0, 0], sizes = [8, 8, 128], strides = [1, 1, 1]} : vector<14x8x128xf32> to vector<8x8x128xf32>
    %27 = vector.extract_strided_slice %5 {offsets = [3, 0], sizes = [1, 128], strides = [1, 1]} : vector<7x128xf32> to vector<1x128xf32>
    %28 = vector.shape_cast %27 : vector<1x128xf32> to vector<128xf32>
    %29 = vector.shape_cast %28 : vector<128xf32> to vector<1x1x128xf32>
    %30 = vector.broadcast %29 : vector<1x1x128xf32> to vector<8x8x128xf32>
    %31 = arith.mulf %26, %30 : vector<8x8x128xf32>
    %32 = arith.addf %25, %31 : vector<8x8x128xf32>
    %33 = vector.extract_strided_slice %3 {offsets = [4, 0, 0], sizes = [8, 8, 128], strides = [1, 1, 1]} : vector<14x8x128xf32> to vector<8x8x128xf32>
    %34 = vector.extract_strided_slice %5 {offsets = [4, 0], sizes = [1, 128], strides = [1, 1]} : vector<7x128xf32> to vector<1x128xf32>
    %35 = vector.shape_cast %34 : vector<1x128xf32> to vector<128xf32>
    %36 = vector.shape_cast %35 : vector<128xf32> to vector<1x1x128xf32>
    %37 = vector.broadcast %36 : vector<1x1x128xf32> to vector<8x8x128xf32>
    %38 = arith.mulf %33, %37 : vector<8x8x128xf32>
    %39 = arith.addf %32, %38 : vector<8x8x128xf32>
    %40 = vector.extract_strided_slice %3 {offsets = [5, 0, 0], sizes = [8, 8, 128], strides = [1, 1, 1]} : vector<14x8x128xf32> to vector<8x8x128xf32>
    %41 = vector.extract_strided_slice %5 {offsets = [5, 0], sizes = [1, 128], strides = [1, 1]} : vector<7x128xf32> to vector<1x128xf32>
    %42 = vector.shape_cast %41 : vector<1x128xf32> to vector<128xf32>
    %43 = vector.shape_cast %42 : vector<128xf32> to vector<1x1x128xf32>
    %44 = vector.broadcast %43 : vector<1x1x128xf32> to vector<8x8x128xf32>
    %45 = arith.mulf %40, %44 : vector<8x8x128xf32>
    %46 = arith.addf %39, %45 : vector<8x8x128xf32>
    %47 = vector.extract_strided_slice %3 {offsets = [6, 0, 0], sizes = [8, 8, 128], strides = [1, 1, 1]} : vector<14x8x128xf32> to vector<8x8x128xf32>
    %48 = vector.extract_strided_slice %5 {offsets = [6, 0], sizes = [1, 128], strides = [1, 1]} : vector<7x128xf32> to vector<1x128xf32>
    %49 = vector.shape_cast %48 : vector<1x128xf32> to vector<128xf32>
    %50 = vector.shape_cast %49 : vector<128xf32> to vector<1x1x128xf32>
    %51 = vector.broadcast %50 : vector<1x1x128xf32> to vector<8x8x128xf32>
    %52 = arith.mulf %47, %51 : vector<8x8x128xf32>
    %53 = arith.addf %46, %52 : vector<8x8x128xf32>
    %c0_6 = arith.constant 0 : index
    %c0_7 = arith.constant 0 : index
    %c0_8 = arith.constant 0 : index
    %54 = vector.load %arg3[%c0_6, %c0_7, %c0_8] : memref<2x6x128xf32, #tpu.memory_space<vmem>>, vector<1x6x128xf32>
    %55 = vector.shape_cast %54 : vector<1x6x128xf32> to vector<6x128xf32>
    %c0_9 = arith.constant 0 : index
    %c0_10 = arith.constant 0 : index
    %c0_11 = arith.constant 0 : index
    %56 = vector.load %arg4[%c0_9, %c0_10, %c0_11] : memref<2x128x128xf32, #tpu.memory_space<vmem>>, vector<1x128x128xf32>
    %57 = vector.shape_cast %56 : vector<1x128x128xf32> to vector<128x128xf32>
    %58 = vector.extract_strided_slice %55 {offsets = [0, 0], sizes = [1, 128], strides = [1, 1]} : vector<6x128xf32> to vector<1x128xf32>
    %59 = vector.shape_cast %58 : vector<1x128xf32> to vector<128xf32>
    %60 = vector.shape_cast %59 : vector<128xf32> to vector<1x1x128xf32>
    %61 = vector.broadcast %60 : vector<1x1x128xf32> to vector<8x8x128xf32>
    %62 = arith.addf %53, %61 : vector<8x8x128xf32>
    %cst_12 = arith.constant 5.000000e-01 : f32
    %63 = vector.broadcast %cst_12 : f32 to vector<8x8x128xf32>
    %64 = arith.mulf %63, %62 : vector<8x8x128xf32>
    %65 = arith.mulf %62, %62 : vector<8x8x128xf32>
    %66 = arith.mulf %65, %62 : vector<8x8x128xf32>
    %cst_13 = arith.constant 4.471500e-02 : f32
    %67 = vector.broadcast %cst_13 : f32 to vector<8x8x128xf32>
    %68 = arith.mulf %67, %66 : vector<8x8x128xf32>
    %69 = arith.addf %62, %68 : vector<8x8x128xf32>
    %cst_14 = arith.constant 0.797884583 : f32
    %70 = vector.broadcast %cst_14 : f32 to vector<8x8x128xf32>
    %71 = arith.mulf %70, %69 : vector<8x8x128xf32>
    %72 = math.tanh %71 : vector<8x8x128xf32>
    %cst_15 = arith.constant 1.000000e+00 : f32
    %73 = vector.broadcast %cst_15 : f32 to vector<8x8x128xf32>
    %74 = arith.addf %73, %72 : vector<8x8x128xf32>
    %75 = arith.mulf %64, %74 : vector<8x8x128xf32>
    %76 = vector.extract_strided_slice %55 {offsets = [1, 0], sizes = [1, 128], strides = [1, 1]} : vector<6x128xf32> to vector<1x128xf32>
    %77 = vector.shape_cast %76 : vector<1x128xf32> to vector<128xf32>
    %78 = vector.shape_cast %77 : vector<128xf32> to vector<1x1x128xf32>
    %79 = vector.broadcast %78 : vector<1x1x128xf32> to vector<8x8x128xf32>
    %80 = arith.mulf %75, %79 : vector<8x8x128xf32>
    %81 = vector.extract_strided_slice %55 {offsets = [2, 0], sizes = [1, 128], strides = [1, 1]} : vector<6x128xf32> to vector<1x128xf32>
    %82 = vector.shape_cast %81 : vector<1x128xf32> to vector<128xf32>
    %83 = vector.shape_cast %82 : vector<128xf32> to vector<1x1x128xf32>
    %84 = vector.broadcast %83 : vector<1x1x128xf32> to vector<8x8x128xf32>
    %85 = arith.addf %80, %84 : vector<8x8x128xf32>
    %86 = arith.addf %85, %1 : vector<8x8x128xf32>
    %87 = vector.shape_cast %86 : vector<8x8x128xf32> to vector<64x128xf32>
    %cst_16 = arith.constant dense<0.000000e+00> : vector<64x128xf32>
    %88 = tpu.matmul %87, %57, %cst_16 {dimension_numbers = #tpu.dot_dimension_numbers<[1], [0], [0], [1], [0, 0, 1, 1], [], []>} : vector<64x128xf32>, vector<128x128xf32>, vector<64x128xf32> -> vector<64x128xf32>
    %89 = vector.shape_cast %88 : vector<64x128xf32> to vector<8x8x128xf32>
    %90 = vector.extract_strided_slice %55 {offsets = [3, 0], sizes = [1, 128], strides = [1, 1]} : vector<6x128xf32> to vector<1x128xf32>
    %91 = vector.shape_cast %90 : vector<1x128xf32> to vector<128xf32>
    %92 = vector.shape_cast %91 : vector<128xf32> to vector<1x1x128xf32>
    %93 = vector.broadcast %92 : vector<1x1x128xf32> to vector<8x8x128xf32>
    %94 = arith.addf %89, %93 : vector<8x8x128xf32>
    %cst_17 = arith.constant 5.000000e-01 : f32
    %95 = vector.broadcast %cst_17 : f32 to vector<8x8x128xf32>
    %96 = arith.mulf %95, %94 : vector<8x8x128xf32>
    %97 = arith.mulf %94, %94 : vector<8x8x128xf32>
    %98 = arith.mulf %97, %94 : vector<8x8x128xf32>
    %cst_18 = arith.constant 4.471500e-02 : f32
    %99 = vector.broadcast %cst_18 : f32 to vector<8x8x128xf32>
    %100 = arith.mulf %99, %98 : vector<8x8x128xf32>
    %101 = arith.addf %94, %100 : vector<8x8x128xf32>
    %cst_19 = arith.constant 0.797884583 : f32
    %102 = vector.broadcast %cst_19 : f32 to vector<8x8x128xf32>
    %103 = arith.mulf %102, %101 : vector<8x8x128xf32>
    %104 = math.tanh %103 : vector<8x8x128xf32>
    %cst_20 = arith.constant 1.000000e+00 : f32
    %105 = vector.broadcast %cst_20 : f32 to vector<8x8x128xf32>
    %106 = arith.addf %105, %104 : vector<8x8x128xf32>
    %107 = arith.mulf %96, %106 : vector<8x8x128xf32>
    %108 = vector.extract_strided_slice %55 {offsets = [4, 0], sizes = [1, 128], strides = [1, 1]} : vector<6x128xf32> to vector<1x128xf32>
    %109 = vector.shape_cast %108 : vector<1x128xf32> to vector<128xf32>
    %110 = vector.shape_cast %109 : vector<128xf32> to vector<1x1x128xf32>
    %111 = vector.broadcast %110 : vector<1x1x128xf32> to vector<8x8x128xf32>
    %112 = arith.mulf %107, %111 : vector<8x8x128xf32>
    %113 = vector.extract_strided_slice %55 {offsets = [5, 0], sizes = [1, 128], strides = [1, 1]} : vector<6x128xf32> to vector<1x128xf32>
    %114 = vector.shape_cast %113 : vector<1x128xf32> to vector<128xf32>
    %115 = vector.shape_cast %114 : vector<128xf32> to vector<1x1x128xf32>
    %116 = vector.broadcast %115 : vector<1x1x128xf32> to vector<8x8x128xf32>
    %117 = arith.addf %112, %116 : vector<8x8x128xf32>
    %118 = tpu.concatenate %2, %117, %2 in 0 : vector<3x8x128xf32>, vector<8x8x128xf32>, vector<3x8x128xf32> -> vector<14x8x128xf32>
    %c1 = arith.constant 1 : index
    %c0_21 = arith.constant 0 : index
    %c0_22 = arith.constant 0 : index
    %119 = vector.load %arg2[%c1, %c0_21, %c0_22] : memref<2x7x128xf32, #tpu.memory_space<vmem>>, vector<1x7x128xf32>
    %120 = vector.shape_cast %119 : vector<1x7x128xf32> to vector<7x128xf32>
    %121 = vector.extract_strided_slice %118 {offsets = [0, 0, 0], sizes = [8, 8, 128], strides = [1, 1, 1]} : vector<14x8x128xf32> to vector<8x8x128xf32>
    %122 = vector.extract_strided_slice %120 {offsets = [0, 0], sizes = [1, 128], strides = [1, 1]} : vector<7x128xf32> to vector<1x128xf32>
    %123 = vector.shape_cast %122 : vector<1x128xf32> to vector<128xf32>
    %124 = vector.shape_cast %123 : vector<128xf32> to vector<1x1x128xf32>
    %125 = vector.broadcast %124 : vector<1x1x128xf32> to vector<8x8x128xf32>
    %126 = arith.mulf %121, %125 : vector<8x8x128xf32>
    %127 = vector.extract_strided_slice %118 {offsets = [1, 0, 0], sizes = [8, 8, 128], strides = [1, 1, 1]} : vector<14x8x128xf32> to vector<8x8x128xf32>
    %128 = vector.extract_strided_slice %120 {offsets = [1, 0], sizes = [1, 128], strides = [1, 1]} : vector<7x128xf32> to vector<1x128xf32>
    %129 = vector.shape_cast %128 : vector<1x128xf32> to vector<128xf32>
    %130 = vector.shape_cast %129 : vector<128xf32> to vector<1x1x128xf32>
    %131 = vector.broadcast %130 : vector<1x1x128xf32> to vector<8x8x128xf32>
    %132 = arith.mulf %127, %131 : vector<8x8x128xf32>
    %133 = arith.addf %126, %132 : vector<8x8x128xf32>
    %134 = vector.extract_strided_slice %118 {offsets = [2, 0, 0], sizes = [8, 8, 128], strides = [1, 1, 1]} : vector<14x8x128xf32> to vector<8x8x128xf32>
    %135 = vector.extract_strided_slice %120 {offsets = [2, 0], sizes = [1, 128], strides = [1, 1]} : vector<7x128xf32> to vector<1x128xf32>
    %136 = vector.shape_cast %135 : vector<1x128xf32> to vector<128xf32>
    %137 = vector.shape_cast %136 : vector<128xf32> to vector<1x1x128xf32>
    %138 = vector.broadcast %137 : vector<1x1x128xf32> to vector<8x8x128xf32>
    %139 = arith.mulf %134, %138 : vector<8x8x128xf32>
    %140 = arith.addf %133, %139 : vector<8x8x128xf32>
    %141 = vector.extract_strided_slice %118 {offsets = [3, 0, 0], sizes = [8, 8, 128], strides = [1, 1, 1]} : vector<14x8x128xf32> to vector<8x8x128xf32>
    %142 = vector.extract_strided_slice %120 {offsets = [3, 0], sizes = [1, 128], strides = [1, 1]} : vector<7x128xf32> to vector<1x128xf32>
    %143 = vector.shape_cast %142 : vector<1x128xf32> to vector<128xf32>
    %144 = vector.shape_cast %143 : vector<128xf32> to vector<1x1x128xf32>
    %145 = vector.broadcast %144 : vector<1x1x128xf32> to vector<8x8x128xf32>
    %146 = arith.mulf %141, %145 : vector<8x8x128xf32>
    %147 = arith.addf %140, %146 : vector<8x8x128xf32>
    %148 = vector.extract_strided_slice %118 {offsets = [4, 0, 0], sizes = [8, 8, 128], strides = [1, 1, 1]} : vector<14x8x128xf32> to vector<8x8x128xf32>
    %149 = vector.extract_strided_slice %120 {offsets = [4, 0], sizes = [1, 128], strides = [1, 1]} : vector<7x128xf32> to vector<1x128xf32>
    %150 = vector.shape_cast %149 : vector<1x128xf32> to vector<128xf32>
    %151 = vector.shape_cast %150 : vector<128xf32> to vector<1x1x128xf32>
    %152 = vector.broadcast %151 : vector<1x1x128xf32> to vector<8x8x128xf32>
    %153 = arith.mulf %148, %152 : vector<8x8x128xf32>
    %154 = arith.addf %147, %153 : vector<8x8x128xf32>
    %155 = vector.extract_strided_slice %118 {offsets = [5, 0, 0], sizes = [8, 8, 128], strides = [1, 1, 1]} : vector<14x8x128xf32> to vector<8x8x128xf32>
    %156 = vector.extract_strided_slice %120 {offsets = [5, 0], sizes = [1, 128], strides = [1, 1]} : vector<7x128xf32> to vector<1x128xf32>
    %157 = vector.shape_cast %156 : vector<1x128xf32> to vector<128xf32>
    %158 = vector.shape_cast %157 : vector<128xf32> to vector<1x1x128xf32>
    %159 = vector.broadcast %158 : vector<1x1x128xf32> to vector<8x8x128xf32>
    %160 = arith.mulf %155, %159 : vector<8x8x128xf32>
    %161 = arith.addf %154, %160 : vector<8x8x128xf32>
    %162 = vector.extract_strided_slice %118 {offsets = [6, 0, 0], sizes = [8, 8, 128], strides = [1, 1, 1]} : vector<14x8x128xf32> to vector<8x8x128xf32>
    %163 = vector.extract_strided_slice %120 {offsets = [6, 0], sizes = [1, 128], strides = [1, 1]} : vector<7x128xf32> to vector<1x128xf32>
    %164 = vector.shape_cast %163 : vector<1x128xf32> to vector<128xf32>
    %165 = vector.shape_cast %164 : vector<128xf32> to vector<1x1x128xf32>
    %166 = vector.broadcast %165 : vector<1x1x128xf32> to vector<8x8x128xf32>
    %167 = arith.mulf %162, %166 : vector<8x8x128xf32>
    %168 = arith.addf %161, %167 : vector<8x8x128xf32>
    %c1_23 = arith.constant 1 : index
    %c0_24 = arith.constant 0 : index
    %c0_25 = arith.constant 0 : index
    %169 = vector.load %arg3[%c1_23, %c0_24, %c0_25] : memref<2x6x128xf32, #tpu.memory_space<vmem>>, vector<1x6x128xf32>
    %170 = vector.shape_cast %169 : vector<1x6x128xf32> to vector<6x128xf32>
    %c1_26 = arith.constant 1 : index
    %c0_27 = arith.constant 0 : index
    %c0_28 = arith.constant 0 : index
    %171 = vector.load %arg4[%c1_26, %c0_27, %c0_28] : memref<2x128x128xf32, #tpu.memory_space<vmem>>, vector<1x128x128xf32>
    %172 = vector.shape_cast %171 : vector<1x128x128xf32> to vector<128x128xf32>
    %173 = vector.extract_strided_slice %170 {offsets = [0, 0], sizes = [1, 128], strides = [1, 1]} : vector<6x128xf32> to vector<1x128xf32>
    %174 = vector.shape_cast %173 : vector<1x128xf32> to vector<128xf32>
    %175 = vector.shape_cast %174 : vector<128xf32> to vector<1x1x128xf32>
    %176 = vector.broadcast %175 : vector<1x1x128xf32> to vector<8x8x128xf32>
    %177 = arith.addf %168, %176 : vector<8x8x128xf32>
    %cst_29 = arith.constant 5.000000e-01 : f32
    %178 = vector.broadcast %cst_29 : f32 to vector<8x8x128xf32>
    %179 = arith.mulf %178, %177 : vector<8x8x128xf32>
    %180 = arith.mulf %177, %177 : vector<8x8x128xf32>
    %181 = arith.mulf %180, %177 : vector<8x8x128xf32>
    %cst_30 = arith.constant 4.471500e-02 : f32
    %182 = vector.broadcast %cst_30 : f32 to vector<8x8x128xf32>
    %183 = arith.mulf %182, %181 : vector<8x8x128xf32>
    %184 = arith.addf %177, %183 : vector<8x8x128xf32>
    %cst_31 = arith.constant 0.797884583 : f32
    %185 = vector.broadcast %cst_31 : f32 to vector<8x8x128xf32>
    %186 = arith.mulf %185, %184 : vector<8x8x128xf32>
    %187 = math.tanh %186 : vector<8x8x128xf32>
    %cst_32 = arith.constant 1.000000e+00 : f32
    %188 = vector.broadcast %cst_32 : f32 to vector<8x8x128xf32>
    %189 = arith.addf %188, %187 : vector<8x8x128xf32>
    %190 = arith.mulf %179, %189 : vector<8x8x128xf32>
    %191 = vector.extract_strided_slice %170 {offsets = [1, 0], sizes = [1, 128], strides = [1, 1]} : vector<6x128xf32> to vector<1x128xf32>
    %192 = vector.shape_cast %191 : vector<1x128xf32> to vector<128xf32>
    %193 = vector.shape_cast %192 : vector<128xf32> to vector<1x1x128xf32>
    %194 = vector.broadcast %193 : vector<1x1x128xf32> to vector<8x8x128xf32>
    %195 = arith.mulf %190, %194 : vector<8x8x128xf32>
    %196 = vector.extract_strided_slice %170 {offsets = [2, 0], sizes = [1, 128], strides = [1, 1]} : vector<6x128xf32> to vector<1x128xf32>
    %197 = vector.shape_cast %196 : vector<1x128xf32> to vector<128xf32>
    %198 = vector.shape_cast %197 : vector<128xf32> to vector<1x1x128xf32>
    %199 = vector.broadcast %198 : vector<1x1x128xf32> to vector<8x8x128xf32>
    %200 = arith.addf %195, %199 : vector<8x8x128xf32>
    %201 = arith.addf %200, %117 : vector<8x8x128xf32>
    %202 = vector.shape_cast %201 : vector<8x8x128xf32> to vector<64x128xf32>
    %cst_33 = arith.constant dense<0.000000e+00> : vector<64x128xf32>
    %203 = tpu.matmul %202, %172, %cst_33 {dimension_numbers = #tpu.dot_dimension_numbers<[1], [0], [0], [1], [0, 0, 1, 1], [], []>} : vector<64x128xf32>, vector<128x128xf32>, vector<64x128xf32> -> vector<64x128xf32>
    %204 = vector.shape_cast %203 : vector<64x128xf32> to vector<8x8x128xf32>
    %205 = vector.extract_strided_slice %170 {offsets = [3, 0], sizes = [1, 128], strides = [1, 1]} : vector<6x128xf32> to vector<1x128xf32>
    %206 = vector.shape_cast %205 : vector<1x128xf32> to vector<128xf32>
    %207 = vector.shape_cast %206 : vector<128xf32> to vector<1x1x128xf32>
    %208 = vector.broadcast %207 : vector<1x1x128xf32> to vector<8x8x128xf32>
    %209 = arith.addf %204, %208 : vector<8x8x128xf32>
    %cst_34 = arith.constant 5.000000e-01 : f32
    %210 = vector.broadcast %cst_34 : f32 to vector<8x8x128xf32>
    %211 = arith.mulf %210, %209 : vector<8x8x128xf32>
    %212 = arith.mulf %209, %209 : vector<8x8x128xf32>
    %213 = arith.mulf %212, %209 : vector<8x8x128xf32>
    %cst_35 = arith.constant 4.471500e-02 : f32
    %214 = vector.broadcast %cst_35 : f32 to vector<8x8x128xf32>
    %215 = arith.mulf %214, %213 : vector<8x8x128xf32>
    %216 = arith.addf %209, %215 : vector<8x8x128xf32>
    %cst_36 = arith.constant 0.797884583 : f32
    %217 = vector.broadcast %cst_36 : f32 to vector<8x8x128xf32>
    %218 = arith.mulf %217, %216 : vector<8x8x128xf32>
    %219 = math.tanh %218 : vector<8x8x128xf32>
    %cst_37 = arith.constant 1.000000e+00 : f32
    %220 = vector.broadcast %cst_37 : f32 to vector<8x8x128xf32>
    %221 = arith.addf %220, %219 : vector<8x8x128xf32>
    %222 = arith.mulf %211, %221 : vector<8x8x128xf32>
    %223 = vector.extract_strided_slice %170 {offsets = [4, 0], sizes = [1, 128], strides = [1, 1]} : vector<6x128xf32> to vector<1x128xf32>
    %224 = vector.shape_cast %223 : vector<1x128xf32> to vector<128xf32>
    %225 = vector.shape_cast %224 : vector<128xf32> to vector<1x1x128xf32>
    %226 = vector.broadcast %225 : vector<1x1x128xf32> to vector<8x8x128xf32>
    %227 = arith.mulf %222, %226 : vector<8x8x128xf32>
    %228 = vector.extract_strided_slice %170 {offsets = [5, 0], sizes = [1, 128], strides = [1, 1]} : vector<6x128xf32> to vector<1x128xf32>
    %229 = vector.shape_cast %228 : vector<1x128xf32> to vector<128xf32>
    %230 = vector.shape_cast %229 : vector<128xf32> to vector<1x1x128xf32>
    %231 = vector.broadcast %230 : vector<1x1x128xf32> to vector<8x8x128xf32>
    %232 = arith.addf %227, %231 : vector<8x8x128xf32>
    %cst_38 = arith.constant 0.000000e+00 : f32
    %233 = vector.broadcast %cst_38 : f32 to vector<8x12x128xf32>
    %c0_39 = arith.constant 0 : index
    %c0_40 = arith.constant 0 : index
    %c0_41 = arith.constant 0 : index
    %234 = vector.load %arg9[%c0_39, %c0_40, %c0_41] : memref<8x12x128xf32, #tpu.memory_space<vmem>>, vector<8x12x128xf32>
    tpu.vector_store %arg9[%c0_39, %c0_40, %c0_41], %233 {strides = array<i32>} : memref<8x12x128xf32, #tpu.memory_space<vmem>>, vector<8x12x128xf32>,
    %c0_42 = arith.constant 0 : index
    %c2 = arith.constant 2 : index
    %c0_43 = arith.constant 0 : index
    %235 = vector.load %arg9[%c0_42, %c2, %c0_43] : memref<8x12x128xf32, #tpu.memory_space<vmem>>, vector<8x8x128xf32>
    tpu.vector_store %arg9[%c0_42, %c2, %c0_43], %232 {strides = array<i32>} : memref<8x12x128xf32, #tpu.memory_space<vmem>>, vector<8x8x128xf32>,
    %cst_44 = arith.constant 0.000000e+00 : f32
    %236 = vector.broadcast %cst_44 : f32 to vector<8x8x128xf32>
    %c0_45 = arith.constant 0 : index
    %c0_46 = arith.constant 0 : index
    %c0_47 = arith.constant 0 : index
    %237 = vector.load %arg9[%c0_45, %c0_46, %c0_47] : memref<8x12x128xf32, #tpu.memory_space<vmem>>, vector<8x8x128xf32>
    %238 = vector.shape_cast %237 : vector<8x8x128xf32> to vector<64x128xf32>
    %c0_48 = arith.constant 0 : index
    %c0_49 = arith.constant 0 : index
    %c0_50 = arith.constant 0 : index
    %c0_51 = arith.constant 0 : index
    %239 = vector.load %arg5[%c0_48, %c0_49, %c0_50, %c0_51] : memref<2x3x128x128xf32, #tpu.memory_space<vmem>>, vector<1x1x128x128xf32>
    %240 = vector.shape_cast %239 : vector<1x1x128x128xf32> to vector<128x128xf32>
    %cst_52 = arith.constant dense<0.000000e+00> : vector<64x128xf32>
    %241 = tpu.matmul %238, %240, %cst_52 {dimension_numbers = #tpu.dot_dimension_numbers<[1], [0], [0], [1], [0, 0, 1, 1], [], []>} : vector<64x128xf32>, vector<128x128xf32>, vector<64x128xf32> -> vector<64x128xf32>
    %242 = vector.shape_cast %241 : vector<64x128xf32> to vector<8x8x128xf32>
    %243 = arith.addf %236, %242 : vector<8x8x128xf32>
    %244 = vector.shape_cast %232 : vector<8x8x128xf32> to vector<64x128xf32>
    %c0_53 = arith.constant 0 : index
    %c1_54 = arith.constant 1 : index
    %c0_55 = arith.constant 0 : index
    %c0_56 = arith.constant 0 : index
    %245 = vector.load %arg5[%c0_53, %c1_54, %c0_55, %c0_56] : memref<2x3x128x128xf32, #tpu.memory_space<vmem>>, vector<1x1x128x128xf32>
    %246 = vector.shape_cast %245 : vector<1x1x128x128xf32> to vector<128x128xf32>
    %cst_57 = arith.constant dense<0.000000e+00> : vector<64x128xf32>
    %247 = tpu.matmul %244, %246, %cst_57 {dimension_numbers = #tpu.dot_dimension_numbers<[1], [0], [0], [1], [0, 0, 1, 1], [], []>} : vector<64x128xf32>, vector<128x128xf32>, vector<64x128xf32> -> vector<64x128xf32>
    %248 = vector.shape_cast %247 : vector<64x128xf32> to vector<8x8x128xf32>
    %249 = arith.addf %243, %248 : vector<8x8x128xf32>
    %c0_58 = arith.constant 0 : index
    %c4 = arith.constant 4 : index
    %c0_59 = arith.constant 0 : index
    %250 = vector.load %arg9[%c0_58, %c4, %c0_59] : memref<8x12x128xf32, #tpu.memory_space<vmem>>, vector<8x8x128xf32>
    %251 = vector.shape_cast %250 : vector<8x8x128xf32> to vector<64x128xf32>
    %c0_60 = arith.constant 0 : index
    %c2_61 = arith.constant 2 : index
    %c0_62 = arith.constant 0 : index
    %c0_63 = arith.constant 0 : index
    %252 = vector.load %arg5[%c0_60, %c2_61, %c0_62, %c0_63] : memref<2x3x128x128xf32, #tpu.memory_space<vmem>>, vector<1x1x128x128xf32>
    %253 = vector.shape_cast %252 : vector<1x1x128x128xf32> to vector<128x128xf32>
    %cst_64 = arith.constant dense<0.000000e+00> : vector<64x128xf32>
    %254 = tpu.matmul %251, %253, %cst_64 {dimension_numbers = #tpu.dot_dimension_numbers<[1], [0], [0], [1], [0, 0, 1, 1], [], []>} : vector<64x128xf32>, vector<128x128xf32>, vector<64x128xf32> -> vector<64x128xf32>
    %255 = vector.shape_cast %254 : vector<64x128xf32> to vector<8x8x128xf32>
    %256 = arith.addf %249, %255 : vector<8x8x128xf32>
    %c0_65 = arith.constant 0 : index
    %c0_66 = arith.constant 0 : index
    %c0_67 = arith.constant 0 : index
    %257 = vector.load %arg6[%c0_65, %c0_66, %c0_67] : memref<2x6x128xf32, #tpu.memory_space<vmem>>, vector<1x6x128xf32>
    %258 = vector.shape_cast %257 : vector<1x6x128xf32> to vector<6x128xf32>
    %c0_68 = arith.constant 0 : index
    %c0_69 = arith.constant 0 : index
    %c0_70 = arith.constant 0 : index
    %259 = vector.load %arg7[%c0_68, %c0_69, %c0_70] : memref<2x128x128xf32, #tpu.memory_space<vmem>>, vector<1x128x128xf32>
    %260 = vector.shape_cast %259 : vector<1x128x128xf32> to vector<128x128xf32>
    %261 = vector.extract_strided_slice %258 {offsets = [0, 0], sizes = [1, 128], strides = [1, 1]} : vector<6x128xf32> to vector<1x128xf32>
    %262 = vector.shape_cast %261 : vector<1x128xf32> to vector<128xf32>
    %263 = vector.shape_cast %262 : vector<128xf32> to vector<1x1x128xf32>
    %264 = vector.broadcast %263 : vector<1x1x128xf32> to vector<8x8x128xf32>
    %265 = arith.addf %256, %264 : vector<8x8x128xf32>
    %cst_71 = arith.constant 5.000000e-01 : f32
    %266 = vector.broadcast %cst_71 : f32 to vector<8x8x128xf32>
    %267 = arith.mulf %266, %265 : vector<8x8x128xf32>
    %268 = arith.mulf %265, %265 : vector<8x8x128xf32>
    %269 = arith.mulf %268, %265 : vector<8x8x128xf32>
    %cst_72 = arith.constant 4.471500e-02 : f32
    %270 = vector.broadcast %cst_72 : f32 to vector<8x8x128xf32>
    %271 = arith.mulf %270, %269 : vector<8x8x128xf32>
    %272 = arith.addf %265, %271 : vector<8x8x128xf32>
    %cst_73 = arith.constant 0.797884583 : f32
    %273 = vector.broadcast %cst_73 : f32 to vector<8x8x128xf32>
    %274 = arith.mulf %273, %272 : vector<8x8x128xf32>
    %275 = math.tanh %274 : vector<8x8x128xf32>
    %cst_74 = arith.constant 1.000000e+00 : f32
    %276 = vector.broadcast %cst_74 : f32 to vector<8x8x128xf32>
    %277 = arith.addf %276, %275 : vector<8x8x128xf32>
    %278 = arith.mulf %267, %277 : vector<8x8x128xf32>
    %279 = vector.extract_strided_slice %258 {offsets = [1, 0], sizes = [1, 128], strides = [1, 1]} : vector<6x128xf32> to vector<1x128xf32>
    %280 = vector.shape_cast %279 : vector<1x128xf32> to vector<128xf32>
    %281 = vector.shape_cast %280 : vector<128xf32> to vector<1x1x128xf32>
    %282 = vector.broadcast %281 : vector<1x1x128xf32> to vector<8x8x128xf32>
    %283 = arith.mulf %278, %282 : vector<8x8x128xf32>
    %284 = vector.extract_strided_slice %258 {offsets = [2, 0], sizes = [1, 128], strides = [1, 1]} : vector<6x128xf32> to vector<1x128xf32>
    %285 = vector.shape_cast %284 : vector<1x128xf32> to vector<128xf32>
    %286 = vector.shape_cast %285 : vector<128xf32> to vector<1x1x128xf32>
    %287 = vector.broadcast %286 : vector<1x1x128xf32> to vector<8x8x128xf32>
    %288 = arith.addf %283, %287 : vector<8x8x128xf32>
    %289 = arith.addf %288, %232 : vector<8x8x128xf32>
    %290 = vector.shape_cast %289 : vector<8x8x128xf32> to vector<64x128xf32>
    %cst_75 = arith.constant dense<0.000000e+00> : vector<64x128xf32>
    %291 = tpu.matmul %290, %260, %cst_75 {dimension_numbers = #tpu.dot_dimension_numbers<[1], [0], [0], [1], [0, 0, 1, 1], [], []>} : vector<64x128xf32>, vector<128x128xf32>, vector<64x128xf32> -> vector<64x128xf32>
    %292 = vector.shape_cast %291 : vector<64x128xf32> to vector<8x8x128xf32>
    %293 = vector.extract_strided_slice %258 {offsets = [3, 0], sizes = [1, 128], strides = [1, 1]} : vector<6x128xf32> to vector<1x128xf32>
    %294 = vector.shape_cast %293 : vector<1x128xf32> to vector<128xf32>
    %295 = vector.shape_cast %294 : vector<128xf32> to vector<1x1x128xf32>
    %296 = vector.broadcast %295 : vector<1x1x128xf32> to vector<8x8x128xf32>
    %297 = arith.addf %292, %296 : vector<8x8x128xf32>
    %cst_76 = arith.constant 5.000000e-01 : f32
    %298 = vector.broadcast %cst_76 : f32 to vector<8x8x128xf32>
    %299 = arith.mulf %298, %297 : vector<8x8x128xf32>
    %300 = arith.mulf %297, %297 : vector<8x8x128xf32>
    %301 = arith.mulf %300, %297 : vector<8x8x128xf32>
    %cst_77 = arith.constant 4.471500e-02 : f32
    %302 = vector.broadcast %cst_77 : f32 to vector<8x8x128xf32>
    %303 = arith.mulf %302, %301 : vector<8x8x128xf32>
    %304 = arith.addf %297, %303 : vector<8x8x128xf32>
    %cst_78 = arith.constant 0.797884583 : f32
    %305 = vector.broadcast %cst_78 : f32 to vector<8x8x128xf32>
    %306 = arith.mulf %305, %304 : vector<8x8x128xf32>
    %307 = math.tanh %306 : vector<8x8x128xf32>
    %cst_79 = arith.constant 1.000000e+00 : f32
    %308 = vector.broadcast %cst_79 : f32 to vector<8x8x128xf32>
    %309 = arith.addf %308, %307 : vector<8x8x128xf32>
    %310 = arith.mulf %299, %309 : vector<8x8x128xf32>
    %311 = vector.extract_strided_slice %258 {offsets = [4, 0], sizes = [1, 128], strides = [1, 1]} : vector<6x128xf32> to vector<1x128xf32>
    %312 = vector.shape_cast %311 : vector<1x128xf32> to vector<128xf32>
    %313 = vector.shape_cast %312 : vector<128xf32> to vector<1x1x128xf32>
    %314 = vector.broadcast %313 : vector<1x1x128xf32> to vector<8x8x128xf32>
    %315 = arith.mulf %310, %314 : vector<8x8x128xf32>
    %316 = vector.extract_strided_slice %258 {offsets = [5, 0], sizes = [1, 128], strides = [1, 1]} : vector<6x128xf32> to vector<1x128xf32>
    %317 = vector.shape_cast %316 : vector<1x128xf32> to vector<128xf32>
    %318 = vector.shape_cast %317 : vector<128xf32> to vector<1x1x128xf32>
    %319 = vector.broadcast %318 : vector<1x1x128xf32> to vector<8x8x128xf32>
    %320 = arith.addf %315, %319 : vector<8x8x128xf32>
    %c0_80 = arith.constant 0 : index
    %c2_81 = arith.constant 2 : index
    %c0_82 = arith.constant 0 : index
    %321 = vector.load %arg9[%c0_80, %c2_81, %c0_82] : memref<8x12x128xf32, #tpu.memory_space<vmem>>, vector<8x8x128xf32>
    tpu.vector_store %arg9[%c0_80, %c2_81, %c0_82], %320 {strides = array<i32>} : memref<8x12x128xf32, #tpu.memory_space<vmem>>, vector<8x8x128xf32>,
    %cst_83 = arith.constant 0.000000e+00 : f32
    %322 = vector.broadcast %cst_83 : f32 to vector<8x8x128xf32>
    %c0_84 = arith.constant 0 : index
    %c0_85 = arith.constant 0 : index
    %c0_86 = arith.constant 0 : index
    %323 = vector.load %arg9[%c0_84, %c0_85, %c0_86] : memref<8x12x128xf32, #tpu.memory_space<vmem>>, vector<8x8x128xf32>
    %324 = vector.shape_cast %323 : vector<8x8x128xf32> to vector<64x128xf32>
    %c1_87 = arith.constant 1 : index
    %c0_88 = arith.constant 0 : index
    %c0_89 = arith.constant 0 : index
    %c0_90 = arith.constant 0 : index
    %325 = vector.load %arg5[%c1_87, %c0_88, %c0_89, %c0_90] : memref<2x3x128x128xf32, #tpu.memory_space<vmem>>, vector<1x1x128x128xf32>
    %326 = vector.shape_cast %325 : vector<1x1x128x128xf32> to vector<128x128xf32>
    %cst_91 = arith.constant dense<0.000000e+00> : vector<64x128xf32>
    %327 = tpu.matmul %324, %326, %cst_91 {dimension_numbers = #tpu.dot_dimension_numbers<[1], [0], [0], [1], [0, 0, 1, 1], [], []>} : vector<64x128xf32>, vector<128x128xf32>, vector<64x128xf32> -> vector<64x128xf32>
    %328 = vector.shape_cast %327 : vector<64x128xf32> to vector<8x8x128xf32>
    %329 = arith.addf %322, %328 : vector<8x8x128xf32>
    %330 = vector.shape_cast %320 : vector<8x8x128xf32> to vector<64x128xf32>
    %c1_92 = arith.constant 1 : index
    %c1_93 = arith.constant 1 : index
    %c0_94 = arith.constant 0 : index
    %c0_95 = arith.constant 0 : index
    %331 = vector.load %arg5[%c1_92, %c1_93, %c0_94, %c0_95] : memref<2x3x128x128xf32, #tpu.memory_space<vmem>>, vector<1x1x128x128xf32>
    %332 = vector.shape_cast %331 : vector<1x1x128x128xf32> to vector<128x128xf32>
    %cst_96 = arith.constant dense<0.000000e+00> : vector<64x128xf32>
    %333 = tpu.matmul %330, %332, %cst_96 {dimension_numbers = #tpu.dot_dimension_numbers<[1], [0], [0], [1], [0, 0, 1, 1], [], []>} : vector<64x128xf32>, vector<128x128xf32>, vector<64x128xf32> -> vector<64x128xf32>
    %334 = vector.shape_cast %333 : vector<64x128xf32> to vector<8x8x128xf32>
    %335 = arith.addf %329, %334 : vector<8x8x128xf32>
    %c0_97 = arith.constant 0 : index
    %c4_98 = arith.constant 4 : index
    %c0_99 = arith.constant 0 : index
    %336 = vector.load %arg9[%c0_97, %c4_98, %c0_99] : memref<8x12x128xf32, #tpu.memory_space<vmem>>, vector<8x8x128xf32>
    %337 = vector.shape_cast %336 : vector<8x8x128xf32> to vector<64x128xf32>
    %c1_100 = arith.constant 1 : index
    %c2_101 = arith.constant 2 : index
    %c0_102 = arith.constant 0 : index
    %c0_103 = arith.constant 0 : index
    %338 = vector.load %arg5[%c1_100, %c2_101, %c0_102, %c0_103] : memref<2x3x128x128xf32, #tpu.memory_space<vmem>>, vector<1x1x128x128xf32>
    %339 = vector.shape_cast %338 : vector<1x1x128x128xf32> to vector<128x128xf32>
    %cst_104 = arith.constant dense<0.000000e+00> : vector<64x128xf32>
    %340 = tpu.matmul %337, %339, %cst_104 {dimension_numbers = #tpu.dot_dimension_numbers<[1], [0], [0], [1], [0, 0, 1, 1], [], []>} : vector<64x128xf32>, vector<128x128xf32>, vector<64x128xf32> -> vector<64x128xf32>
    %341 = vector.shape_cast %340 : vector<64x128xf32> to vector<8x8x128xf32>
    %342 = arith.addf %335, %341 : vector<8x8x128xf32>
    %c1_105 = arith.constant 1 : index
    %c0_106 = arith.constant 0 : index
    %c0_107 = arith.constant 0 : index
    %343 = vector.load %arg6[%c1_105, %c0_106, %c0_107] : memref<2x6x128xf32, #tpu.memory_space<vmem>>, vector<1x6x128xf32>
    %344 = vector.shape_cast %343 : vector<1x6x128xf32> to vector<6x128xf32>
    %c1_108 = arith.constant 1 : index
    %c0_109 = arith.constant 0 : index
    %c0_110 = arith.constant 0 : index
    %345 = vector.load %arg7[%c1_108, %c0_109, %c0_110] : memref<2x128x128xf32, #tpu.memory_space<vmem>>, vector<1x128x128xf32>
    %346 = vector.shape_cast %345 : vector<1x128x128xf32> to vector<128x128xf32>
    %347 = vector.extract_strided_slice %344 {offsets = [0, 0], sizes = [1, 128], strides = [1, 1]} : vector<6x128xf32> to vector<1x128xf32>
    %348 = vector.shape_cast %347 : vector<1x128xf32> to vector<128xf32>
    %349 = vector.shape_cast %348 : vector<128xf32> to vector<1x1x128xf32>
    %350 = vector.broadcast %349 : vector<1x1x128xf32> to vector<8x8x128xf32>
    %351 = arith.addf %342, %350 : vector<8x8x128xf32>
    %cst_111 = arith.constant 5.000000e-01 : f32
    %352 = vector.broadcast %cst_111 : f32 to vector<8x8x128xf32>
    %353 = arith.mulf %352, %351 : vector<8x8x128xf32>
    %354 = arith.mulf %351, %351 : vector<8x8x128xf32>
    %355 = arith.mulf %354, %351 : vector<8x8x128xf32>
    %cst_112 = arith.constant 4.471500e-02 : f32
    %356 = vector.broadcast %cst_112 : f32 to vector<8x8x128xf32>
    %357 = arith.mulf %356, %355 : vector<8x8x128xf32>
    %358 = arith.addf %351, %357 : vector<8x8x128xf32>
    %cst_113 = arith.constant 0.797884583 : f32
    %359 = vector.broadcast %cst_113 : f32 to vector<8x8x128xf32>
    %360 = arith.mulf %359, %358 : vector<8x8x128xf32>
    %361 = math.tanh %360 : vector<8x8x128xf32>
    %cst_114 = arith.constant 1.000000e+00 : f32
    %362 = vector.broadcast %cst_114 : f32 to vector<8x8x128xf32>
    %363 = arith.addf %362, %361 : vector<8x8x128xf32>
    %364 = arith.mulf %353, %363 : vector<8x8x128xf32>
    %365 = vector.extract_strided_slice %344 {offsets = [1, 0], sizes = [1, 128], strides = [1, 1]} : vector<6x128xf32> to vector<1x128xf32>
    %366 = vector.shape_cast %365 : vector<1x128xf32> to vector<128xf32>
    %367 = vector.shape_cast %366 : vector<128xf32> to vector<1x1x128xf32>
    %368 = vector.broadcast %367 : vector<1x1x128xf32> to vector<8x8x128xf32>
    %369 = arith.mulf %364, %368 : vector<8x8x128xf32>
    %370 = vector.extract_strided_slice %344 {offsets = [2, 0], sizes = [1, 128], strides = [1, 1]} : vector<6x128xf32> to vector<1x128xf32>
    %371 = vector.shape_cast %370 : vector<1x128xf32> to vector<128xf32>
    %372 = vector.shape_cast %371 : vector<128xf32> to vector<1x1x128xf32>
    %373 = vector.broadcast %372 : vector<1x1x128xf32> to vector<8x8x128xf32>
    %374 = arith.addf %369, %373 : vector<8x8x128xf32>
    %375 = arith.addf %374, %320 : vector<8x8x128xf32>
    %376 = vector.shape_cast %375 : vector<8x8x128xf32> to vector<64x128xf32>
    %cst_115 = arith.constant dense<0.000000e+00> : vector<64x128xf32>
    %377 = tpu.matmul %376, %346, %cst_115 {dimension_numbers = #tpu.dot_dimension_numbers<[1], [0], [0], [1], [0, 0, 1, 1], [], []>} : vector<64x128xf32>, vector<128x128xf32>, vector<64x128xf32> -> vector<64x128xf32>
    %378 = vector.shape_cast %377 : vector<64x128xf32> to vector<8x8x128xf32>
    %379 = vector.extract_strided_slice %344 {offsets = [3, 0], sizes = [1, 128], strides = [1, 1]} : vector<6x128xf32> to vector<1x128xf32>
    %380 = vector.shape_cast %379 : vector<1x128xf32> to vector<128xf32>
    %381 = vector.shape_cast %380 : vector<128xf32> to vector<1x1x128xf32>
    %382 = vector.broadcast %381 : vector<1x1x128xf32> to vector<8x8x128xf32>
    %383 = arith.addf %378, %382 : vector<8x8x128xf32>
    %cst_116 = arith.constant 5.000000e-01 : f32
    %384 = vector.broadcast %cst_116 : f32 to vector<8x8x128xf32>
    %385 = arith.mulf %384, %383 : vector<8x8x128xf32>
    %386 = arith.mulf %383, %383 : vector<8x8x128xf32>
    %387 = arith.mulf %386, %383 : vector<8x8x128xf32>
    %cst_117 = arith.constant 4.471500e-02 : f32
    %388 = vector.broadcast %cst_117 : f32 to vector<8x8x128xf32>
    %389 = arith.mulf %388, %387 : vector<8x8x128xf32>
    %390 = arith.addf %383, %389 : vector<8x8x128xf32>
    %cst_118 = arith.constant 0.797884583 : f32
    %391 = vector.broadcast %cst_118 : f32 to vector<8x8x128xf32>
    %392 = arith.mulf %391, %390 : vector<8x8x128xf32>
    %393 = math.tanh %392 : vector<8x8x128xf32>
    %cst_119 = arith.constant 1.000000e+00 : f32
    %394 = vector.broadcast %cst_119 : f32 to vector<8x8x128xf32>
    %395 = arith.addf %394, %393 : vector<8x8x128xf32>
    %396 = arith.mulf %385, %395 : vector<8x8x128xf32>
    %397 = vector.extract_strided_slice %344 {offsets = [4, 0], sizes = [1, 128], strides = [1, 1]} : vector<6x128xf32> to vector<1x128xf32>
    %398 = vector.shape_cast %397 : vector<1x128xf32> to vector<128xf32>
    %399 = vector.shape_cast %398 : vector<128xf32> to vector<1x1x128xf32>
    %400 = vector.broadcast %399 : vector<1x1x128xf32> to vector<8x8x128xf32>
    %401 = arith.mulf %396, %400 : vector<8x8x128xf32>
    %402 = vector.extract_strided_slice %344 {offsets = [5, 0], sizes = [1, 128], strides = [1, 1]} : vector<6x128xf32> to vector<1x128xf32>
    %403 = vector.shape_cast %402 : vector<1x128xf32> to vector<128xf32>
    %404 = vector.shape_cast %403 : vector<128xf32> to vector<1x1x128xf32>
    %405 = vector.broadcast %404 : vector<1x1x128xf32> to vector<8x8x128xf32>
    %406 = arith.addf %401, %405 : vector<8x8x128xf32>
    %c0_120 = arith.constant 0 : index
    %c0_121 = arith.constant 0 : index
    %c0_122 = arith.constant 0 : index
    %c0_123 = arith.constant 0 : index
    %407 = vector.load %arg8[%c0_120, %c0_121, %c0_122, %c0_123] : memref<1x8x8x128xf32, #tpu.memory_space<vmem>>, vector<1x8x8x128xf32>
    %408 = vector.shape_cast %407 : vector<1x8x8x128xf32> to vector<8x8x128xf32>
    %409 = vector.shape_cast %406 : vector<8x8x128xf32> to vector<1x8x8x128xf32>
    tpu.vector_store %arg8[%c0_120, %c0_121, %c0_122, %c0_123], %409 {strides = array<i32>} : memref<1x8x8x128xf32, #tpu.memory_space<vmem>>, vector<1x8x8x128xf32>,
    return
  }
  func.func @transform_0(%arg0: i32) -> (i32, i32, i32, i32) {
    %c0_i32 = arith.constant 0 : i32
    %c0_i32_0 = arith.constant 0 : i32
    %c0_i32_1 = arith.constant 0 : i32
    %c0_i32_2 = arith.constant 0 : i32
    return %arg0, %c0_i32, %c0_i32_0, %c0_i32_1 : i32, i32, i32, i32
  }
  func.func @transform_1(%arg0: i32) -> (i32, i32, i32) {
    %c0_i32 = arith.constant 0 : i32
    %c0_i32_0 = arith.constant 0 : i32
    %c0_i32_1 = arith.constant 0 : i32
    %c0_i32_2 = arith.constant 0 : i32
    return %c0_i32, %c0_i32_0, %c0_i32_1 : i32, i32, i32
  }
  func.func @transform_2(%arg0: i32) -> (i32, i32, i32) {
    %c0_i32 = arith.constant 0 : i32
    %c0_i32_0 = arith.constant 0 : i32
    %c0_i32_1 = arith.constant 0 : i32
    %c0_i32_2 = arith.constant 0 : i32
    return %c0_i32, %c0_i32_0, %c0_i32_1 : i32, i32, i32
  }
  func.func @transform_3(%arg0: i32) -> (i32, i32, i32) {
    %c0_i32 = arith.constant 0 : i32
    %c0_i32_0 = arith.constant 0 : i32
    %c0_i32_1 = arith.constant 0 : i32
    %c0_i32_2 = arith.constant 0 : i32
    return %c0_i32, %c0_i32_0, %c0_i32_1 : i32, i32, i32
  }
  func.func @transform_4(%arg0: i32) -> (i32, i32, i32, i32) {
    %c0_i32 = arith.constant 0 : i32
    %c0_i32_0 = arith.constant 0 : i32
    %c0_i32_1 = arith.constant 0 : i32
    %c0_i32_2 = arith.constant 0 : i32
    %c0_i32_3 = arith.constant 0 : i32
    return %c0_i32, %c0_i32_0, %c0_i32_1, %c0_i32_2 : i32, i32, i32, i32
  }
  func.func @transform_5(%arg0: i32) -> (i32, i32, i32) {
    %c0_i32 = arith.constant 0 : i32
    %c0_i32_0 = arith.constant 0 : i32
    %c0_i32_1 = arith.constant 0 : i32
    %c0_i32_2 = arith.constant 0 : i32
    return %c0_i32, %c0_i32_0, %c0_i32_1 : i32, i32, i32
  }
  func.func @transform_6(%arg0: i32) -> (i32, i32, i32) {
    %c0_i32 = arith.constant 0 : i32
    %c0_i32_0 = arith.constant 0 : i32
    %c0_i32_1 = arith.constant 0 : i32
    %c0_i32_2 = arith.constant 0 : i32
    return %c0_i32, %c0_i32_0, %c0_i32_1 : i32, i32, i32
  }
  func.func @transform_7(%arg0: i32) -> (i32, i32, i32, i32) {
    %c0_i32 = arith.constant 0 : i32
    %c0_i32_0 = arith.constant 0 : i32
    %c0_i32_1 = arith.constant 0 : i32
    %c0_i32_2 = arith.constant 0 : i32
    return %arg0, %c0_i32, %c0_i32_0, %c0_i32_1 : i32, i32, i32, i32
  }
}

</mosaic_0001>

<llo_original>
// kernel: tile.206
$region0: #{tile.206}
  #allocation0 [shape = 's32[1]{0}', space=sflag, size = 0x4, scoped, tag = 'scoped memory for tile.206']
  %s0 = inlined_call_operand.vmem [shape: f32[16], index: 0, kind: input, shape index: {}]
  %s1 = inlined_call_operand.vmem [shape: f32[8,16], index: 1, kind: output, shape index: {}]
  // Predicated region
  $region2: #{tile.206} parent=0 // pred_check
    _
  $region3: #{tile.206} parent=0 // pred_check_branch
    %3 = sbr.rel (0) target = $region5
  $region4: #{tile.206} parent=0 // pred_region
    _
  $region5: #{tile.206} parent=0 // pred_fallthru
    _
  %v4 = vld [vmem:[%s0] ss:$0 sm:$0xff]
  %5 = vst [vmem:[%s1] sm:$0xff] %v4

// kernel: tile.225
$region0: #{tile.225}
  %s0 = inlined_call_operand.vmem [shape: f32[8,16], index: 0, kind: input, shape index: {}]
  %s1 = inlined_call_operand.vmem [shape: f32[1,128], index: 1, kind: output, shape index: {}]
  $region1: #{tile.225} parent=0
    #allocation0 [shape = 'u8[4096]{0}', space=vmem, size = 0x1000, scoped, tag = 'scoped mem for output reshape']
    %v2 = vld [vmem:[%s0] sm:$0x1]
    %vm3 = vcmask 130048
    %4 = vst.msk [vmem:[#allocation0] sm:$0x1] %vm3, %v2
    %s5 = scalar_lea.vmem %s0, 7
    %v6 = vld [vmem:[%s5] sm:$0x1]
    %7 = vrot.lane.b32.xlu0 %v6, 112
    %v8 = vpop.permute.xlu0 %7
    %vm9 = vcmask 1048448
    %10 = vst.msk [vmem:[#allocation0] sm:$0x1] %vm9, %v8
    %s11 = scalar_lea.vmem %s0, 6
    %v12 = vld [vmem:[%s11] sm:$0x1]
    %13 = vrot.lane.b32.xlu0 %v12, 96
    %v14 = vpop.permute.xlu0 %13
    %vm15 = vcmask 917248
    %16 = vst.msk [vmem:[#allocation0] sm:$0x1] %vm15, %v14
    %s17 = scalar_lea.vmem %s0, 5
    %v18 = vld [vmem:[%s17] sm:$0x1]
    %19 = vrot.lane.b32.xlu0 %v18, 80
    %v20 = vpop.permute.xlu0 %19
    %vm21 = vcmask 786048
    %22 = vst.msk [vmem:[#allocation0] sm:$0x1] %vm21, %v20
    %s23 = scalar_lea.vmem %s0, 4
    %v24 = vld [vmem:[%s23] sm:$0x1]
    %25 = vrot.lane.b32.xlu0 %v24, 64
    %v26 = vpop.permute.xlu0 %25
    %vm27 = vcmask 654848
    %28 = vst.msk [vmem:[#allocation0] sm:$0x1] %vm27, %v26
    %s29 = scalar_lea.vmem %s0, 3
    %v30 = vld [vmem:[%s29] sm:$0x1]
    %31 = vrot.lane.b32.xlu0 %v30, 48
    %v32 = vpop.permute.xlu0 %31
    %vm33 = vcmask 523648
    %34 = vst.msk [vmem:[#allocation0] sm:$0x1] %vm33, %v32
    %s35 = scalar_lea.vmem %s0, 2
    %v36 = vld [vmem:[%s35] sm:$0x1]
    %37 = vrot.lane.b32.xlu0 %v36, 32
    %v38 = vpop.permute.xlu0 %37
    %vm39 = vcmask 392448
    %40 = vst.msk [vmem:[#allocation0] sm:$0x1] %vm39, %v38
    %s41 = scalar_lea.vmem %s0, 1
    %v42 = vld [vmem:[%s41] sm:$0x1]
    %43 = vrot.lane.b32.xlu0 %v42, 16
    %v44 = vpop.permute.xlu0 %43
    %vm45 = vcmask 261248
    %46 = vst.msk [vmem:[#allocation0] sm:$0x1] %vm45, %v44
    %s48 = sshllo.u32 0, 1
    %v50 = vld [vmem:[#allocation0] sm:%s48]
    %s51 = sshllo.u32 0, 1
    %52 = vst [vmem:[%s1] sm:%s51] %v50

// kernel: mixer_block_forward.1
$region0: #{mixer_block_forward.1}
  #allocation0 [shape = 'u32[]', space=smem, size = 0x4, offset = 0x4, fixed_abs, tag = 'smem constant byte address 0x4 - core index']
  #allocation1 [shape = 'u32[144,128]{1,0:T(1,128)}', space=vmem, size = 0x12000, scoped, tag = 'internal scratch']
  #allocation2 [shape = 'f32[8,12,128]{2,1,0:T(8,128)}', space=vmem, size = 0x10000, scoped, tag = 'scratch operand']
  %s0 = inlined_call_operand.vmem [shape: f32[2,8,8,128], index: 0, kind: input, shape index: {}]
  %s1 = inlined_call_operand.vmem [shape: f32[2,7,128], index: 1, kind: input, shape index: {}]
  %s2 = inlined_call_operand.vmem [shape: f32[2,6,128], index: 2, kind: input, shape index: {}]
  %s3 = inlined_call_operand.vmem [shape: f32[2,128,128], index: 3, kind: input, shape index: {}]
  %s4 = inlined_call_operand.vmem [shape: f32[2,3,128,128], index: 4, kind: input, shape index: {}]
  %s5 = inlined_call_operand.vmem [shape: f32[2,6,128], index: 5, kind: input, shape index: {}]
  %s6 = inlined_call_operand.vmem [shape: f32[2,128,128], index: 6, kind: input, shape index: {}]
  %s7 = inlined_call_operand.vmem [shape: f32[2,8,8,128], index: 7, kind: output, shape index: {}]
  %s8 = sld [smem:[#allocation0]]
  $region61: #{mixer_block_forward.1} parent=0
    _
  %s10 = ssub.s32 1, %s8
  %s11 = scalar_select 0, %s10, %s8
  loop: start=0, step=1, limit=4
  $region2: #{mixer_block_forward.1} parent=0 // loop_pre_header
    _
  $region3: #{mixer_block_forward.1} parent=0 // loop_header
    %s13 = sphi 0, %s17
    %p14 = scmp.ge.s32.totalorder %s13, 4
    %s23 = sphi 0, %s25
    %s26 = sphi 0, %s23
    %s27 = sphi 0, %s26
    %s43 = sphi 0, %s27
    %s47 = sphi 0, %s47
    %s49 = sphi 0, %s47
    %s50 = sphi 0, %s49
    %s64 = sphi 0, %s50
    %s68 = sphi 0, %s68
    %s70 = sphi 0, %s68
    %s71 = sphi 0, %s70
    %s85 = sphi 0, %s71
    %s89 = sphi 0, %s89
    %s91 = sphi 0, %s89
    %s92 = sphi 0, %s91
    %s106 = sphi 0, %s92
    %s110 = sphi 0, %s110
    %s112 = sphi 0, %s110
    %s113 = sphi 0, %s112
    %s127 = sphi 0, %s113
    %s131 = sphi 0, %s131
    %s133 = sphi 0, %s131
    %s134 = sphi 0, %s133
    %s148 = sphi 0, %s134
    %s152 = sphi 0, %s152
    %s154 = sphi 0, %s152
    %s155 = sphi 0, %s154
    %s169 = sphi 0, %s155
    %s175 = sphi 0, %s177
    %s178 = sphi 0, %s175
    %s179 = sphi 0, %s178
    %s195 = sphi 0, %s179
  $region4: #{mixer_block_forward.1} parent=0 // loop_header_branch
    %16 = sbr.rel (%p14) target = $region8
  $region5: #{mixer_block_forward.1} parent=0 // loop_body
    %s18 = ssub.s32 %s13, 1
    %s19 = ssub.s32 %s13, 2
    %s20 = sadd.s32 %s13, 1
    %s21 = ssub.s32 %s13, %s20
    %p22 = scmp.eq.s32.totalorder %s21, 0
    %s24 = sadd.s32 %s23, 1
    %s25 = scalar_select %p22, %s23, %s24
    %p28 = pneg %p22
    %p29 = scmp.eq.s32.totalorder %s13, 1
    %p30 = por %p28, %p29
    %p31 = scmp.ne.s32.totalorder %s23, %s26
    %p32 = scmp.eq.s32.totalorder %s13, 0
    %p33 = por %p31, %p32
    %p34 = scmp.ne.s32.totalorder %s23, %s26
    %p35 = scmp.eq.s32.totalorder %s18, 1
    %p36 = por %p34, %p35
    %p37 = scmp.ne.s32.totalorder %s26, %s27
    %p38 = scmp.eq.s32.totalorder %s18, 0
    %p39 = por %p37, %p38
    %p40 = scmp.ne.s32.totalorder %s26, %s27
    %p41 = scmp.eq.s32.totalorder %s19, 1
    %p42 = por %p40, %p41
    %p44 = scmp.ne.s32.totalorder %s27, %s43
    %p45 = scmp.eq.s32.totalorder %s19, 0
    %p46 = por %p44, %p45
    %s48 = sadd.s32 %s47, 1
    %p51 = scmp.eq.s32.totalorder %s13, 1
    %p52 = scmp.ne.s32.totalorder %s47, %s49
    %p53 = scmp.eq.s32.totalorder %s13, 0
    %p54 = por %p52, %p53
    %p55 = scmp.ne.s32.totalorder %s47, %s49
    %p56 = scmp.eq.s32.totalorder %s18, 1
    %p57 = por %p55, %p56
    %p58 = scmp.ne.s32.totalorder %s49, %s50
    %p59 = scmp.eq.s32.totalorder %s18, 0
    %p60 = por %p58, %p59
    %p61 = scmp.ne.s32.totalorder %s49, %s50
    %p62 = scmp.eq.s32.totalorder %s19, 1
    %p63 = por %p61, %p62
    %p65 = scmp.ne.s32.totalorder %s50, %s64
    %p66 = scmp.eq.s32.totalorder %s19, 0
    %p67 = por %p65, %p66
    %s69 = sadd.s32 %s68, 1
    %p72 = scmp.eq.s32.totalorder %s13, 1
    %p73 = scmp.ne.s32.totalorder %s68, %s70
    %p74 = scmp.eq.s32.totalorder %s13, 0
    %p75 = por %p73, %p74
    %p76 = scmp.ne.s32.totalorder %s68, %s70
    %p77 = scmp.eq.s32.totalorder %s18, 1
    %p78 = por %p76, %p77
    %p79 = scmp.ne.s32.totalorder %s70, %s71
    %p80 = scmp.eq.s32.totalorder %s18, 0
    %p81 = por %p79, %p80
    %p82 = scmp.ne.s32.totalorder %s70, %s71
    %p83 = scmp.eq.s32.totalorder %s19, 1
    %p84 = por %p82, %p83
    %p86 = scmp.ne.s32.totalorder %s71, %s85
    %p87 = scmp.eq.s32.totalorder %s19, 0
    %p88 = por %p86, %p87
    %s90 = sadd.s32 %s89, 1
    %p93 = scmp.eq.s32.totalorder %s13, 1
    %p94 = scmp.ne.s32.totalorder %s89, %s91
    %p95 = scmp.eq.s32.totalorder %s13, 0
    %p96 = por %p94, %p95
    %p97 = scmp.ne.s32.totalorder %s89, %s91
    %p98 = scmp.eq.s32.totalorder %s18, 1
    %p99 = por %p97, %p98
    %p100 = scmp.ne.s32.totalorder %s91, %s92
    %p101 = scmp.eq.s32.totalorder %s18, 0
    %p102 = por %p100, %p101
    %p103 = scmp.ne.s32.totalorder %s91, %s92
    %p104 = scmp.eq.s32.totalorder %s19, 1
    %p105 = por %p103, %p104
    %p107 = scmp.ne.s32.totalorder %s92, %s106
    %p108 = scmp.eq.s32.totalorder %s19, 0
    %p109 = por %p107, %p108
    %s111 = sadd.s32 %s110, 1
    %p114 = scmp.eq.s32.totalorder %s13, 1
    %p115 = scmp.ne.s32.totalorder %s110, %s112
    %p116 = scmp.eq.s32.totalorder %s13, 0
    %p117 = por %p115, %p116
    %p118 = scmp.ne.s32.totalorder %s110, %s112
    %p119 = scmp.eq.s32.totalorder %s18, 1
    %p120 = por %p118, %p119
    %p121 = scmp.ne.s32.totalorder %s112, %s113
    %p122 = scmp.eq.s32.totalorder %s18, 0
    %p123 = por %p121, %p122
    %p124 = scmp.ne.s32.totalorder %s112, %s113
    %p125 = scmp.eq.s32.totalorder %s19, 1
    %p126 = por %p124, %p125
    %p128 = scmp.ne.s32.totalorder %s113, %s127
    %p129 = scmp.eq.s32.totalorder %s19, 0
    %p130 = por %p128, %p129
    %s132 = sadd.s32 %s131, 1
    %p135 = scmp.eq.s32.totalorder %s13, 1
    %p136 = scmp.ne.s32.totalorder %s131, %s133
    %p137 = scmp.eq.s32.totalorder %s13, 0
    %p138 = por %p136, %p137
    %p139 = scmp.ne.s32.totalorder %s131, %s133
    %p140 = scmp.eq.s32.totalorder %s18, 1
    %p141 = por %p139, %p140
    %p142 = scmp.ne.s32.totalorder %s133, %s134
    %p143 = scmp.eq.s32.totalorder %s18, 0
    %p144 = por %p142, %p143
    %p145 = scmp.ne.s32.totalorder %s133, %s134
    %p146 = scmp.eq.s32.totalorder %s19, 1
    %p147 = por %p145, %p146
    %p149 = scmp.ne.s32.totalorder %s134, %s148
    %p150 = scmp.eq.s32.totalorder %s19, 0
    %p151 = por %p149, %p150
    %s153 = sadd.s32 %s152, 1
    %p156 = scmp.eq.s32.totalorder %s13, 1
    %p157 = scmp.ne.s32.totalorder %s152, %s154
    %p158 = scmp.eq.s32.totalorder %s13, 0
    %p159 = por %p157, %p158
    %p160 = scmp.ne.s32.totalorder %s152, %s154
    %p161 = scmp.eq.s32.totalorder %s18, 1
    %p162 = por %p160, %p161
    %p163 = scmp.ne.s32.totalorder %s154, %s155
    %p164 = scmp.eq.s32.totalorder %s18, 0
    %p165 = por %p163, %p164
    %p166 = scmp.ne.s32.totalorder %s154, %s155
    %p167 = scmp.eq.s32.totalorder %s19, 1
    %p168 = por %p166, %p167
    %p170 = scmp.ne.s32.totalorder %s155, %s169
    %p171 = scmp.eq.s32.totalorder %s19, 0
    %p172 = por %p170, %p171
    %s173 = ssub.s32 %s13, %s20
    %p174 = scmp.eq.s32.totalorder %s173, 0
    %s176 = sadd.s32 %s175, 1
    %s177 = scalar_select %p174, %s175, %s176
    %p180 = pneg %p174
    %p181 = scmp.eq.s32.totalorder %s13, 1
    %p182 = por %p180, %p181
    %p183 = scmp.ne.s32.totalorder %s175, %s178
    %p184 = scmp.eq.s32.totalorder %s13, 0
    %p185 = por %p183, %p184
    %p186 = scmp.ne.s32.totalorder %s175, %s178
    %p187 = scmp.eq.s32.totalorder %s18, 1
    %p188 = por %p186, %p187
    %p189 = scmp.ne.s32.totalorder %s178, %s179
    %p190 = scmp.eq.s32.totalorder %s18, 0
    %p191 = por %p189, %p190
    %p192 = scmp.ne.s32.totalorder %s178, %s179
    %p193 = scmp.eq.s32.totalorder %s19, 1
    %p194 = por %p192, %p193
    %p196 = scmp.ne.s32.totalorder %s179, %s195
    %p197 = scmp.eq.s32.totalorder %s19, 0
    %p198 = por %p196, %p197
    %p199 = scmp.le.s32.totalorder 1, %s13
    %p200 = scmp.lt.s32.totalorder %s13, 3
    %p201 = pnand %p199, %p200
    %p202 = pneg %p201
    // Predicated region
    $region9: #{mixer_block_forward.1} parent=5 // pred_check
      _
    $region10: #{mixer_block_forward.1} parent=5 // pred_check_branch
      %204 = sbr.rel (%p201) target = $region12
    $region11: #{mixer_block_forward.1} parent=5 // pred_region
      %s205 = ssub.s32 %s13, 1
      // Predicated region
      $region13: #{mixer_block_forward.1} parent=11 // pred_check
        %p206 = pneg %p60
      $region14: #{mixer_block_forward.1} parent=11 // pred_check_branch
        %208 = sbr.rel (%p206) target = $region16
      $region15: #{mixer_block_forward.1} parent=11 // pred_region
        _
      $region16: #{mixer_block_forward.1} parent=11 // pred_fallthru
        _
      // Predicated region
      $region17: #{mixer_block_forward.1} parent=11 // pred_check
        %p209 = pneg %p81
      $region18: #{mixer_block_forward.1} parent=11 // pred_check_branch
        %211 = sbr.rel (%p209) target = $region20
      $region19: #{mixer_block_forward.1} parent=11 // pred_region
        _
      $region20: #{mixer_block_forward.1} parent=11 // pred_fallthru
        _
      // Predicated region
      $region21: #{mixer_block_forward.1} parent=11 // pred_check
        %p212 = pneg %p102
      $region22: #{mixer_block_forward.1} parent=11 // pred_check_branch
        %214 = sbr.rel (%p212) target = $region24
      $region23: #{mixer_block_forward.1} parent=11 // pred_region
        _
      $region24: #{mixer_block_forward.1} parent=11 // pred_fallthru
        _
      // Predicated region
      $region25: #{mixer_block_forward.1} parent=11 // pred_check
        %p215 = pneg %p123
      $region26: #{mixer_block_forward.1} parent=11 // pred_check_branch
        %217 = sbr.rel (%p215) target = $region28
      $region27: #{mixer_block_forward.1} parent=11 // pred_region
        _
      $region28: #{mixer_block_forward.1} parent=11 // pred_fallthru
        _
      // Predicated region
      $region29: #{mixer_block_forward.1} parent=11 // pred_check
        %p218 = pneg %p144
      $region30: #{mixer_block_forward.1} parent=11 // pred_check_branch
        %220 = sbr.rel (%p218) target = $region32
      $region31: #{mixer_block_forward.1} parent=11 // pred_region
        _
      $region32: #{mixer_block_forward.1} parent=11 // pred_fallthru
        _
      // Predicated region
      $region33: #{mixer_block_forward.1} parent=11 // pred_check
        %p221 = pneg %p165
      $region34: #{mixer_block_forward.1} parent=11 // pred_check_branch
        %223 = sbr.rel (%p221) target = $region36
      $region35: #{mixer_block_forward.1} parent=11 // pred_region
        _
      $region36: #{mixer_block_forward.1} parent=11 // pred_fallthru
        _
    $region12: #{mixer_block_forward.1} parent=5 // pred_fallthru
      _
    %p224 = scmp.lt.s32.totalorder %s13, 2
    // Predicated region
    $region37: #{mixer_block_forward.1} parent=5 // pred_check
      %p225 = pneg %p224
    $region38: #{mixer_block_forward.1} parent=5 // pred_check_branch
      %227 = sbr.rel (%p225) target = $region40
    $region39: #{mixer_block_forward.1} parent=5 // pred_region
      // Predicated region
      $region41: #{mixer_block_forward.1} parent=39 // pred_check
        %p228 = pneg %p33
      $region42: #{mixer_block_forward.1} parent=39 // pred_check_branch
        %230 = sbr.rel (%p228) target = $region44
      $region43: #{mixer_block_forward.1} parent=39 // pred_region
        %p231 = scmp.lt.s32.totalorder %s13, 1
        %s232 = scalar_select %p231, %s13, 1
        %s233 = smul.addr %s232, 8
        %s234 = smul.addr %s233, 8
        %s235 = scalar_lea.vmem %s0, %s234
      $region44: #{mixer_block_forward.1} parent=39 // pred_fallthru
        _
    $region40: #{mixer_block_forward.1} parent=5 // pred_fallthru
      _
    %p236 = scmp.le.s32.totalorder 1, %s13
    %p237 = scmp.lt.s32.totalorder %s13, 3
    %p238 = pnand %p236, %p237
    %p239 = pneg %p238
    // Predicated region
    $region45: #{mixer_block_forward.1} parent=5 // pred_check
      _
    $region46: #{mixer_block_forward.1} parent=5 // pred_check_branch
      %241 = sbr.rel (%p238) target = $region48
    $region47: #{mixer_block_forward.1} parent=5 // pred_region
      %s242 = ssub.s32 %s13, 1
      %p243 = scmp.lt.s32.totalorder %s18, 1
      %s244 = scalar_select %p243, %s18, 1
      %s245 = smul.addr %s244, 8
      %s246 = smul.addr %s245, 8
      %s247 = scalar_lea.vmem %s0, %s246
      %p248 = pneg %p39
      %p249 = pneg %p36
      %p250 = pneg %p60
      %p251 = pneg %p57
      %p252 = pneg %p81
      %p253 = pneg %p78
      %p254 = pneg %p102
      %p255 = pneg %p99
      %p256 = pneg %p123
      %p257 = pneg %p120
      %p258 = pneg %p144
      %p259 = pneg %p141
      %p260 = pneg %p165
      %p261 = pneg %p162
      %p262 = pneg %p191
      %p263 = pneg %p188
      %p264 = scmp.lt.s32.totalorder %s18, 1
      %s265 = scalar_select %p264, %s18, 1
      %s266 = smul.addr %s265, 8
      %s267 = smul.addr %s266, 8
      %s268 = scalar_lea.vmem %s7, %s267
      %p269 = scmp.lt.s32.totalorder %s18, 1
      %s270 = scalar_select %p269, %s18, 1
      %s271 = smul.addr %s270, 8
      %s272 = smul.addr %s271, 8
      %s273 = scalar_lea.vmem %s0, %s272
      %p274 = scmp.lt.s32.totalorder %s18, 1
      %s275 = scalar_select %p274, %s18, 1
      %s276 = smul.addr %s275, 8
      %s277 = smul.addr %s276, 8
      %s278 = scalar_lea.vmem %s7, %s277
      %v279 = vld [vmem:[%s273] sm:$0xff]
      %v280 = vld [vmem:[%s273 + $0x8] sm:$0xff]
      %v281 = vld [vmem:[%s273 + $0x10] sm:$0xff]
      %v282 = vld [vmem:[%s273 + $0x18] sm:$0xff]
      %v283 = vld [vmem:[%s273 + $0x20] sm:$0xff]
      %v284 = vld [vmem:[%s273 + $0x28] sm:$0xff]
      %v285 = vld [vmem:[%s273 + $0x30] sm:$0xff]
      %v286 = vld [vmem:[%s273 + $0x38] sm:$0xff]
      %v287 = vld [vmem:[%s1] sm:$0x7f]
      %v288 = vlaneseq
      %v289 = vshrl.u32 %v288, 7
      %v290 = vsub.s32 0, %v289
      %v291 = vrot.slane %v287, %v290
      %v292 = vmul.f32 %v291, 0.0
      %v293 = vmul.f32 %v279, %v291
      %v294 = vmul.f32 %v280, %v291
      %v295 = vmul.f32 %v281, %v291
      %v296 = vmul.f32 %v282, %v291
      %v297 = vmul.f32 %v283, %v291
      %v298 = vlaneseq
      %v299 = vshrl.u32 %v298, 7
      %v300 = vsub.s32 1, %v299
      %v301 = vrot.slane %v287, %v300
      %v302 = vmul.f32 %v301, 0.0
      %v303 = vmul.f32 %v279, %v301
      %v304 = vmul.f32 %v280, %v301
      %v305 = vmul.f32 %v281, %v301
      %v306 = vmul.f32 %v282, %v301
      %v307 = vmul.f32 %v283, %v301
      %v308 = vmul.f32 %v284, %v301
      %v309 = vadd.f32 %v292, %v302
      %v310 = vadd.f32 %v292, %v303
      %v311 = vadd.f32 %v293, %v304
      %v312 = vadd.f32 %v294, %v305
      %v313 = vadd.f32 %v295, %v306
      %v314 = vadd.f32 %v296, %v307
      %v315 = vadd.f32 %v297, %v308
      %v316 = vlaneseq
      %v317 = vshrl.u32 %v316, 7
      %v318 = vsub.s32 2, %v317
      %v319 = vrot.slane %v287, %v318
      %v320 = vmul.f32 %v319, 0.0
      %v321 = vmul.f32 %v279, %v319
      %v322 = vmul.f32 %v280, %v319
      %v323 = vmul.f32 %v281, %v319
      %v324 = vmul.f32 %v282, %v319
      %v325 = vmul.f32 %v283, %v319
      %v326 = vmul.f32 %v284, %v319
      %v327 = vmul.f32 %v285, %v319
      %v328 = vadd.f32 %v309, %v320
      %v329 = vadd.f32 %v309, %v321
      %v330 = vadd.f32 %v310, %v322
      %v331 = vadd.f32 %v311, %v323
      %v332 = vadd.f32 %v312, %v324
      %v333 = vadd.f32 %v313, %v325
      %v334 = vadd.f32 %v314, %v326
      %v335 = vadd.f32 %v315, %v327
      %v336 = vlaneseq
      %v337 = vshrl.u32 %v336, 7
      %v338 = vsub.s32 3, %v337
      %v339 = vrot.slane %v287, %v338
      %v340 = vmul.f32 %v279, %v339
      %v341 = vmul.f32 %v280, %v339
      %v342 = vmul.f32 %v281, %v339
      %v343 = vmul.f32 %v282, %v339
      %v344 = vmul.f32 %v283, %v339
      %v345 = vmul.f32 %v284, %v339
      %v346 = vmul.f32 %v285, %v339
      %v347 = vmul.f32 %v286, %v339
      %v348 = vadd.f32 %v328, %v340
      %v349 = vadd.f32 %v329, %v341
      %v350 = vadd.f32 %v330, %v342
      %v351 = vadd.f32 %v331, %v343
      %v352 = vadd.f32 %v332, %v344
      %v353 = vadd.f32 %v333, %v345
      %v354 = vadd.f32 %v334, %v346
      %v355 = vadd.f32 %v335, %v347
      %v356 = vlaneseq
      %v357 = vshrl.u32 %v356, 7
      %v358 = vsub.s32 4, %v357
      %v359 = vrot.slane %v287, %v358
      %v360 = vmul.f32 %v280, %v359
      %v361 = vmul.f32 %v281, %v359
      %v362 = vmul.f32 %v282, %v359
      %v363 = vmul.f32 %v283, %v359
      %v364 = vmul.f32 %v284, %v359
      %v365 = vmul.f32 %v285, %v359
      %v366 = vmul.f32 %v286, %v359
      %v367 = vmul.f32 %v359, 0.0
      %v368 = vadd.f32 %v348, %v360
      %v369 = vadd.f32 %v349, %v361
      %v370 = vadd.f32 %v350, %v362
      %v371 = vadd.f32 %v351, %v363
      %v372 = vadd.f32 %v352, %v364
      %v373 = vadd.f32 %v353, %v365
      %v374 = vadd.f32 %v354, %v366
      %v375 = vadd.f32 %v355, %v367
      %v376 = vlaneseq
      %v377 = vshrl.u32 %v376, 7
      %v378 = vsub.s32 5, %v377
      %v379 = vrot.slane %v287, %v378
      %v380 = vmul.f32 %v281, %v379
      %v381 = vmul.f32 %v282, %v379
      %v382 = vmul.f32 %v283, %v379
      %v383 = vmul.f32 %v284, %v379
      %v384 = vmul.f32 %v285, %v379
      %v385 = vmul.f32 %v286, %v379
      %v386 = vmul.f32 %v379, 0.0
      %v387 = vadd.f32 %v368, %v380
      %v388 = vadd.f32 %v369, %v381
      %v389 = vadd.f32 %v370, %v382
      %v390 = vadd.f32 %v371, %v383
      %v391 = vadd.f32 %v372, %v384
      %v392 = vadd.f32 %v373, %v385
      %v393 = vadd.f32 %v374, %v386
      %v394 = vadd.f32 %v375, %v386
      %v395 = vlaneseq
      %v396 = vshrl.u32 %v395, 7
      %v397 = vsub.s32 6, %v396
      %v398 = vrot.slane %v287, %v397
      %v399 = vmul.f32 %v282, %v398
      %v400 = vmul.f32 %v283, %v398
      %v401 = vmul.f32 %v284, %v398
      %v402 = vmul.f32 %v285, %v398
      %v403 = vmul.f32 %v286, %v398
      %v404 = vmul.f32 %v398, 0.0
      %v405 = vadd.f32 %v387, %v399
      %v406 = vadd.f32 %v388, %v400
      %v407 = vadd.f32 %v389, %v401
      %v408 = vadd.f32 %v390, %v402
      %v409 = vadd.f32 %v391, %v403
      %v410 = vadd.f32 %v392, %v404
      %v411 = vadd.f32 %v393, %v404
      %v412 = vadd.f32 %v394, %v404
      %v413 = vld [vmem:[%s2] sm:$0x3f]
      %v414 = vld [vmem:[%s3] sm:$0xff]
      %v415 = vld [vmem:[%s3 + $0x8] sm:$0xff]
      %v416 = vld [vmem:[%s3 + $0x10] sm:$0xff]
      %v417 = vld [vmem:[%s3 + $0x18] sm:$0xff]
      %v418 = vld [vmem:[%s3 + $0x20] sm:$0xff]
      %v419 = vld [vmem:[%s3 + $0x28] sm:$0xff]
      %v420 = vld [vmem:[%s3 + $0x30] sm:$0xff]
      %v421 = vld [vmem:[%s3 + $0x38] sm:$0xff]
      %v422 = vld [vmem:[%s3 + $0x40] sm:$0xff]
      %v423 = vld [vmem:[%s3 + $0x48] sm:$0xff]
      %v424 = vld [vmem:[%s3 + $0x50] sm:$0xff]
      %v425 = vld [vmem:[%s3 + $0x58] sm:$0xff]
      %v426 = vld [vmem:[%s3 + $0x60] sm:$0xff]
      %v427 = vld [vmem:[%s3 + $0x68] sm:$0xff]
      %v428 = vld [vmem:[%s3 + $0x70] sm:$0xff]
      %v429 = vld [vmem:[%s3 + $0x78] sm:$0xff]
      %v430 = vlaneseq
      %v431 = vshrl.u32 %v430, 7
      %v432 = vsub.s32 0, %v431
      %v433 = vrot.slane %v413, %v432
      %v434 = vadd.f32 %v405, %v433
      %v435 = vadd.f32 %v406, %v433
      %v436 = vadd.f32 %v407, %v433
      %v437 = vadd.f32 %v408, %v433
      %v438 = vadd.f32 %v409, %v433
      %v439 = vadd.f32 %v410, %v433
      %v440 = vadd.f32 %v411, %v433
      %v441 = vadd.f32 %v412, %v433
      %v442 = vmul.f32 %v434, 0.5
      %v443 = vmul.f32 %v435, 0.5
      %v444 = vmul.f32 %v436, 0.5
      %v445 = vmul.f32 %v437, 0.5
      %v446 = vmul.f32 %v438, 0.5
      %v447 = vmul.f32 %v439, 0.5
      %v448 = vmul.f32 %v440, 0.5
      %v449 = vmul.f32 %v441, 0.5
      %v450 = vmul.f32 %v434, %v434
      %v451 = vmul.f32 %v435, %v435
      %v452 = vmul.f32 %v436, %v436
      %v453 = vmul.f32 %v437, %v437
      %v454 = vmul.f32 %v438, %v438
      %v455 = vmul.f32 %v439, %v439
      %v456 = vmul.f32 %v440, %v440
      %v457 = vmul.f32 %v441, %v441
      %v458 = vmul.f32 %v450, %v434
      %v459 = vmul.f32 %v451, %v435
      %v460 = vmul.f32 %v452, %v436
      %v461 = vmul.f32 %v453, %v437
      %v462 = vmul.f32 %v454, %v438
      %v463 = vmul.f32 %v455, %v439
      %v464 = vmul.f32 %v456, %v440
      %v465 = vmul.f32 %v457, %v441
      %v466 = vmul.f32 %v458, 0.044715
      %v467 = vmul.f32 %v459, 0.044715
      %v468 = vmul.f32 %v460, 0.044715
      %v469 = vmul.f32 %v461, 0.044715
      %v470 = vmul.f32 %v462, 0.044715
      %v471 = vmul.f32 %v463, 0.044715
      %v472 = vmul.f32 %v464, 0.044715
      %v473 = vmul.f32 %v465, 0.044715
      %v474 = vadd.f32 %v434, %v466
      %v475 = vadd.f32 %v435, %v467
      %v476 = vadd.f32 %v436, %v468
      %v477 = vadd.f32 %v437, %v469
      %v478 = vadd.f32 %v438, %v470
      %v479 = vadd.f32 %v439, %v471
      %v480 = vadd.f32 %v440, %v472
      %v481 = vadd.f32 %v441, %v473
      %v482 = vmul.f32 %v474, 0.7978846
      %v483 = vmul.f32 %v475, 0.7978846
      %v484 = vmul.f32 %v476, 0.7978846
      %v485 = vmul.f32 %v477, 0.7978846
      %v486 = vmul.f32 %v478, 0.7978846
      %v487 = vmul.f32 %v479, 0.7978846
      %v488 = vmul.f32 %v480, 0.7978846
      %v489 = vmul.f32 %v481, 0.7978846
      %v490 = vtanh.pop %v482
      %v491 = vtanh.pop %v483
      %v492 = vtanh.pop %v484
      %v493 = vtanh.pop %v485
      %v494 = vtanh.pop %v486
      %v495 = vtanh.pop %v487
      %v496 = vtanh.pop %v488
      %v497 = vtanh.pop %v489
      %v498 = vadd.f32 %v490, 1.0
      %v499 = vadd.f32 %v491, 1.0
      %v500 = vadd.f32 %v492, 1.0
      %v501 = vadd.f32 %v493, 1.0
      %v502 = vadd.f32 %v494, 1.0
      %v503 = vadd.f32 %v495, 1.0
      %v504 = vadd.f32 %v496, 1.0
      %v505 = vadd.f32 %v497, 1.0
      %v506 = vmul.f32 %v442, %v498
      %v507 = vmul.f32 %v443, %v499
      %v508 = vmul.f32 %v444, %v500
      %v509 = vmul.f32 %v445, %v501
      %v510 = vmul.f32 %v446, %v502
      %v511 = vmul.f32 %v447, %v503
      %v512 = vmul.f32 %v448, %v504
      %v513 = vmul.f32 %v449, %v505
      %v514 = vlaneseq
      %v515 = vshrl.u32 %v514, 7
      %v516 = vsub.s32 1, %v515
      %v517 = vrot.slane %v413, %v516
      %v518 = vmul.f32 %v506, %v517
      %v519 = vmul.f32 %v507, %v517
      %v520 = vmul.f32 %v508, %v517
      %v521 = vmul.f32 %v509, %v517
      %v522 = vmul.f32 %v510, %v517
      %v523 = vmul.f32 %v511, %v517
      %v524 = vmul.f32 %v512, %v517
      %v525 = vmul.f32 %v513, %v517
      %v526 = vlaneseq
      %v527 = vshrl.u32 %v526, 7
      %v528 = vsub.s32 2, %v527
      %v529 = vrot.slane %v413, %v528
      %v530 = vadd.f32 %v518, %v529
      %v531 = vadd.f32 %v519, %v529
      %v532 = vadd.f32 %v520, %v529
      %v533 = vadd.f32 %v521, %v529
      %v534 = vadd.f32 %v522, %v529
      %v535 = vadd.f32 %v523, %v529
      %v536 = vadd.f32 %v524, %v529
      %v537 = vadd.f32 %v525, %v529
      %v538 = vadd.f32 %v530, %v279
      %v539 = vadd.f32 %v531, %v280
      %v540 = vadd.f32 %v532, %v281
      %v541 = vadd.f32 %v533, %v282
      %v542 = vadd.f32 %v534, %v283
      %v543 = vadd.f32 %v535, %v284
      %v544 = vadd.f32 %v536, %v285
      %v545 = vadd.f32 %v537, %v286
      %546 = vmatprep.subr.mxu0 0.0
      %547 = vmatpush1.msra.mxu0 %v414
      %548 = vmatprep.subr.mxu0 0.0
      %549 = vmatpush1.msra.mxu0 %v415
      %550 = vmatprep.subr.mxu0 0.0
      %551 = vmatpush1.msra.mxu0 %v416
      %552 = vmatprep.subr.mxu0 0.0
      %553 = vmatpush1.msra.mxu0 %v417
      %554 = vmatprep.subr.mxu0 0.0
      %555 = vmatpush1.msra.mxu0 %v418
      %556 = vmatprep.subr.mxu0 0.0
      %557 = vmatpush1.msra.mxu0 %v419
      %558 = vmatprep.subr.mxu0 0.0
      %559 = vmatpush1.msra.mxu0 %v420
      %560 = vmatprep.subr.mxu0 0.0
      %561 = vmatpush1.msra.mxu0 %v421
      %562 = vmatprep.subr.mxu0 0.0
      %563 = vmatpush1.msra.mxu0 %v422
      %564 = vmatprep.subr.mxu0 0.0
      %565 = vmatpush1.msra.mxu0 %v423
      %566 = vmatprep.subr.mxu0 0.0
      %567 = vmatpush1.msra.mxu0 %v424
      %568 = vmatprep.subr.mxu0 0.0
      %569 = vmatpush1.msra.mxu0 %v425
      %570 = vmatprep.subr.mxu0 0.0
      %571 = vmatpush1.msra.mxu0 %v426
      %572 = vmatprep.subr.mxu0 0.0
      %573 = vmatpush1.msra.mxu0 %v427
      %574 = vmatprep.subr.mxu0 0.0
      %575 = vmatpush1.msra.mxu0 %v428
      %576 = vmatprep.subr.mxu0 0.0
      %577 = vmatpush1.msra.mxu0 %v429
      %578 = vmatprep.subr.mxu0 0.0
      %579 = vmatpush1.msra.mxu0 0.0
      %580 = vmatprep.subr.mxu0 0.0
      %581 = vmatpush1.msra.mxu0 0.0
      %582 = vmatprep.subr.mxu0 0.0
      %583 = vmatpush1.msra.mxu0 0.0
      %584 = vmatprep.subr.mxu0 0.0
      %585 = vmatpush1.msra.mxu0 0.0
      %586 = vmatprep.subr.mxu0 0.0
      %587 = vmatpush1.msra.mxu0 0.0
      %588 = vmatprep.subr.mxu0 0.0
      %589 = vmatpush1.msra.mxu0 0.0
      %590 = vmatprep.subr.mxu0 0.0
      %591 = vmatpush1.msra.mxu0 0.0
      %592 = vmatprep.subr.mxu0 0.0
      %593 = vmatpush1.msra.mxu0 0.0
      %594 = vmatprep.subr.mxu0 0.0
      %595 = vmatpush1.msra.mxu0 0.0
      %596 = vmatprep.subr.mxu0 0.0
      %597 = vmatpush1.msra.mxu0 0.0
      %598 = vmatprep.subr.mxu0 0.0
      %599 = vmatpush1.msra.mxu0 0.0
      %600 = vmatprep.subr.mxu0 0.0
      %601 = vmatpush1.msra.mxu0 0.0
      %602 = vmatprep.subr.mxu0 0.0
      %603 = vmatpush1.msra.mxu0 0.0
      %604 = vmatprep.subr.mxu0 0.0
      %605 = vmatpush1.msra.mxu0 0.0
      %606 = vmatprep.subr.mxu0 0.0
      %607 = vmatpush1.msra.mxu0 0.0
      %608 = vmatprep.subr.mxu0 0.0
      %609 = vmatpush1.msra.mxu0 0.0
      %610 = vmatprep.mubr.f32.mxu0 0.0
      %611 = vmatmul.mubr.f32.gmra.mrb[0].mxu0 %v538
      %v612 = vpop.f32.mrb[0].mxu0
      %v613 = vadd.f32 0.0, %v612
      %v614 = vpop.f32.mrb[0].mxu0
      %615 = vmatprep.mubr.f32.mxu0 0.0
      %616 = vmatmul.mubr.f32.gmra.mrb[0].mxu0 %v539
      %v617 = vpop.f32.mrb[0].mxu0
      %v618 = vadd.f32 0.0, %v617
      %v619 = vpop.f32.mrb[0].mxu0
      %620 = vmatprep.mubr.f32.mxu0 0.0
      %621 = vmatmul.mubr.f32.gmra.mrb[0].mxu0 %v540
      %v622 = vpop.f32.mrb[0].mxu0
      %v623 = vadd.f32 0.0, %v622
      %v624 = vpop.f32.mrb[0].mxu0
      %625 = vmatprep.mubr.f32.mxu0 0.0
      %626 = vmatmul.mubr.f32.gmra.mrb[0].mxu0 %v541
      %v627 = vpop.f32.mrb[0].mxu0
      %v628 = vadd.f32 0.0, %v627
      %v629 = vpop.f32.mrb[0].mxu0
      %630 = vmatprep.mubr.f32.mxu0 0.0
      %631 = vmatmul.mubr.f32.gmra.mrb[0].mxu0 %v542
      %v632 = vpop.f32.mrb[0].mxu0
      %v633 = vadd.f32 0.0, %v632
      %v634 = vpop.f32.mrb[0].mxu0
      %635 = vmatprep.mubr.f32.mxu0 0.0
      %636 = vmatmul.mubr.f32.gmra.mrb[0].mxu0 %v543
      %v637 = vpop.f32.mrb[0].mxu0
      %v638 = vadd.f32 0.0, %v637
      %v639 = vpop.f32.mrb[0].mxu0
      %640 = vmatprep.mubr.f32.mxu0 0.0
      %641 = vmatmul.mubr.f32.gmra.mrb[0].mxu0 %v544
      %v642 = vpop.f32.mrb[0].mxu0
      %v643 = vadd.f32 0.0, %v642
      %v644 = vpop.f32.mrb[0].mxu0
      %645 = vmatprep.mubr.f32.mxu0 0.0
      %646 = vmatmul.mubr.f32.gmra.mrb[0].mxu0 %v545
      %v647 = vpop.f32.mrb[0].mxu0
      %v648 = vadd.f32 0.0, %v647
      %v649 = vpop.f32.mrb[0].mxu0
      %650 = vdwg.mxu0
      %v651 = vlaneseq
      %v652 = vshrl.u32 %v651, 7
      %v653 = vsub.s32 3, %v652
      %v654 = vrot.slane %v413, %v653
      %v655 = vadd.f32 %v613, %v654
      %v656 = vadd.f32 %v618, %v654
      %v657 = vadd.f32 %v623, %v654
      %v658 = vadd.f32 %v628, %v654
      %v659 = vadd.f32 %v633, %v654
      %v660 = vadd.f32 %v638, %v654
      %v661 = vadd.f32 %v643, %v654
      %v662 = vadd.f32 %v648, %v654
      %v663 = vmul.f32 %v655, 0.5
      %v664 = vmul.f32 %v656, 0.5
      %v665 = vmul.f32 %v657, 0.5
      %v666 = vmul.f32 %v658, 0.5
      %v667 = vmul.f32 %v659, 0.5
      %v668 = vmul.f32 %v660, 0.5
      %v669 = vmul.f32 %v661, 0.5
      %v670 = vmul.f32 %v662, 0.5
      %v671 = vmul.f32 %v655, %v655
      %v672 = vmul.f32 %v656, %v656
      %v673 = vmul.f32 %v657, %v657
      %v674 = vmul.f32 %v658, %v658
      %v675 = vmul.f32 %v659, %v659
      %v676 = vmul.f32 %v660, %v660
      %v677 = vmul.f32 %v661, %v661
      %v678 = vmul.f32 %v662, %v662
      %v679 = vmul.f32 %v671, %v655
      %v680 = vmul.f32 %v672, %v656
      %v681 = vmul.f32 %v673, %v657
      %v682 = vmul.f32 %v674, %v658
      %v683 = vmul.f32 %v675, %v659
      %v684 = vmul.f32 %v676, %v660
      %v685 = vmul.f32 %v677, %v661
      %v686 = vmul.f32 %v678, %v662
      %v687 = vmul.f32 %v679, 0.044715
      %v688 = vmul.f32 %v680, 0.044715
      %v689 = vmul.f32 %v681, 0.044715
      %v690 = vmul.f32 %v682, 0.044715
      %v691 = vmul.f32 %v683, 0.044715
      %v692 = vmul.f32 %v684, 0.044715
      %v693 = vmul.f32 %v685, 0.044715
      %v694 = vmul.f32 %v686, 0.044715
      %v695 = vadd.f32 %v655, %v687
      %v696 = vadd.f32 %v656, %v688
      %v697 = vadd.f32 %v657, %v689
      %v698 = vadd.f32 %v658, %v690
      %v699 = vadd.f32 %v659, %v691
      %v700 = vadd.f32 %v660, %v692
      %v701 = vadd.f32 %v661, %v693
      %v702 = vadd.f32 %v662, %v694
      %v703 = vmul.f32 %v695, 0.7978846
      %v704 = vmul.f32 %v696, 0.7978846
      %v705 = vmul.f32 %v697, 0.7978846
      %v706 = vmul.f32 %v698, 0.7978846
      %v707 = vmul.f32 %v699, 0.7978846
      %v708 = vmul.f32 %v700, 0.7978846
      %v709 = vmul.f32 %v701, 0.7978846
      %v710 = vmul.f32 %v702, 0.7978846
      %v711 = vtanh.pop %v703
      %v712 = vtanh.pop %v704
      %v713 = vtanh.pop %v705
      %v714 = vtanh.pop %v706
      %v715 = vtanh.pop %v707
      %v716 = vtanh.pop %v708
      %v717 = vtanh.pop %v709
      %v718 = vtanh.pop %v710
      %v719 = vadd.f32 %v711, 1.0
      %v720 = vadd.f32 %v712, 1.0
      %v721 = vadd.f32 %v713, 1.0
      %v722 = vadd.f32 %v714, 1.0
      %v723 = vadd.f32 %v715, 1.0
      %v724 = vadd.f32 %v716, 1.0
      %v725 = vadd.f32 %v717, 1.0
      %v726 = vadd.f32 %v718, 1.0
      %v727 = vmul.f32 %v663, %v719
      %v728 = vmul.f32 %v664, %v720
      %v729 = vmul.f32 %v665, %v721
      %v730 = vmul.f32 %v666, %v722
      %v731 = vmul.f32 %v667, %v723
      %v732 = vmul.f32 %v668, %v724
      %v733 = vmul.f32 %v669, %v725
      %v734 = vmul.f32 %v670, %v726
      %v735 = vlaneseq
      %v736 = vshrl.u32 %v735, 7
      %v737 = vsub.s32 4, %v736
      %v738 = vrot.slane %v413, %v737
      %v739 = vmul.f32 %v727, %v738
      %v740 = vmul.f32 %v728, %v738
      %v741 = vmul.f32 %v729, %v738
      %v742 = vmul.f32 %v730, %v738
      %v743 = vmul.f32 %v731, %v738
      %v744 = vmul.f32 %v732, %v738
      %v745 = vmul.f32 %v733, %v738
      %v746 = vmul.f32 %v734, %v738
      %v747 = vlaneseq
      %v748 = vshrl.u32 %v747, 7
      %v749 = vsub.s32 5, %v748
      %v750 = vrot.slane %v413, %v749
      %v751 = vadd.f32 %v739, %v750
      %v752 = vadd.f32 %v740, %v750
      %v753 = vadd.f32 %v741, %v750
      %v754 = vadd.f32 %v742, %v750
      %v755 = vadd.f32 %v743, %v750
      %v756 = vadd.f32 %v744, %v750
      %v757 = vadd.f32 %v745, %v750
      %v758 = vadd.f32 %v746, %v750
      %s759 = scalar_lea.vmem %s1, 8
      %v760 = vld [vmem:[%s759] sm:$0x7f]
      %v761 = vlaneseq
      %v762 = vshrl.u32 %v761, 7
      %v763 = vsub.s32 0, %v762
      %v764 = vrot.slane %v760, %v763
      %v765 = vmul.f32 %v764, 0.0
      %v766 = vmul.f32 %v751, %v764
      %v767 = vmul.f32 %v752, %v764
      %v768 = vmul.f32 %v753, %v764
      %v769 = vmul.f32 %v754, %v764
      %v770 = vmul.f32 %v755, %v764
      %v771 = vlaneseq
      %v772 = vshrl.u32 %v771, 7
      %v773 = vsub.s32 1, %v772
      %v774 = vrot.slane %v760, %v773
      %v775 = vmul.f32 %v774, 0.0
      %v776 = vmul.f32 %v751, %v774
      %v777 = vmul.f32 %v752, %v774
      %v778 = vmul.f32 %v753, %v774
      %v779 = vmul.f32 %v754, %v774
      %v780 = vmul.f32 %v755, %v774
      %v781 = vmul.f32 %v756, %v774
      %v782 = vadd.f32 %v765, %v775
      %v783 = vadd.f32 %v765, %v776
      %v784 = vadd.f32 %v766, %v777
      %v785 = vadd.f32 %v767, %v778
      %v786 = vadd.f32 %v768, %v779
      %v787 = vadd.f32 %v769, %v780
      %v788 = vadd.f32 %v770, %v781
      %v789 = vlaneseq
      %v790 = vshrl.u32 %v789, 7
      %v791 = vsub.s32 2, %v790
      %v792 = vrot.slane %v760, %v791
      %v793 = vmul.f32 %v792, 0.0
      %v794 = vmul.f32 %v751, %v792
      %v795 = vmul.f32 %v752, %v792
      %v796 = vmul.f32 %v753, %v792
      %v797 = vmul.f32 %v754, %v792
      %v798 = vmul.f32 %v755, %v792
      %v799 = vmul.f32 %v756, %v792
      %v800 = vmul.f32 %v757, %v792
      %v801 = vadd.f32 %v782, %v793
      %v802 = vadd.f32 %v782, %v794
      %v803 = vadd.f32 %v783, %v795
      %v804 = vadd.f32 %v784, %v796
      %v805 = vadd.f32 %v785, %v797
      %v806 = vadd.f32 %v786, %v798
      %v807 = vadd.f32 %v787, %v799
      %v808 = vadd.f32 %v788, %v800
      %v809 = vlaneseq
      %v810 = vshrl.u32 %v809, 7
      %v811 = vsub.s32 3, %v810
      %v812 = vrot.slane %v760, %v811
      %v813 = vmul.f32 %v751, %v812
      %v814 = vmul.f32 %v752, %v812
      %v815 = vmul.f32 %v753, %v812
      %v816 = vmul.f32 %v754, %v812
      %v817 = vmul.f32 %v755, %v812
      %v818 = vmul.f32 %v756, %v812
      %v819 = vmul.f32 %v757, %v812
      %v820 = vmul.f32 %v758, %v812
      %v821 = vadd.f32 %v801, %v813
      %v822 = vadd.f32 %v802, %v814
      %v823 = vadd.f32 %v803, %v815
      %v824 = vadd.f32 %v804, %v816
      %v825 = vadd.f32 %v805, %v817
      %v826 = vadd.f32 %v806, %v818
      %v827 = vadd.f32 %v807, %v819
      %v828 = vadd.f32 %v808, %v820
      %v829 = vlaneseq
      %v830 = vshrl.u32 %v829, 7
      %v831 = vsub.s32 4, %v830
      %v832 = vrot.slane %v760, %v831
      %v833 = vmul.f32 %v752, %v832
      %v834 = vmul.f32 %v753, %v832
      %v835 = vmul.f32 %v754, %v832
      %v836 = vmul.f32 %v755, %v832
      %v837 = vmul.f32 %v756, %v832
      %v838 = vmul.f32 %v757, %v832
      %v839 = vmul.f32 %v758, %v832
      %v840 = vmul.f32 %v832, 0.0
      %v841 = vadd.f32 %v821, %v833
      %v842 = vadd.f32 %v822, %v834
      %v843 = vadd.f32 %v823, %v835
      %v844 = vadd.f32 %v824, %v836
      %v845 = vadd.f32 %v825, %v837
      %v846 = vadd.f32 %v826, %v838
      %v847 = vadd.f32 %v827, %v839
      %v848 = vadd.f32 %v828, %v840
      %v849 = vlaneseq
      %v850 = vshrl.u32 %v849, 7
      %v851 = vsub.s32 5, %v850
      %v852 = vrot.slane %v760, %v851
      %v853 = vmul.f32 %v753, %v852
      %v854 = vmul.f32 %v754, %v852
      %v855 = vmul.f32 %v755, %v852
      %v856 = vmul.f32 %v756, %v852
      %v857 = vmul.f32 %v757, %v852
      %v858 = vmul.f32 %v758, %v852
      %v859 = vmul.f32 %v852, 0.0
      %v860 = vadd.f32 %v841, %v853
      %v861 = vadd.f32 %v842, %v854
      %v862 = vadd.f32 %v843, %v855
      %v863 = vadd.f32 %v844, %v856
      %v864 = vadd.f32 %v845, %v857
      %v865 = vadd.f32 %v846, %v858
      %v866 = vadd.f32 %v847, %v859
      %v867 = vadd.f32 %v848, %v859
      %v868 = vlaneseq
      %v869 = vshrl.u32 %v868, 7
      %v870 = vsub.s32 6, %v869
      %v871 = vrot.slane %v760, %v870
      %v872 = vmul.f32 %v754, %v871
      %v873 = vmul.f32 %v755, %v871
      %v874 = vmul.f32 %v756, %v871
      %v875 = vmul.f32 %v757, %v871
      %v876 = vmul.f32 %v758, %v871
      %v877 = vmul.f32 %v871, 0.0
      %v878 = vadd.f32 %v860, %v872
      %v879 = vadd.f32 %v861, %v873
      %v880 = vadd.f32 %v862, %v874
      %v881 = vadd.f32 %v863, %v875
      %v882 = vadd.f32 %v864, %v876
      %v883 = vadd.f32 %v865, %v877
      %v884 = vadd.f32 %v866, %v877
      %v885 = vadd.f32 %v867, %v877
      %s886 = scalar_lea.vmem %s2, 8
      %v887 = vld [vmem:[%s886] sm:$0x3f]
      %s888 = scalar_lea.vmem %s3, 128
      %v889 = vld [vmem:[%s888] sm:$0xff]
      %v890 = vld [vmem:[%s888 + $0x8] sm:$0xff]
      %v891 = vld [vmem:[%s888 + $0x10] sm:$0xff]
      %v892 = vld [vmem:[%s888 + $0x18] sm:$0xff]
      %v893 = vld [vmem:[%s888 + $0x20] sm:$0xff]
      %v894 = vld [vmem:[%s888 + $0x28] sm:$0xff]
      %v895 = vld [vmem:[%s888 + $0x30] sm:$0xff]
      %v896 = vld [vmem:[%s888 + $0x38] sm:$0xff]
      %v897 = vld [vmem:[%s888 + $0x40] sm:$0xff]
      %v898 = vld [vmem:[%s888 + $0x48] sm:$0xff]
      %v899 = vld [vmem:[%s888 + $0x50] sm:$0xff]
      %v900 = vld [vmem:[%s888 + $0x58] sm:$0xff]
      %v901 = vld [vmem:[%s888 + $0x60] sm:$0xff]
      %v902 = vld [vmem:[%s888 + $0x68] sm:$0xff]
      %v903 = vld [vmem:[%s888 + $0x70] sm:$0xff]
      %v904 = vld [vmem:[%s888 + $0x78] sm:$0xff]
      %v905 = vlaneseq
      %v906 = vshrl.u32 %v905, 7
      %v907 = vsub.s32 0, %v906
      %v908 = vrot.slane %v887, %v907
      %v909 = vadd.f32 %v878, %v908
      %v910 = vadd.f32 %v879, %v908
      %v911 = vadd.f32 %v880, %v908
      %v912 = vadd.f32 %v881, %v908
      %v913 = vadd.f32 %v882, %v908
      %v914 = vadd.f32 %v883, %v908
      %v915 = vadd.f32 %v884, %v908
      %v916 = vadd.f32 %v885, %v908
      %v917 = vmul.f32 %v909, 0.5
      %v918 = vmul.f32 %v910, 0.5
      %v919 = vmul.f32 %v911, 0.5
      %v920 = vmul.f32 %v912, 0.5
      %v921 = vmul.f32 %v913, 0.5
      %v922 = vmul.f32 %v914, 0.5
      %v923 = vmul.f32 %v915, 0.5
      %v924 = vmul.f32 %v916, 0.5
      %v925 = vmul.f32 %v909, %v909
      %v926 = vmul.f32 %v910, %v910
      %v927 = vmul.f32 %v911, %v911
      %v928 = vmul.f32 %v912, %v912
      %v929 = vmul.f32 %v913, %v913
      %v930 = vmul.f32 %v914, %v914
      %v931 = vmul.f32 %v915, %v915
      %v932 = vmul.f32 %v916, %v916
      %v933 = vmul.f32 %v925, %v909
      %v934 = vmul.f32 %v926, %v910
      %v935 = vmul.f32 %v927, %v911
      %v936 = vmul.f32 %v928, %v912
      %v937 = vmul.f32 %v929, %v913
      %v938 = vmul.f32 %v930, %v914
      %v939 = vmul.f32 %v931, %v915
      %v940 = vmul.f32 %v932, %v916
      %v941 = vmul.f32 %v933, 0.044715
      %v942 = vmul.f32 %v934, 0.044715
      %v943 = vmul.f32 %v935, 0.044715
      %v944 = vmul.f32 %v936, 0.044715
      %v945 = vmul.f32 %v937, 0.044715
      %v946 = vmul.f32 %v938, 0.044715
      %v947 = vmul.f32 %v939, 0.044715
      %v948 = vmul.f32 %v940, 0.044715
      %v949 = vadd.f32 %v909, %v941
      %v950 = vadd.f32 %v910, %v942
      %v951 = vadd.f32 %v911, %v943
      %v952 = vadd.f32 %v912, %v944
      %v953 = vadd.f32 %v913, %v945
      %v954 = vadd.f32 %v914, %v946
      %v955 = vadd.f32 %v915, %v947
      %v956 = vadd.f32 %v916, %v948
      %v957 = vmul.f32 %v949, 0.7978846
      %v958 = vmul.f32 %v950, 0.7978846
      %v959 = vmul.f32 %v951, 0.7978846
      %v960 = vmul.f32 %v952, 0.7978846
      %v961 = vmul.f32 %v953, 0.7978846
      %v962 = vmul.f32 %v954, 0.7978846
      %v963 = vmul.f32 %v955, 0.7978846
      %v964 = vmul.f32 %v956, 0.7978846
      %v965 = vtanh.pop %v957
      %v966 = vtanh.pop %v958
      %v967 = vtanh.pop %v959
      %v968 = vtanh.pop %v960
      %v969 = vtanh.pop %v961
      %v970 = vtanh.pop %v962
      %v971 = vtanh.pop %v963
      %v972 = vtanh.pop %v964
      %v973 = vadd.f32 %v965, 1.0
      %v974 = vadd.f32 %v966, 1.0
      %v975 = vadd.f32 %v967, 1.0
      %v976 = vadd.f32 %v968, 1.0
      %v977 = vadd.f32 %v969, 1.0
      %v978 = vadd.f32 %v970, 1.0
      %v979 = vadd.f32 %v971, 1.0
      %v980 = vadd.f32 %v972, 1.0
      %v981 = vmul.f32 %v917, %v973
      %v982 = vmul.f32 %v918, %v974
      %v983 = vmul.f32 %v919, %v975
      %v984 = vmul.f32 %v920, %v976
      %v985 = vmul.f32 %v921, %v977
      %v986 = vmul.f32 %v922, %v978
      %v987 = vmul.f32 %v923, %v979
      %v988 = vmul.f32 %v924, %v980
      %v989 = vlaneseq
      %v990 = vshrl.u32 %v989, 7
      %v991 = vsub.s32 1, %v990
      %v992 = vrot.slane %v887, %v991
      %v993 = vmul.f32 %v981, %v992
      %v994 = vmul.f32 %v982, %v992
      %v995 = vmul.f32 %v983, %v992
      %v996 = vmul.f32 %v984, %v992
      %v997 = vmul.f32 %v985, %v992
      %v998 = vmul.f32 %v986, %v992
      %v999 = vmul.f32 %v987, %v992
      %v1000 = vmul.f32 %v988, %v992
      %v1001 = vlaneseq
      %v1002 = vshrl.u32 %v1001, 7
      %v1003 = vsub.s32 2, %v1002
      %v1004 = vrot.slane %v887, %v1003
      %v1005 = vadd.f32 %v993, %v1004
      %v1006 = vadd.f32 %v994, %v1004
      %v1007 = vadd.f32 %v995, %v1004
      %v1008 = vadd.f32 %v996, %v1004
      %v1009 = vadd.f32 %v997, %v1004
      %v1010 = vadd.f32 %v998, %v1004
      %v1011 = vadd.f32 %v999, %v1004
      %v1012 = vadd.f32 %v1000, %v1004
      %v1013 = vadd.f32 %v1005, %v751
      %v1014 = vadd.f32 %v1006, %v752
      %v1015 = vadd.f32 %v1007, %v753
      %v1016 = vadd.f32 %v1008, %v754
      %v1017 = vadd.f32 %v1009, %v755
      %v1018 = vadd.f32 %v1010, %v756
      %v1019 = vadd.f32 %v1011, %v757
      %v1020 = vadd.f32 %v1012, %v758
      %1021 = vmatprep.subr.mxu0 0.0
      %1022 = vmatpush1.msra.mxu0 %v889
      %1023 = vmatprep.subr.mxu0 0.0
      %1024 = vmatpush1.msra.mxu0 %v890
      %1025 = vmatprep.subr.mxu0 0.0
      %1026 = vmatpush1.msra.mxu0 %v891
      %1027 = vmatprep.subr.mxu0 0.0
      %1028 = vmatpush1.msra.mxu0 %v892
      %1029 = vmatprep.subr.mxu0 0.0
      %1030 = vmatpush1.msra.mxu0 %v893
      %1031 = vmatprep.subr.mxu0 0.0
      %1032 = vmatpush1.msra.mxu0 %v894
      %1033 = vmatprep.subr.mxu0 0.0
      %1034 = vmatpush1.msra.mxu0 %v895
      %1035 = vmatprep.subr.mxu0 0.0
      %1036 = vmatpush1.msra.mxu0 %v896
      %1037 = vmatprep.subr.mxu0 0.0
      %1038 = vmatpush1.msra.mxu0 %v897
      %1039 = vmatprep.subr.mxu0 0.0
      %1040 = vmatpush1.msra.mxu0 %v898
      %1041 = vmatprep.subr.mxu0 0.0
      %1042 = vmatpush1.msra.mxu0 %v899
      %1043 = vmatprep.subr.mxu0 0.0
      %1044 = vmatpush1.msra.mxu0 %v900
      %1045 = vmatprep.subr.mxu0 0.0
      %1046 = vmatpush1.msra.mxu0 %v901
      %1047 = vmatprep.subr.mxu0 0.0
      %1048 = vmatpush1.msra.mxu0 %v902
      %1049 = vmatprep.subr.mxu0 0.0
      %1050 = vmatpush1.msra.mxu0 %v903
      %1051 = vmatprep.subr.mxu0 0.0
      %1052 = vmatpush1.msra.mxu0 %v904
      %1053 = vmatprep.subr.mxu0 0.0
      %1054 = vmatpush1.msra.mxu0 0.0
      %1055 = vmatprep.subr.mxu0 0.0
      %1056 = vmatpush1.msra.mxu0 0.0
      %1057 = vmatprep.subr.mxu0 0.0
      %1058 = vmatpush1.msra.mxu0 0.0
      %1059 = vmatprep.subr.mxu0 0.0
      %1060 = vmatpush1.msra.mxu0 0.0
      %1061 = vmatprep.subr.mxu0 0.0
      %1062 = vmatpush1.msra.mxu0 0.0
      %1063 = vmatprep.subr.mxu0 0.0
      %1064 = vmatpush1.msra.mxu0 0.0
      %1065 = vmatprep.subr.mxu0 0.0
      %1066 = vmatpush1.msra.mxu0 0.0
      %1067 = vmatprep.subr.mxu0 0.0
      %1068 = vmatpush1.msra.mxu0 0.0
      %1069 = vmatprep.subr.mxu0 0.0
      %1070 = vmatpush1.msra.mxu0 0.0
      %1071 = vmatprep.subr.mxu0 0.0
      %1072 = vmatpush1.msra.mxu0 0.0
      %1073 = vmatprep.subr.mxu0 0.0
      %1074 = vmatpush1.msra.mxu0 0.0
      %1075 = vmatprep.subr.mxu0 0.0
      %1076 = vmatpush1.msra.mxu0 0.0
      %1077 = vmatprep.subr.mxu0 0.0
      %1078 = vmatpush1.msra.mxu0 0.0
      %1079 = vmatprep.subr.mxu0 0.0
      %1080 = vmatpush1.msra.mxu0 0.0
      %1081 = vmatprep.subr.mxu0 0.0
      %1082 = vmatpush1.msra.mxu0 0.0
      %1083 = vmatprep.subr.mxu0 0.0
      %1084 = vmatpush1.msra.mxu0 0.0
      %1085 = vmatprep.mubr.f32.mxu0 0.0
      %1086 = vmatmul.mubr.f32.gmra.mrb[0].mxu0 %v1013
      %v1087 = vpop.f32.mrb[0].mxu0
      %v1088 = vadd.f32 0.0, %v1087
      %v1089 = vpop.f32.mrb[0].mxu0
      %1090 = vmatprep.mubr.f32.mxu0 0.0
      %1091 = vmatmul.mubr.f32.gmra.mrb[0].mxu0 %v1014
      %v1092 = vpop.f32.mrb[0].mxu0
      %v1093 = vadd.f32 0.0, %v1092
      %v1094 = vpop.f32.mrb[0].mxu0
      %1095 = vmatprep.mubr.f32.mxu0 0.0
      %1096 = vmatmul.mubr.f32.gmra.mrb[0].mxu0 %v1015
      %v1097 = vpop.f32.mrb[0].mxu0
      %v1098 = vadd.f32 0.0, %v1097
      %v1099 = vpop.f32.mrb[0].mxu0
      %1100 = vmatprep.mubr.f32.mxu0 0.0
      %1101 = vmatmul.mubr.f32.gmra.mrb[0].mxu0 %v1016
      %v1102 = vpop.f32.mrb[0].mxu0
      %v1103 = vadd.f32 0.0, %v1102
      %v1104 = vpop.f32.mrb[0].mxu0
      %1105 = vmatprep.mubr.f32.mxu0 0.0
      %1106 = vmatmul.mubr.f32.gmra.mrb[0].mxu0 %v1017
      %v1107 = vpop.f32.mrb[0].mxu0
      %v1108 = vadd.f32 0.0, %v1107
      %v1109 = vpop.f32.mrb[0].mxu0
      %1110 = vmatprep.mubr.f32.mxu0 0.0
      %1111 = vmatmul.mubr.f32.gmra.mrb[0].mxu0 %v1018
      %v1112 = vpop.f32.mrb[0].mxu0
      %v1113 = vadd.f32 0.0, %v1112
      %v1114 = vpop.f32.mrb[0].mxu0
      %1115 = vmatprep.mubr.f32.mxu0 0.0
      %1116 = vmatmul.mubr.f32.gmra.mrb[0].mxu0 %v1019
      %v1117 = vpop.f32.mrb[0].mxu0
      %v1118 = vadd.f32 0.0, %v1117
      %v1119 = vpop.f32.mrb[0].mxu0
      %1120 = vmatprep.mubr.f32.mxu0 0.0
      %1121 = vmatmul.mubr.f32.gmra.mrb[0].mxu0 %v1020
      %v1122 = vpop.f32.mrb[0].mxu0
      %v1123 = vadd.f32 0.0, %v1122
      %v1124 = vpop.f32.mrb[0].mxu0
      %1125 = vdwg.mxu0
      %v1126 = vlaneseq
      %v1127 = vshrl.u32 %v1126, 7
      %v1128 = vsub.s32 3, %v1127
      %v1129 = vrot.slane %v887, %v1128
      %v1130 = vadd.f32 %v1088, %v1129
      %v1131 = vadd.f32 %v1093, %v1129
      %v1132 = vadd.f32 %v1098, %v1129
      %v1133 = vadd.f32 %v1103, %v1129
      %v1134 = vadd.f32 %v1108, %v1129
      %v1135 = vadd.f32 %v1113, %v1129
      %v1136 = vadd.f32 %v1118, %v1129
      %v1137 = vadd.f32 %v1123, %v1129
      %v1138 = vmul.f32 %v1130, 0.5
      %v1139 = vmul.f32 %v1131, 0.5
      %v1140 = vmul.f32 %v1132, 0.5
      %v1141 = vmul.f32 %v1133, 0.5
      %v1142 = vmul.f32 %v1134, 0.5
      %v1143 = vmul.f32 %v1135, 0.5
      %v1144 = vmul.f32 %v1136, 0.5
      %v1145 = vmul.f32 %v1137, 0.5
      %v1146 = vmul.f32 %v1130, %v1130
      %v1147 = vmul.f32 %v1131, %v1131
      %v1148 = vmul.f32 %v1132, %v1132
      %v1149 = vmul.f32 %v1133, %v1133
      %v1150 = vmul.f32 %v1134, %v1134
      %v1151 = vmul.f32 %v1135, %v1135
      %v1152 = vmul.f32 %v1136, %v1136
      %v1153 = vmul.f32 %v1137, %v1137
      %v1154 = vmul.f32 %v1146, %v1130
      %v1155 = vmul.f32 %v1147, %v1131
      %v1156 = vmul.f32 %v1148, %v1132
      %v1157 = vmul.f32 %v1149, %v1133
      %v1158 = vmul.f32 %v1150, %v1134
      %v1159 = vmul.f32 %v1151, %v1135
      %v1160 = vmul.f32 %v1152, %v1136
      %v1161 = vmul.f32 %v1153, %v1137
      %v1162 = vmul.f32 %v1154, 0.044715
      %v1163 = vmul.f32 %v1155, 0.044715
      %v1164 = vmul.f32 %v1156, 0.044715
      %v1165 = vmul.f32 %v1157, 0.044715
      %v1166 = vmul.f32 %v1158, 0.044715
      %v1167 = vmul.f32 %v1159, 0.044715
      %v1168 = vmul.f32 %v1160, 0.044715
      %v1169 = vmul.f32 %v1161, 0.044715
      %v1170 = vadd.f32 %v1130, %v1162
      %v1171 = vadd.f32 %v1131, %v1163
      %v1172 = vadd.f32 %v1132, %v1164
      %v1173 = vadd.f32 %v1133, %v1165
      %v1174 = vadd.f32 %v1134, %v1166
      %v1175 = vadd.f32 %v1135, %v1167
      %v1176 = vadd.f32 %v1136, %v1168
      %v1177 = vadd.f32 %v1137, %v1169
      %v1178 = vmul.f32 %v1170, 0.7978846
      %v1179 = vmul.f32 %v1171, 0.7978846
      %v1180 = vmul.f32 %v1172, 0.7978846
      %v1181 = vmul.f32 %v1173, 0.7978846
      %v1182 = vmul.f32 %v1174, 0.7978846
      %v1183 = vmul.f32 %v1175, 0.7978846
      %v1184 = vmul.f32 %v1176, 0.7978846
      %v1185 = vmul.f32 %v1177, 0.7978846
      %v1186 = vtanh.pop %v1178
      %v1187 = vtanh.pop %v1179
      %v1188 = vtanh.pop %v1180
      %v1189 = vtanh.pop %v1181
      %v1190 = vtanh.pop %v1182
      %v1191 = vtanh.pop %v1183
      %v1192 = vtanh.pop %v1184
      %v1193 = vtanh.pop %v1185
      %v1194 = vadd.f32 %v1186, 1.0
      %v1195 = vadd.f32 %v1187, 1.0
      %v1196 = vadd.f32 %v1188, 1.0
      %v1197 = vadd.f32 %v1189, 1.0
      %v1198 = vadd.f32 %v1190, 1.0
      %v1199 = vadd.f32 %v1191, 1.0
      %v1200 = vadd.f32 %v1192, 1.0
      %v1201 = vadd.f32 %v1193, 1.0
      %v1202 = vmul.f32 %v1138, %v1194
      %v1203 = vmul.f32 %v1139, %v1195
      %v1204 = vmul.f32 %v1140, %v1196
      %v1205 = vmul.f32 %v1141, %v1197
      %v1206 = vmul.f32 %v1142, %v1198
      %v1207 = vmul.f32 %v1143, %v1199
      %v1208 = vmul.f32 %v1144, %v1200
      %v1209 = vmul.f32 %v1145, %v1201
      %v1210 = vlaneseq
      %v1211 = vshrl.u32 %v1210, 7
      %v1212 = vsub.s32 4, %v1211
      %v1213 = vrot.slane %v887, %v1212
      %v1214 = vmul.f32 %v1202, %v1213
      %v1215 = vmul.f32 %v1203, %v1213
      %v1216 = vmul.f32 %v1204, %v1213
      %v1217 = vmul.f32 %v1205, %v1213
      %v1218 = vmul.f32 %v1206, %v1213
      %v1219 = vmul.f32 %v1207, %v1213
      %v1220 = vmul.f32 %v1208, %v1213
      %v1221 = vmul.f32 %v1209, %v1213
      %v1222 = vlaneseq
      %v1223 = vshrl.u32 %v1222, 7
      %v1224 = vsub.s32 5, %v1223
      %v1225 = vrot.slane %v887, %v1224
      %v1226 = vadd.f32 %v1214, %v1225
      %v1227 = vadd.f32 %v1215, %v1225
      %v1228 = vadd.f32 %v1216, %v1225
      %v1229 = vadd.f32 %v1217, %v1225
      %v1230 = vadd.f32 %v1218, %v1225
      %v1231 = vadd.f32 %v1219, %v1225
      %v1232 = vadd.f32 %v1220, %v1225
      %v1233 = vadd.f32 %v1221, %v1225
      %1234 = vst [vmem:[#allocation2] sm:$0xff] 0.0
      %1235 = vst [vmem:[#allocation2 + $0x8] sm:$0xf] 0.0
      %1236 = vst [vmem:[#allocation2 + $0x10] sm:$0xff] 0.0
      %1237 = vst [vmem:[#allocation2 + $0x18] sm:$0xf] 0.0
      %1238 = vst [vmem:[#allocation2 + $0x20] sm:$0xff] 0.0
      %1239 = vst [vmem:[#allocation2 + $0x28] sm:$0xf] 0.0
      %1240 = vst [vmem:[#allocation2 + $0x30] sm:$0xff] 0.0
      %1241 = vst [vmem:[#allocation2 + $0x38] sm:$0xf] 0.0
      %1242 = vst [vmem:[#allocation2 + $0x40] sm:$0xff] 0.0
      %1243 = vst [vmem:[#allocation2 + $0x48] sm:$0xf] 0.0
      %1244 = vst [vmem:[#allocation2 + $0x50] sm:$0xff] 0.0
      %1245 = vst [vmem:[#allocation2 + $0x58] sm:$0xf] 0.0
      %1246 = vst [vmem:[#allocation2 + $0x60] sm:$0xff] 0.0
      %1247 = vst [vmem:[#allocation2 + $0x68] sm:$0xf] 0.0
      %1248 = vst [vmem:[#allocation2 + $0x70] sm:$0xff] 0.0
      %1249 = vst [vmem:[#allocation2 + $0x78] sm:$0xf] 0.0
      %1250 = vst [vmem:[#allocation2 + $0x2] sm:$0xff] %v1226
      %1251 = vst [vmem:[#allocation2 + $0x12] sm:$0xff] %v1227
      %1252 = vst [vmem:[#allocation2 + $0x22] sm:$0xff] %v1228
      %1253 = vst [vmem:[#allocation2 + $0x32] sm:$0xff] %v1229
      %1254 = vst [vmem:[#allocation2 + $0x42] sm:$0xff] %v1230
      %1255 = vst [vmem:[#allocation2 + $0x52] sm:$0xff] %v1231
      %1256 = vst [vmem:[#allocation2 + $0x62] sm:$0xff] %v1232
      %1257 = vst [vmem:[#allocation2 + $0x72] sm:$0xff] %v1233
      %v1258 = vld [vmem:[#allocation2] sm:$0xff]
      %v1259 = vld [vmem:[#allocation2 + $0x10] sm:$0xff]
      %v1260 = vld [vmem:[#allocation2 + $0x20] sm:$0xff]
      %v1261 = vld [vmem:[#allocation2 + $0x30] sm:$0xff]
      %v1262 = vld [vmem:[#allocation2 + $0x40] sm:$0xff]
      %v1263 = vld [vmem:[#allocation2 + $0x50] sm:$0xff]
      %v1264 = vld [vmem:[#allocation2 + $0x60] sm:$0xff]
      %v1265 = vld [vmem:[#allocation2 + $0x70] sm:$0xff]
      %v1266 = vld [vmem:[%s4] sm:$0xff]
      %v1267 = vld [vmem:[%s4 + $0x8] sm:$0xff]
      %v1268 = vld [vmem:[%s4 + $0x10] sm:$0xff]
      %v1269 = vld [vmem:[%s4 + $0x18] sm:$0xff]
      %v1270 = vld [vmem:[%s4 + $0x20] sm:$0xff]
      %v1271 = vld [vmem:[%s4 + $0x28] sm:$0xff]
      %v1272 = vld [vmem:[%s4 + $0x30] sm:$0xff]
      %v1273 = vld [vmem:[%s4 + $0x38] sm:$0xff]
      %v1274 = vld [vmem:[%s4 + $0x40] sm:$0xff]
      %v1275 = vld [vmem:[%s4 + $0x48] sm:$0xff]
      %v1276 = vld [vmem:[%s4 + $0x50] sm:$0xff]
      %v1277 = vld [vmem:[%s4 + $0x58] sm:$0xff]
      %v1278 = vld [vmem:[%s4 + $0x60] sm:$0xff]
      %v1279 = vld [vmem:[%s4 + $0x68] sm:$0xff]
      %v1280 = vld [vmem:[%s4 + $0x70] sm:$0xff]
      %v1281 = vld [vmem:[%s4 + $0x78] sm:$0xff]
      %1282 = vmatprep.subr.mxu0 0.0
      %1283 = vmatpush1.msra.mxu0 %v1266
      %1284 = vmatprep.subr.mxu0 0.0
      %1285 = vmatpush1.msra.mxu0 %v1267
      %1286 = vmatprep.subr.mxu0 0.0
      %1287 = vmatpush1.msra.mxu0 %v1268
      %1288 = vmatprep.subr.mxu0 0.0
      %1289 = vmatpush1.msra.mxu0 %v1269
      %1290 = vmatprep.subr.mxu0 0.0
      %1291 = vmatpush1.msra.mxu0 %v1270
      %1292 = vmatprep.subr.mxu0 0.0
      %1293 = vmatpush1.msra.mxu0 %v1271
      %1294 = vmatprep.subr.mxu0 0.0
      %1295 = vmatpush1.msra.mxu0 %v1272
      %1296 = vmatprep.subr.mxu0 0.0
      %1297 = vmatpush1.msra.mxu0 %v1273
      %1298 = vmatprep.subr.mxu0 0.0
      %1299 = vmatpush1.msra.mxu0 %v1274
      %1300 = vmatprep.subr.mxu0 0.0
      %1301 = vmatpush1.msra.mxu0 %v1275
      %1302 = vmatprep.subr.mxu0 0.0
      %1303 = vmatpush1.msra.mxu0 %v1276
      %1304 = vmatprep.subr.mxu0 0.0
      %1305 = vmatpush1.msra.mxu0 %v1277
      %1306 = vmatprep.subr.mxu0 0.0
      %1307 = vmatpush1.msra.mxu0 %v1278
      %1308 = vmatprep.subr.mxu0 0.0
      %1309 = vmatpush1.msra.mxu0 %v1279
      %1310 = vmatprep.subr.mxu0 0.0
      %1311 = vmatpush1.msra.mxu0 %v1280
      %1312 = vmatprep.subr.mxu0 0.0
      %1313 = vmatpush1.msra.mxu0 %v1281
      %1314 = vmatprep.subr.mxu0 0.0
      %1315 = vmatpush1.msra.mxu0 0.0
      %1316 = vmatprep.subr.mxu0 0.0
      %1317 = vmatpush1.msra.mxu0 0.0
      %1318 = vmatprep.subr.mxu0 0.0
      %1319 = vmatpush1.msra.mxu0 0.0
      %1320 = vmatprep.subr.mxu0 0.0
      %1321 = vmatpush1.msra.mxu0 0.0
      %1322 = vmatprep.subr.mxu0 0.0
      %1323 = vmatpush1.msra.mxu0 0.0
      %1324 = vmatprep.subr.mxu0 0.0
      %1325 = vmatpush1.msra.mxu0 0.0
      %1326 = vmatprep.subr.mxu0 0.0
      %1327 = vmatpush1.msra.mxu0 0.0
      %1328 = vmatprep.subr.mxu0 0.0
      %1329 = vmatpush1.msra.mxu0 0.0
      %1330 = vmatprep.subr.mxu0 0.0
      %1331 = vmatpush1.msra.mxu0 0.0
      %1332 = vmatprep.subr.mxu0 0.0
      %1333 = vmatpush1.msra.mxu0 0.0
      %1334 = vmatprep.subr.mxu0 0.0
      %1335 = vmatpush1.msra.mxu0 0.0
      %1336 = vmatprep.subr.mxu0 0.0
      %1337 = vmatpush1.msra.mxu0 0.0
      %1338 = vmatprep.subr.mxu0 0.0
      %1339 = vmatpush1.msra.mxu0 0.0
      %1340 = vmatprep.subr.mxu0 0.0
      %1341 = vmatpush1.msra.mxu0 0.0
      %1342 = vmatprep.subr.mxu0 0.0
      %1343 = vmatpush1.msra.mxu0 0.0
      %1344 = vmatprep.subr.mxu0 0.0
      %1345 = vmatpush1.msra.mxu0 0.0
      %1346 = vmatprep.mubr.f32.mxu0 0.0
      %1347 = vmatmul.mubr.f32.gmra.mrb[0].mxu0 %v1258
      %v1348 = vpop.f32.mrb[0].mxu0
      %v1349 = vadd.f32 0.0, %v1348
      %v1350 = vpop.f32.mrb[0].mxu0
      %1351 = vmatprep.mubr.f32.mxu0 0.0
      %1352 = vmatmul.mubr.f32.gmra.mrb[0].mxu0 %v1259
      %v1353 = vpop.f32.mrb[0].mxu0
      %v1354 = vadd.f32 0.0, %v1353
      %v1355 = vpop.f32.mrb[0].mxu0
      %1356 = vmatprep.mubr.f32.mxu0 0.0
      %1357 = vmatmul.mubr.f32.gmra.mrb[0].mxu0 %v1260
      %v1358 = vpop.f32.mrb[0].mxu0
      %v1359 = vadd.f32 0.0, %v1358
      %v1360 = vpop.f32.mrb[0].mxu0
      %1361 = vmatprep.mubr.f32.mxu0 0.0
      %1362 = vmatmul.mubr.f32.gmra.mrb[0].mxu0 %v1261
      %v1363 = vpop.f32.mrb[0].mxu0
      %v1364 = vadd.f32 0.0, %v1363
      %v1365 = vpop.f32.mrb[0].mxu0
      %1366 = vmatprep.mubr.f32.mxu0 0.0
      %1367 = vmatmul.mubr.f32.gmra.mrb[0].mxu0 %v1262
      %v1368 = vpop.f32.mrb[0].mxu0
      %v1369 = vadd.f32 0.0, %v1368
      %v1370 = vpop.f32.mrb[0].mxu0
      %1371 = vmatprep.mubr.f32.mxu0 0.0
      %1372 = vmatmul.mubr.f32.gmra.mrb[0].mxu0 %v1263
      %v1373 = vpop.f32.mrb[0].mxu0
      %v1374 = vadd.f32 0.0, %v1373
      %v1375 = vpop.f32.mrb[0].mxu0
      %1376 = vmatprep.mubr.f32.mxu0 0.0
      %1377 = vmatmul.mubr.f32.gmra.mrb[0].mxu0 %v1264
      %v1378 = vpop.f32.mrb[0].mxu0
      %v1379 = vadd.f32 0.0, %v1378
      %v1380 = vpop.f32.mrb[0].mxu0
      %1381 = vmatprep.mubr.f32.mxu0 0.0
      %1382 = vmatmul.mubr.f32.gmra.mrb[0].mxu0 %v1265
      %v1383 = vpop.f32.mrb[0].mxu0
      %v1384 = vadd.f32 0.0, %v1383
      %v1385 = vpop.f32.mrb[0].mxu0
      %1386 = vdwg.mxu0
      %v1387 = vadd.f32 %v1349, 0.0
      %v1388 = vadd.f32 %v1354, 0.0
      %v1389 = vadd.f32 %v1359, 0.0
      %v1390 = vadd.f32 %v1364, 0.0
      %v1391 = vadd.f32 %v1369, 0.0
      %v1392 = vadd.f32 %v1374, 0.0
      %v1393 = vadd.f32 %v1379, 0.0
      %v1394 = vadd.f32 %v1384, 0.0
      %s1395 = scalar_lea.vmem %s4, 128
      %v1396 = vld [vmem:[%s1395] sm:$0xff]
      %v1397 = vld [vmem:[%s1395 + $0x8] sm:$0xff]
      %v1398 = vld [vmem:[%s1395 + $0x10] sm:$0xff]
      %v1399 = vld [vmem:[%s1395 + $0x18] sm:$0xff]
      %v1400 = vld [vmem:[%s1395 + $0x20] sm:$0xff]
      %v1401 = vld [vmem:[%s1395 + $0x28] sm:$0xff]
      %v1402 = vld [vmem:[%s1395 + $0x30] sm:$0xff]
      %v1403 = vld [vmem:[%s1395 + $0x38] sm:$0xff]
      %v1404 = vld [vmem:[%s1395 + $0x40] sm:$0xff]
      %v1405 = vld [vmem:[%s1395 + $0x48] sm:$0xff]
      %v1406 = vld [vmem:[%s1395 + $0x50] sm:$0xff]
      %v1407 = vld [vmem:[%s1395 + $0x58] sm:$0xff]
      %v1408 = vld [vmem:[%s1395 + $0x60] sm:$0xff]
      %v1409 = vld [vmem:[%s1395 + $0x68] sm:$0xff]
      %v1410 = vld [vmem:[%s1395 + $0x70] sm:$0xff]
      %v1411 = vld [vmem:[%s1395 + $0x78] sm:$0xff]
      %1412 = vmatprep.subr.mxu0 0.0
      %1413 = vmatpush1.msra.mxu0 %v1396
      %1414 = vmatprep.subr.mxu0 0.0
      %1415 = vmatpush1.msra.mxu0 %v1397
      %1416 = vmatprep.subr.mxu0 0.0
      %1417 = vmatpush1.msra.mxu0 %v1398
      %1418 = vmatprep.subr.mxu0 0.0
      %1419 = vmatpush1.msra.mxu0 %v1399
      %1420 = vmatprep.subr.mxu0 0.0
      %1421 = vmatpush1.msra.mxu0 %v1400
      %1422 = vmatprep.subr.mxu0 0.0
      %1423 = vmatpush1.msra.mxu0 %v1401
      %1424 = vmatprep.subr.mxu0 0.0
      %1425 = vmatpush1.msra.mxu0 %v1402
      %1426 = vmatprep.subr.mxu0 0.0
      %1427 = vmatpush1.msra.mxu0 %v1403
      %1428 = vmatprep.subr.mxu0 0.0
      %1429 = vmatpush1.msra.mxu0 %v1404
      %1430 = vmatprep.subr.mxu0 0.0
      %1431 = vmatpush1.msra.mxu0 %v1405
      %1432 = vmatprep.subr.mxu0 0.0
      %1433 = vmatpush1.msra.mxu0 %v1406
      %1434 = vmatprep.subr.mxu0 0.0
      %1435 = vmatpush1.msra.mxu0 %v1407
      %1436 = vmatprep.subr.mxu0 0.0
      %1437 = vmatpush1.msra.mxu0 %v1408
      %1438 = vmatprep.subr.mxu0 0.0
      %1439 = vmatpush1.msra.mxu0 %v1409
      %1440 = vmatprep.subr.mxu0 0.0
      %1441 = vmatpush1.msra.mxu0 %v1410
      %1442 = vmatprep.subr.mxu0 0.0
      %1443 = vmatpush1.msra.mxu0 %v1411
      %1444 = vmatprep.subr.mxu0 0.0
      %1445 = vmatpush1.msra.mxu0 0.0
      %1446 = vmatprep.subr.mxu0 0.0
      %1447 = vmatpush1.msra.mxu0 0.0
      %1448 = vmatprep.subr.mxu0 0.0
      %1449 = vmatpush1.msra.mxu0 0.0
      %1450 = vmatprep.subr.mxu0 0.0
      %1451 = vmatpush1.msra.mxu0 0.0
      %1452 = vmatprep.subr.mxu0 0.0
      %1453 = vmatpush1.msra.mxu0 0.0
      %1454 = vmatprep.subr.mxu0 0.0
      %1455 = vmatpush1.msra.mxu0 0.0
      %1456 = vmatprep.subr.mxu0 0.0
      %1457 = vmatpush1.msra.mxu0 0.0
      %1458 = vmatprep.subr.mxu0 0.0
      %1459 = vmatpush1.msra.mxu0 0.0
      %1460 = vmatprep.subr.mxu0 0.0
      %1461 = vmatpush1.msra.mxu0 0.0
      %1462 = vmatprep.subr.mxu0 0.0
      %1463 = vmatpush1.msra.mxu0 0.0
      %1464 = vmatprep.subr.mxu0 0.0
      %1465 = vmatpush1.msra.mxu0 0.0
      %1466 = vmatprep.subr.mxu0 0.0
      %1467 = vmatpush1.msra.mxu0 0.0
      %1468 = vmatprep.subr.mxu0 0.0
      %1469 = vmatpush1.msra.mxu0 0.0
      %1470 = vmatprep.subr.mxu0 0.0
      %1471 = vmatpush1.msra.mxu0 0.0
      %1472 = vmatprep.subr.mxu0 0.0
      %1473 = vmatpush1.msra.mxu0 0.0
      %1474 = vmatprep.subr.mxu0 0.0
      %1475 = vmatpush1.msra.mxu0 0.0
      %1476 = vmatprep.mubr.f32.mxu0 0.0
      %1477 = vmatmul.mubr.f32.gmra.mrb[0].mxu0 %v1226
      %v1478 = vpop.f32.mrb[0].mxu0
      %v1479 = vadd.f32 0.0, %v1478
      %v1480 = vpop.f32.mrb[0].mxu0
      %1481 = vmatprep.mubr.f32.mxu0 0.0
      %1482 = vmatmul.mubr.f32.gmra.mrb[0].mxu0 %v1227
      %v1483 = vpop.f32.mrb[0].mxu0
      %v1484 = vadd.f32 0.0, %v1483
      %v1485 = vpop.f32.mrb[0].mxu0
      %1486 = vmatprep.mubr.f32.mxu0 0.0
      %1487 = vmatmul.mubr.f32.gmra.mrb[0].mxu0 %v1228
      %v1488 = vpop.f32.mrb[0].mxu0
      %v1489 = vadd.f32 0.0, %v1488
      %v1490 = vpop.f32.mrb[0].mxu0
      %1491 = vmatprep.mubr.f32.mxu0 0.0
      %1492 = vmatmul.mubr.f32.gmra.mrb[0].mxu0 %v1229
      %v1493 = vpop.f32.mrb[0].mxu0
      %v1494 = vadd.f32 0.0, %v1493
      %v1495 = vpop.f32.mrb[0].mxu0
      %1496 = vmatprep.mubr.f32.mxu0 0.0
      %1497 = vmatmul.mubr.f32.gmra.mrb[0].mxu0 %v1230
      %v1498 = vpop.f32.mrb[0].mxu0
      %v1499 = vadd.f32 0.0, %v1498
      %v1500 = vpop.f32.mrb[0].mxu0
      %1501 = vmatprep.mubr.f32.mxu0 0.0
      %1502 = vmatmul.mubr.f32.gmra.mrb[0].mxu0 %v1231
      %v1503 = vpop.f32.mrb[0].mxu0
      %v1504 = vadd.f32 0.0, %v1503
      %v1505 = vpop.f32.mrb[0].mxu0
      %1506 = vmatprep.mubr.f32.mxu0 0.0
      %1507 = vmatmul.mubr.f32.gmra.mrb[0].mxu0 %v1232
      %v1508 = vpop.f32.mrb[0].mxu0
      %v1509 = vadd.f32 0.0, %v1508
      %v1510 = vpop.f32.mrb[0].mxu0
      %1511 = vmatprep.mubr.f32.mxu0 0.0
      %1512 = vmatmul.mubr.f32.gmra.mrb[0].mxu0 %v1233
      %v1513 = vpop.f32.mrb[0].mxu0
      %v1514 = vadd.f32 0.0, %v1513
      %v1515 = vpop.f32.mrb[0].mxu0
      %1516 = vdwg.mxu0
      %v1517 = vadd.f32 %v1387, %v1479
      %v1518 = vadd.f32 %v1388, %v1484
      %v1519 = vadd.f32 %v1389, %v1489
      %v1520 = vadd.f32 %v1390, %v1494
      %v1521 = vadd.f32 %v1391, %v1499
      %v1522 = vadd.f32 %v1392, %v1504
      %v1523 = vadd.f32 %v1393, %v1509
      %v1524 = vadd.f32 %v1394, %v1514
      %v1525 = vld [vmem:[#allocation2 + $0x4] sm:$0xff]
      %v1526 = vld [vmem:[#allocation2 + $0x14] sm:$0xff]
      %v1527 = vld [vmem:[#allocation2 + $0x24] sm:$0xff]
      %v1528 = vld [vmem:[#allocation2 + $0x34] sm:$0xff]
      %v1529 = vld [vmem:[#allocation2 + $0x44] sm:$0xff]
      %v1530 = vld [vmem:[#allocation2 + $0x54] sm:$0xff]
      %v1531 = vld [vmem:[#allocation2 + $0x64] sm:$0xff]
      %v1532 = vld [vmem:[#allocation2 + $0x74] sm:$0xff]
      %s1533 = scalar_lea.vmem %s4, 256
      %v1534 = vld [vmem:[%s1533] sm:$0xff]
      %v1535 = vld [vmem:[%s1533 + $0x8] sm:$0xff]
      %v1536 = vld [vmem:[%s1533 + $0x10] sm:$0xff]
      %v1537 = vld [vmem:[%s1533 + $0x18] sm:$0xff]
      %v1538 = vld [vmem:[%s1533 + $0x20] sm:$0xff]
      %v1539 = vld [vmem:[%s1533 + $0x28] sm:$0xff]
      %v1540 = vld [vmem:[%s1533 + $0x30] sm:$0xff]
      %v1541 = vld [vmem:[%s1533 + $0x38] sm:$0xff]
      %v1542 = vld [vmem:[%s1533 + $0x40] sm:$0xff]
      %v1543 = vld [vmem:[%s1533 + $0x48] sm:$0xff]
      %v1544 = vld [vmem:[%s1533 + $0x50] sm:$0xff]
      %v1545 = vld [vmem:[%s1533 + $0x58] sm:$0xff]
      %v1546 = vld [vmem:[%s1533 + $0x60] sm:$0xff]
      %v1547 = vld [vmem:[%s1533 + $0x68] sm:$0xff]
      %v1548 = vld [vmem:[%s1533 + $0x70] sm:$0xff]
      %v1549 = vld [vmem:[%s1533 + $0x78] sm:$0xff]
      %1550 = vmatprep.subr.mxu0 0.0
      %1551 = vmatpush1.msra.mxu0 %v1534
      %1552 = vmatprep.subr.mxu0 0.0
      %1553 = vmatpush1.msra.mxu0 %v1535
      %1554 = vmatprep.subr.mxu0 0.0
      %1555 = vmatpush1.msra.mxu0 %v1536
      %1556 = vmatprep.subr.mxu0 0.0
      %1557 = vmatpush1.msra.mxu0 %v1537
      %1558 = vmatprep.subr.mxu0 0.0
      %1559 = vmatpush1.msra.mxu0 %v1538
      %1560 = vmatprep.subr.mxu0 0.0
      %1561 = vmatpush1.msra.mxu0 %v1539
      %1562 = vmatprep.subr.mxu0 0.0
      %1563 = vmatpush1.msra.mxu0 %v1540
      %1564 = vmatprep.subr.mxu0 0.0
      %1565 = vmatpush1.msra.mxu0 %v1541
      %1566 = vmatprep.subr.mxu0 0.0
      %1567 = vmatpush1.msra.mxu0 %v1542
      %1568 = vmatprep.subr.mxu0 0.0
      %1569 = vmatpush1.msra.mxu0 %v1543
      %1570 = vmatprep.subr.mxu0 0.0
      %1571 = vmatpush1.msra.mxu0 %v1544
      %1572 = vmatprep.subr.mxu0 0.0
      %1573 = vmatpush1.msra.mxu0 %v1545
      %1574 = vmatprep.subr.mxu0 0.0
      %1575 = vmatpush1.msra.mxu0 %v1546
      %1576 = vmatprep.subr.mxu0 0.0
      %1577 = vmatpush1.msra.mxu0 %v1547
      %1578 = vmatprep.subr.mxu0 0.0
      %1579 = vmatpush1.msra.mxu0 %v1548
      %1580 = vmatprep.subr.mxu0 0.0
      %1581 = vmatpush1.msra.mxu0 %v1549
      %1582 = vmatprep.subr.mxu0 0.0
      %1583 = vmatpush1.msra.mxu0 0.0
      %1584 = vmatprep.subr.mxu0 0.0
      %1585 = vmatpush1.msra.mxu0 0.0
      %1586 = vmatprep.subr.mxu0 0.0
      %1587 = vmatpush1.msra.mxu0 0.0
      %1588 = vmatprep.subr.mxu0 0.0
      %1589 = vmatpush1.msra.mxu0 0.0
      %1590 = vmatprep.subr.mxu0 0.0
      %1591 = vmatpush1.msra.mxu0 0.0
      %1592 = vmatprep.subr.mxu0 0.0
      %1593 = vmatpush1.msra.mxu0 0.0
      %1594 = vmatprep.subr.mxu0 0.0
      %1595 = vmatpush1.msra.mxu0 0.0
      %1596 = vmatprep.subr.mxu0 0.0
      %1597 = vmatpush1.msra.mxu0 0.0
      %1598 = vmatprep.subr.mxu0 0.0
      %1599 = vmatpush1.msra.mxu0 0.0
      %1600 = vmatprep.subr.mxu0 0.0
      %1601 = vmatpush1.msra.mxu0 0.0
      %1602 = vmatprep.subr.mxu0 0.0
      %1603 = vmatpush1.msra.mxu0 0.0
      %1604 = vmatprep.subr.mxu0 0.0
      %1605 = vmatpush1.msra.mxu0 0.0
      %1606 = vmatprep.subr.mxu0 0.0
      %1607 = vmatpush1.msra.mxu0 0.0
      %1608 = vmatprep.subr.mxu0 0.0
      %1609 = vmatpush1.msra.mxu0 0.0
      %1610 = vmatprep.subr.mxu0 0.0
      %1611 = vmatpush1.msra.mxu0 0.0
      %1612 = vmatprep.subr.mxu0 0.0
      %1613 = vmatpush1.msra.mxu0 0.0
      %1614 = vmatprep.mubr.f32.mxu0 0.0
      %1615 = vmatmul.mubr.f32.gmra.mrb[0].mxu0 %v1525
      %v1616 = vpop.f32.mrb[0].mxu0
      %v1617 = vadd.f32 0.0, %v1616
      %v1618 = vpop.f32.mrb[0].mxu0
      %1619 = vmatprep.mubr.f32.mxu0 0.0
      %1620 = vmatmul.mubr.f32.gmra.mrb[0].mxu0 %v1526
      %v1621 = vpop.f32.mrb[0].mxu0
      %v1622 = vadd.f32 0.0, %v1621
      %v1623 = vpop.f32.mrb[0].mxu0
      %1624 = vmatprep.mubr.f32.mxu0 0.0
      %1625 = vmatmul.mubr.f32.gmra.mrb[0].mxu0 %v1527
      %v1626 = vpop.f32.mrb[0].mxu0
      %v1627 = vadd.f32 0.0, %v1626
      %v1628 = vpop.f32.mrb[0].mxu0
      %1629 = vmatprep.mubr.f32.mxu0 0.0
      %1630 = vmatmul.mubr.f32.gmra.mrb[0].mxu0 %v1528
      %v1631 = vpop.f32.mrb[0].mxu0
      %v1632 = vadd.f32 0.0, %v1631
      %v1633 = vpop.f32.mrb[0].mxu0
      %1634 = vmatprep.mubr.f32.mxu0 0.0
      %1635 = vmatmul.mubr.f32.gmra.mrb[0].mxu0 %v1529
      %v1636 = vpop.f32.mrb[0].mxu0
      %v1637 = vadd.f32 0.0, %v1636
      %v1638 = vpop.f32.mrb[0].mxu0
      %1639 = vmatprep.mubr.f32.mxu0 0.0
      %1640 = vmatmul.mubr.f32.gmra.mrb[0].mxu0 %v1530
      %v1641 = vpop.f32.mrb[0].mxu0
      %v1642 = vadd.f32 0.0, %v1641
      %v1643 = vpop.f32.mrb[0].mxu0
      %1644 = vmatprep.mubr.f32.mxu0 0.0
      %1645 = vmatmul.mubr.f32.gmra.mrb[0].mxu0 %v1531
      %v1646 = vpop.f32.mrb[0].mxu0
      %v1647 = vadd.f32 0.0, %v1646
      %v1648 = vpop.f32.mrb[0].mxu0
      %1649 = vmatprep.mubr.f32.mxu0 0.0
      %1650 = vmatmul.mubr.f32.gmra.mrb[0].mxu0 %v1532
      %v1651 = vpop.f32.mrb[0].mxu0
      %v1652 = vadd.f32 0.0, %v1651
      %v1653 = vpop.f32.mrb[0].mxu0
      %1654 = vdwg.mxu0
      %v1655 = vadd.f32 %v1517, %v1617
      %v1656 = vadd.f32 %v1518, %v1622
      %v1657 = vadd.f32 %v1519, %v1627
      %v1658 = vadd.f32 %v1520, %v1632
      %v1659 = vadd.f32 %v1521, %v1637
      %v1660 = vadd.f32 %v1522, %v1642
      %v1661 = vadd.f32 %v1523, %v1647
      %v1662 = vadd.f32 %v1524, %v1652
      %v1663 = vld [vmem:[%s5] sm:$0x3f]
      %v1664 = vld [vmem:[%s6] sm:$0xff]
      %v1665 = vld [vmem:[%s6 + $0x8] sm:$0xff]
      %v1666 = vld [vmem:[%s6 + $0x10] sm:$0xff]
      %v1667 = vld [vmem:[%s6 + $0x18] sm:$0xff]
      %v1668 = vld [vmem:[%s6 + $0x20] sm:$0xff]
      %v1669 = vld [vmem:[%s6 + $0x28] sm:$0xff]
      %v1670 = vld [vmem:[%s6 + $0x30] sm:$0xff]
      %v1671 = vld [vmem:[%s6 + $0x38] sm:$0xff]
      %v1672 = vld [vmem:[%s6 + $0x40] sm:$0xff]
      %v1673 = vld [vmem:[%s6 + $0x48] sm:$0xff]
      %v1674 = vld [vmem:[%s6 + $0x50] sm:$0xff]
      %v1675 = vld [vmem:[%s6 + $0x58] sm:$0xff]
      %v1676 = vld [vmem:[%s6 + $0x60] sm:$0xff]
      %v1677 = vld [vmem:[%s6 + $0x68] sm:$0xff]
      %v1678 = vld [vmem:[%s6 + $0x70] sm:$0xff]
      %v1679 = vld [vmem:[%s6 + $0x78] sm:$0xff]
      %v1680 = vlaneseq
      %v1681 = vshrl.u32 %v1680, 7
      %v1682 = vsub.s32 0, %v1681
      %v1683 = vrot.slane %v1663, %v1682
      %v1684 = vadd.f32 %v1655, %v1683
      %v1685 = vadd.f32 %v1656, %v1683
      %v1686 = vadd.f32 %v1657, %v1683
      %v1687 = vadd.f32 %v1658, %v1683
      %v1688 = vadd.f32 %v1659, %v1683
      %v1689 = vadd.f32 %v1660, %v1683
      %v1690 = vadd.f32 %v1661, %v1683
      %v1691 = vadd.f32 %v1662, %v1683
      %v1692 = vmul.f32 %v1684, 0.5
      %v1693 = vmul.f32 %v1685, 0.5
      %v1694 = vmul.f32 %v1686, 0.5
      %v1695 = vmul.f32 %v1687, 0.5
      %v1696 = vmul.f32 %v1688, 0.5
      %v1697 = vmul.f32 %v1689, 0.5
      %v1698 = vmul.f32 %v1690, 0.5
      %v1699 = vmul.f32 %v1691, 0.5
      %v1700 = vmul.f32 %v1684, %v1684
      %v1701 = vmul.f32 %v1685, %v1685
      %v1702 = vmul.f32 %v1686, %v1686
      %v1703 = vmul.f32 %v1687, %v1687
      %v1704 = vmul.f32 %v1688, %v1688
      %v1705 = vmul.f32 %v1689, %v1689
      %v1706 = vmul.f32 %v1690, %v1690
      %v1707 = vmul.f32 %v1691, %v1691
      %v1708 = vmul.f32 %v1700, %v1684
      %v1709 = vmul.f32 %v1701, %v1685
      %v1710 = vmul.f32 %v1702, %v1686
      %v1711 = vmul.f32 %v1703, %v1687
      %v1712 = vmul.f32 %v1704, %v1688
      %v1713 = vmul.f32 %v1705, %v1689
      %v1714 = vmul.f32 %v1706, %v1690
      %v1715 = vmul.f32 %v1707, %v1691
      %v1716 = vmul.f32 %v1708, 0.044715
      %v1717 = vmul.f32 %v1709, 0.044715
      %v1718 = vmul.f32 %v1710, 0.044715
      %v1719 = vmul.f32 %v1711, 0.044715
      %v1720 = vmul.f32 %v1712, 0.044715
      %v1721 = vmul.f32 %v1713, 0.044715
      %v1722 = vmul.f32 %v1714, 0.044715
      %v1723 = vmul.f32 %v1715, 0.044715
      %v1724 = vadd.f32 %v1684, %v1716
      %v1725 = vadd.f32 %v1685, %v1717
      %v1726 = vadd.f32 %v1686, %v1718
      %v1727 = vadd.f32 %v1687, %v1719
      %v1728 = vadd.f32 %v1688, %v1720
      %v1729 = vadd.f32 %v1689, %v1721
      %v1730 = vadd.f32 %v1690, %v1722
      %v1731 = vadd.f32 %v1691, %v1723
      %v1732 = vmul.f32 %v1724, 0.7978846
      %v1733 = vmul.f32 %v1725, 0.7978846
      %v1734 = vmul.f32 %v1726, 0.7978846
      %v1735 = vmul.f32 %v1727, 0.7978846
      %v1736 = vmul.f32 %v1728, 0.7978846
      %v1737 = vmul.f32 %v1729, 0.7978846
      %v1738 = vmul.f32 %v1730, 0.7978846
      %v1739 = vmul.f32 %v1731, 0.7978846
      %v1740 = vtanh.pop %v1732
      %v1741 = vtanh.pop %v1733
      %v1742 = vtanh.pop %v1734
      %v1743 = vtanh.pop %v1735
      %v1744 = vtanh.pop %v1736
      %v1745 = vtanh.pop %v1737
      %v1746 = vtanh.pop %v1738
      %v1747 = vtanh.pop %v1739
      %v1748 = vadd.f32 %v1740, 1.0
      %v1749 = vadd.f32 %v1741, 1.0
      %v1750 = vadd.f32 %v1742, 1.0
      %v1751 = vadd.f32 %v1743, 1.0
      %v1752 = vadd.f32 %v1744, 1.0
      %v1753 = vadd.f32 %v1745, 1.0
      %v1754 = vadd.f32 %v1746, 1.0
      %v1755 = vadd.f32 %v1747, 1.0
      %v1756 = vmul.f32 %v1692, %v1748
      %v1757 = vmul.f32 %v1693, %v1749
      %v1758 = vmul.f32 %v1694, %v1750
      %v1759 = vmul.f32 %v1695, %v1751
      %v1760 = vmul.f32 %v1696, %v1752
      %v1761 = vmul.f32 %v1697, %v1753
      %v1762 = vmul.f32 %v1698, %v1754
      %v1763 = vmul.f32 %v1699, %v1755
      %v1764 = vlaneseq
      %v1765 = vshrl.u32 %v1764, 7
      %v1766 = vsub.s32 1, %v1765
      %v1767 = vrot.slane %v1663, %v1766
      %v1768 = vmul.f32 %v1756, %v1767
      %v1769 = vmul.f32 %v1757, %v1767
      %v1770 = vmul.f32 %v1758, %v1767
      %v1771 = vmul.f32 %v1759, %v1767
      %v1772 = vmul.f32 %v1760, %v1767
      %v1773 = vmul.f32 %v1761, %v1767
      %v1774 = vmul.f32 %v1762, %v1767
      %v1775 = vmul.f32 %v1763, %v1767
      %v1776 = vlaneseq
      %v1777 = vshrl.u32 %v1776, 7
      %v1778 = vsub.s32 2, %v1777
      %v1779 = vrot.slane %v1663, %v1778
      %v1780 = vadd.f32 %v1768, %v1779
      %v1781 = vadd.f32 %v1769, %v1779
      %v1782 = vadd.f32 %v1770, %v1779
      %v1783 = vadd.f32 %v1771, %v1779
      %v1784 = vadd.f32 %v1772, %v1779
      %v1785 = vadd.f32 %v1773, %v1779
      %v1786 = vadd.f32 %v1774, %v1779
      %v1787 = vadd.f32 %v1775, %v1779
      %v1788 = vadd.f32 %v1780, %v1226
      %v1789 = vadd.f32 %v1781, %v1227
      %v1790 = vadd.f32 %v1782, %v1228
      %v1791 = vadd.f32 %v1783, %v1229
      %v1792 = vadd.f32 %v1784, %v1230
      %v1793 = vadd.f32 %v1785, %v1231
      %v1794 = vadd.f32 %v1786, %v1232
      %v1795 = vadd.f32 %v1787, %v1233
      %1796 = vmatprep.subr.mxu0 0.0
      %1797 = vmatpush1.msra.mxu0 %v1664
      %1798 = vmatprep.subr.mxu0 0.0
      %1799 = vmatpush1.msra.mxu0 %v1665
      %1800 = vmatprep.subr.mxu0 0.0
      %1801 = vmatpush1.msra.mxu0 %v1666
      %1802 = vmatprep.subr.mxu0 0.0
      %1803 = vmatpush1.msra.mxu0 %v1667
      %1804 = vmatprep.subr.mxu0 0.0
      %1805 = vmatpush1.msra.mxu0 %v1668
      %1806 = vmatprep.subr.mxu0 0.0
      %1807 = vmatpush1.msra.mxu0 %v1669
      %1808 = vmatprep.subr.mxu0 0.0
      %1809 = vmatpush1.msra.mxu0 %v1670
      %1810 = vmatprep.subr.mxu0 0.0
      %1811 = vmatpush1.msra.mxu0 %v1671
      %1812 = vmatprep.subr.mxu0 0.0
      %1813 = vmatpush1.msra.mxu0 %v1672
      %1814 = vmatprep.subr.mxu0 0.0
      %1815 = vmatpush1.msra.mxu0 %v1673
      %1816 = vmatprep.subr.mxu0 0.0
      %1817 = vmatpush1.msra.mxu0 %v1674
      %1818 = vmatprep.subr.mxu0 0.0
      %1819 = vmatpush1.msra.mxu0 %v1675
      %1820 = vmatprep.subr.mxu0 0.0
      %1821 = vmatpush1.msra.mxu0 %v1676
      %1822 = vmatprep.subr.mxu0 0.0
      %1823 = vmatpush1.msra.mxu0 %v1677
      %1824 = vmatprep.subr.mxu0 0.0
      %1825 = vmatpush1.msra.mxu0 %v1678
      %1826 = vmatprep.subr.mxu0 0.0
      %1827 = vmatpush1.msra.mxu0 %v1679
      %1828 = vmatprep.subr.mxu0 0.0
      %1829 = vmatpush1.msra.mxu0 0.0
      %1830 = vmatprep.subr.mxu0 0.0
      %1831 = vmatpush1.msra.mxu0 0.0
      %1832 = vmatprep.subr.mxu0 0.0
      %1833 = vmatpush1.msra.mxu0 0.0
      %1834 = vmatprep.subr.mxu0 0.0
      %1835 = vmatpush1.msra.mxu0 0.0
      %1836 = vmatprep.subr.mxu0 0.0
      %1837 = vmatpush1.msra.mxu0 0.0
      %1838 = vmatprep.subr.mxu0 0.0
      %1839 = vmatpush1.msra.mxu0 0.0
      %1840 = vmatprep.subr.mxu0 0.0
      %1841 = vmatpush1.msra.mxu0 0.0
      %1842 = vmatprep.subr.mxu0 0.0
      %1843 = vmatpush1.msra.mxu0 0.0
      %1844 = vmatprep.subr.mxu0 0.0
      %1845 = vmatpush1.msra.mxu0 0.0
      %1846 = vmatprep.subr.mxu0 0.0
      %1847 = vmatpush1.msra.mxu0 0.0
      %1848 = vmatprep.subr.mxu0 0.0
      %1849 = vmatpush1.msra.mxu0 0.0
      %1850 = vmatprep.subr.mxu0 0.0
      %1851 = vmatpush1.msra.mxu0 0.0
      %1852 = vmatprep.subr.mxu0 0.0
      %1853 = vmatpush1.msra.mxu0 0.0
      %1854 = vmatprep.subr.mxu0 0.0
      %1855 = vmatpush1.msra.mxu0 0.0
      %1856 = vmatprep.subr.mxu0 0.0
      %1857 = vmatpush1.msra.mxu0 0.0
      %1858 = vmatprep.subr.mxu0 0.0
      %1859 = vmatpush1.msra.mxu0 0.0
      %1860 = vmatprep.mubr.f32.mxu0 0.0
      %1861 = vmatmul.mubr.f32.gmra.mrb[0].mxu0 %v1788
      %v1862 = vpop.f32.mrb[0].mxu0
      %v1863 = vadd.f32 0.0, %v1862
      %v1864 = vpop.f32.mrb[0].mxu0
      %1865 = vmatprep.mubr.f32.mxu0 0.0
      %1866 = vmatmul.mubr.f32.gmra.mrb[0].mxu0 %v1789
      %v1867 = vpop.f32.mrb[0].mxu0
      %v1868 = vadd.f32 0.0, %v1867
      %v1869 = vpop.f32.mrb[0].mxu0
      %1870 = vmatprep.mubr.f32.mxu0 0.0
      %1871 = vmatmul.mubr.f32.gmra.mrb[0].mxu0 %v1790
      %v1872 = vpop.f32.mrb[0].mxu0
      %v1873 = vadd.f32 0.0, %v1872
      %v1874 = vpop.f32.mrb[0].mxu0
      %1875 = vmatprep.mubr.f32.mxu0 0.0
      %1876 = vmatmul.mubr.f32.gmra.mrb[0].mxu0 %v1791
      %v1877 = vpop.f32.mrb[0].mxu0
      %v1878 = vadd.f32 0.0, %v1877
      %v1879 = vpop.f32.mrb[0].mxu0
      %1880 = vmatprep.mubr.f32.mxu0 0.0
      %1881 = vmatmul.mubr.f32.gmra.mrb[0].mxu0 %v1792
      %v1882 = vpop.f32.mrb[0].mxu0
      %v1883 = vadd.f32 0.0, %v1882
      %v1884 = vpop.f32.mrb[0].mxu0
      %1885 = vmatprep.mubr.f32.mxu0 0.0
      %1886 = vmatmul.mubr.f32.gmra.mrb[0].mxu0 %v1793
      %v1887 = vpop.f32.mrb[0].mxu0
      %v1888 = vadd.f32 0.0, %v1887
      %v1889 = vpop.f32.mrb[0].mxu0
      %1890 = vmatprep.mubr.f32.mxu0 0.0
      %1891 = vmatmul.mubr.f32.gmra.mrb[0].mxu0 %v1794
      %v1892 = vpop.f32.mrb[0].mxu0
      %v1893 = vadd.f32 0.0, %v1892
      %v1894 = vpop.f32.mrb[0].mxu0
      %1895 = vmatprep.mubr.f32.mxu0 0.0
      %1896 = vmatmul.mubr.f32.gmra.mrb[0].mxu0 %v1795
      %v1897 = vpop.f32.mrb[0].mxu0
      %v1898 = vadd.f32 0.0, %v1897
      %v1899 = vpop.f32.mrb[0].mxu0
      %1900 = vdwg.mxu0
      %v1901 = vlaneseq
      %v1902 = vshrl.u32 %v1901, 7
      %v1903 = vsub.s32 3, %v1902
      %v1904 = vrot.slane %v1663, %v1903
      %v1905 = vadd.f32 %v1863, %v1904
      %v1906 = vadd.f32 %v1868, %v1904
      %v1907 = vadd.f32 %v1873, %v1904
      %v1908 = vadd.f32 %v1878, %v1904
      %v1909 = vadd.f32 %v1883, %v1904
      %v1910 = vadd.f32 %v1888, %v1904
      %v1911 = vadd.f32 %v1893, %v1904
      %v1912 = vadd.f32 %v1898, %v1904
      %v1913 = vmul.f32 %v1905, 0.5
      %v1914 = vmul.f32 %v1906, 0.5
      %v1915 = vmul.f32 %v1907, 0.5
      %v1916 = vmul.f32 %v1908, 0.5
      %v1917 = vmul.f32 %v1909, 0.5
      %v1918 = vmul.f32 %v1910, 0.5
      %v1919 = vmul.f32 %v1911, 0.5
      %v1920 = vmul.f32 %v1912, 0.5
      %v1921 = vmul.f32 %v1905, %v1905
      %v1922 = vmul.f32 %v1906, %v1906
      %v1923 = vmul.f32 %v1907, %v1907
      %v1924 = vmul.f32 %v1908, %v1908
      %v1925 = vmul.f32 %v1909, %v1909
      %v1926 = vmul.f32 %v1910, %v1910
      %v1927 = vmul.f32 %v1911, %v1911
      %v1928 = vmul.f32 %v1912, %v1912
      %v1929 = vmul.f32 %v1921, %v1905
      %v1930 = vmul.f32 %v1922, %v1906
      %v1931 = vmul.f32 %v1923, %v1907
      %v1932 = vmul.f32 %v1924, %v1908
      %v1933 = vmul.f32 %v1925, %v1909
      %v1934 = vmul.f32 %v1926, %v1910
      %v1935 = vmul.f32 %v1927, %v1911
      %v1936 = vmul.f32 %v1928, %v1912
      %v1937 = vmul.f32 %v1929, 0.044715
      %v1938 = vmul.f32 %v1930, 0.044715
      %v1939 = vmul.f32 %v1931, 0.044715
      %v1940 = vmul.f32 %v1932, 0.044715
      %v1941 = vmul.f32 %v1933, 0.044715
      %v1942 = vmul.f32 %v1934, 0.044715
      %v1943 = vmul.f32 %v1935, 0.044715
      %v1944 = vmul.f32 %v1936, 0.044715
      %v1945 = vadd.f32 %v1905, %v1937
      %v1946 = vadd.f32 %v1906, %v1938
      %v1947 = vadd.f32 %v1907, %v1939
      %v1948 = vadd.f32 %v1908, %v1940
      %v1949 = vadd.f32 %v1909, %v1941
      %v1950 = vadd.f32 %v1910, %v1942
      %v1951 = vadd.f32 %v1911, %v1943
      %v1952 = vadd.f32 %v1912, %v1944
      %v1953 = vmul.f32 %v1945, 0.7978846
      %v1954 = vmul.f32 %v1946, 0.7978846
      %v1955 = vmul.f32 %v1947, 0.7978846
      %v1956 = vmul.f32 %v1948, 0.7978846
      %v1957 = vmul.f32 %v1949, 0.7978846
      %v1958 = vmul.f32 %v1950, 0.7978846
      %v1959 = vmul.f32 %v1951, 0.7978846
      %v1960 = vmul.f32 %v1952, 0.7978846
      %v1961 = vtanh.pop %v1953
      %v1962 = vtanh.pop %v1954
      %v1963 = vtanh.pop %v1955
      %v1964 = vtanh.pop %v1956
      %v1965 = vtanh.pop %v1957
      %v1966 = vtanh.pop %v1958
      %v1967 = vtanh.pop %v1959
      %v1968 = vtanh.pop %v1960
      %v1969 = vadd.f32 %v1961, 1.0
      %v1970 = vadd.f32 %v1962, 1.0
      %v1971 = vadd.f32 %v1963, 1.0
      %v1972 = vadd.f32 %v1964, 1.0
      %v1973 = vadd.f32 %v1965, 1.0
      %v1974 = vadd.f32 %v1966, 1.0
      %v1975 = vadd.f32 %v1967, 1.0
      %v1976 = vadd.f32 %v1968, 1.0
      %v1977 = vmul.f32 %v1913, %v1969
      %v1978 = vmul.f32 %v1914, %v1970
      %v1979 = vmul.f32 %v1915, %v1971
      %v1980 = vmul.f32 %v1916, %v1972
      %v1981 = vmul.f32 %v1917, %v1973
      %v1982 = vmul.f32 %v1918, %v1974
      %v1983 = vmul.f32 %v1919, %v1975
      %v1984 = vmul.f32 %v1920, %v1976
      %v1985 = vlaneseq
      %v1986 = vshrl.u32 %v1985, 7
      %v1987 = vsub.s32 4, %v1986
      %v1988 = vrot.slane %v1663, %v1987
      %v1989 = vmul.f32 %v1977, %v1988
      %v1990 = vmul.f32 %v1978, %v1988
      %v1991 = vmul.f32 %v1979, %v1988
      %v1992 = vmul.f32 %v1980, %v1988
      %v1993 = vmul.f32 %v1981, %v1988
      %v1994 = vmul.f32 %v1982, %v1988
      %v1995 = vmul.f32 %v1983, %v1988
      %v1996 = vmul.f32 %v1984, %v1988
      %v1997 = vlaneseq
      %v1998 = vshrl.u32 %v1997, 7
      %v1999 = vsub.s32 5, %v1998
      %v2000 = vrot.slane %v1663, %v1999
      %v2001 = vadd.f32 %v1989, %v2000
      %v2002 = vadd.f32 %v1990, %v2000
      %v2003 = vadd.f32 %v1991, %v2000
      %v2004 = vadd.f32 %v1992, %v2000
      %v2005 = vadd.f32 %v1993, %v2000
      %v2006 = vadd.f32 %v1994, %v2000
      %v2007 = vadd.f32 %v1995, %v2000
      %v2008 = vadd.f32 %v1996, %v2000
      %2009 = vst [vmem:[#allocation2 + $0x2] sm:$0xff] %v2001
      %2010 = vst [vmem:[#allocation2 + $0x12] sm:$0xff] %v2002
      %2011 = vst [vmem:[#allocation2 + $0x22] sm:$0xff] %v2003
      %2012 = vst [vmem:[#allocation2 + $0x32] sm:$0xff] %v2004
      %2013 = vst [vmem:[#allocation2 + $0x42] sm:$0xff] %v2005
      %2014 = vst [vmem:[#allocation2 + $0x52] sm:$0xff] %v2006
      %2015 = vst [vmem:[#allocation2 + $0x62] sm:$0xff] %v2007
      %2016 = vst [vmem:[#allocation2 + $0x72] sm:$0xff] %v2008
      %v2017 = vld [vmem:[#allocation2] sm:$0xff]
      %v2018 = vld [vmem:[#allocation2 + $0x10] sm:$0xff]
      %v2019 = vld [vmem:[#allocation2 + $0x20] sm:$0xff]
      %v2020 = vld [vmem:[#allocation2 + $0x30] sm:$0xff]
      %v2021 = vld [vmem:[#allocation2 + $0x40] sm:$0xff]
      %v2022 = vld [vmem:[#allocation2 + $0x50] sm:$0xff]
      %v2023 = vld [vmem:[#allocation2 + $0x60] sm:$0xff]
      %v2024 = vld [vmem:[#allocation2 + $0x70] sm:$0xff]
      %s2025 = scalar_lea.vmem %s4, 384
      %v2026 = vld [vmem:[%s2025] sm:$0xff]
      %v2027 = vld [vmem:[%s2025 + $0x8] sm:$0xff]
      %v2028 = vld [vmem:[%s2025 + $0x10] sm:$0xff]
      %v2029 = vld [vmem:[%s2025 + $0x18] sm:$0xff]
      %v2030 = vld [vmem:[%s2025 + $0x20] sm:$0xff]
      %v2031 = vld [vmem:[%s2025 + $0x28] sm:$0xff]
      %v2032 = vld [vmem:[%s2025 + $0x30] sm:$0xff]
      %v2033 = vld [vmem:[%s2025 + $0x38] sm:$0xff]
      %v2034 = vld [vmem:[%s2025 + $0x40] sm:$0xff]
      %v2035 = vld [vmem:[%s2025 + $0x48] sm:$0xff]
      %v2036 = vld [vmem:[%s2025 + $0x50] sm:$0xff]
      %v2037 = vld [vmem:[%s2025 + $0x58] sm:$0xff]
      %v2038 = vld [vmem:[%s2025 + $0x60] sm:$0xff]
      %v2039 = vld [vmem:[%s2025 + $0x68] sm:$0xff]
      %v2040 = vld [vmem:[%s2025 + $0x70] sm:$0xff]
      %v2041 = vld [vmem:[%s2025 + $0x78] sm:$0xff]
      %2042 = vmatprep.subr.mxu0 0.0
      %2043 = vmatpush1.msra.mxu0 %v2026
      %2044 = vmatprep.subr.mxu0 0.0
      %2045 = vmatpush1.msra.mxu0 %v2027
      %2046 = vmatprep.subr.mxu0 0.0
      %2047 = vmatpush1.msra.mxu0 %v2028
      %2048 = vmatprep.subr.mxu0 0.0
      %2049 = vmatpush1.msra.mxu0 %v2029
      %2050 = vmatprep.subr.mxu0 0.0
      %2051 = vmatpush1.msra.mxu0 %v2030
      %2052 = vmatprep.subr.mxu0 0.0
      %2053 = vmatpush1.msra.mxu0 %v2031
      %2054 = vmatprep.subr.mxu0 0.0
      %2055 = vmatpush1.msra.mxu0 %v2032
      %2056 = vmatprep.subr.mxu0 0.0
      %2057 = vmatpush1.msra.mxu0 %v2033
      %2058 = vmatprep.subr.mxu0 0.0
      %2059 = vmatpush1.msra.mxu0 %v2034
      %2060 = vmatprep.subr.mxu0 0.0
      %2061 = vmatpush1.msra.mxu0 %v2035
      %2062 = vmatprep.subr.mxu0 0.0
      %2063 = vmatpush1.msra.mxu0 %v2036
      %2064 = vmatprep.subr.mxu0 0.0
      %2065 = vmatpush1.msra.mxu0 %v2037
      %2066 = vmatprep.subr.mxu0 0.0
      %2067 = vmatpush1.msra.mxu0 %v2038
      %2068 = vmatprep.subr.mxu0 0.0
      %2069 = vmatpush1.msra.mxu0 %v2039
      %2070 = vmatprep.subr.mxu0 0.0
      %2071 = vmatpush1.msra.mxu0 %v2040
      %2072 = vmatprep.subr.mxu0 0.0
      %2073 = vmatpush1.msra.mxu0 %v2041
      %2074 = vmatprep.subr.mxu0 0.0
      %2075 = vmatpush1.msra.mxu0 0.0
      %2076 = vmatprep.subr.mxu0 0.0
      %2077 = vmatpush1.msra.mxu0 0.0
      %2078 = vmatprep.subr.mxu0 0.0
      %2079 = vmatpush1.msra.mxu0 0.0
      %2080 = vmatprep.subr.mxu0 0.0
      %2081 = vmatpush1.msra.mxu0 0.0
      %2082 = vmatprep.subr.mxu0 0.0
      %2083 = vmatpush1.msra.mxu0 0.0
      %2084 = vmatprep.subr.mxu0 0.0
      %2085 = vmatpush1.msra.mxu0 0.0
      %2086 = vmatprep.subr.mxu0 0.0
      %2087 = vmatpush1.msra.mxu0 0.0
      %2088 = vmatprep.subr.mxu0 0.0
      %2089 = vmatpush1.msra.mxu0 0.0
      %2090 = vmatprep.subr.mxu0 0.0
      %2091 = vmatpush1.msra.mxu0 0.0
      %2092 = vmatprep.subr.mxu0 0.0
      %2093 = vmatpush1.msra.mxu0 0.0
      %2094 = vmatprep.subr.mxu0 0.0
      %2095 = vmatpush1.msra.mxu0 0.0
      %2096 = vmatprep.subr.mxu0 0.0
      %2097 = vmatpush1.msra.mxu0 0.0
      %2098 = vmatprep.subr.mxu0 0.0
      %2099 = vmatpush1.msra.mxu0 0.0
      %2100 = vmatprep.subr.mxu0 0.0
      %2101 = vmatpush1.msra.mxu0 0.0
      %2102 = vmatprep.subr.mxu0 0.0
      %2103 = vmatpush1.msra.mxu0 0.0
      %2104 = vmatprep.subr.mxu0 0.0
      %2105 = vmatpush1.msra.mxu0 0.0
      %2106 = vmatprep.mubr.f32.mxu0 0.0
      %2107 = vmatmul.mubr.f32.gmra.mrb[0].mxu0 %v2017
      %v2108 = vpop.f32.mrb[0].mxu0
      %v2109 = vadd.f32 0.0, %v2108
      %v2110 = vpop.f32.mrb[0].mxu0
      %2111 = vmatprep.mubr.f32.mxu0 0.0
      %2112 = vmatmul.mubr.f32.gmra.mrb[0].mxu0 %v2018
      %v2113 = vpop.f32.mrb[0].mxu0
      %v2114 = vadd.f32 0.0, %v2113
      %v2115 = vpop.f32.mrb[0].mxu0
      %2116 = vmatprep.mubr.f32.mxu0 0.0
      %2117 = vmatmul.mubr.f32.gmra.mrb[0].mxu0 %v2019
      %v2118 = vpop.f32.mrb[0].mxu0
      %v2119 = vadd.f32 0.0, %v2118
      %v2120 = vpop.f32.mrb[0].mxu0
      %2121 = vmatprep.mubr.f32.mxu0 0.0
      %2122 = vmatmul.mubr.f32.gmra.mrb[0].mxu0 %v2020
      %v2123 = vpop.f32.mrb[0].mxu0
      %v2124 = vadd.f32 0.0, %v2123
      %v2125 = vpop.f32.mrb[0].mxu0
      %2126 = vmatprep.mubr.f32.mxu0 0.0
      %2127 = vmatmul.mubr.f32.gmra.mrb[0].mxu0 %v2021
      %v2128 = vpop.f32.mrb[0].mxu0
      %v2129 = vadd.f32 0.0, %v2128
      %v2130 = vpop.f32.mrb[0].mxu0
      %2131 = vmatprep.mubr.f32.mxu0 0.0
      %2132 = vmatmul.mubr.f32.gmra.mrb[0].mxu0 %v2022
      %v2133 = vpop.f32.mrb[0].mxu0
      %v2134 = vadd.f32 0.0, %v2133
      %v2135 = vpop.f32.mrb[0].mxu0
      %2136 = vmatprep.mubr.f32.mxu0 0.0
      %2137 = vmatmul.mubr.f32.gmra.mrb[0].mxu0 %v2023
      %v2138 = vpop.f32.mrb[0].mxu0
      %v2139 = vadd.f32 0.0, %v2138
      %v2140 = vpop.f32.mrb[0].mxu0
      %2141 = vmatprep.mubr.f32.mxu0 0.0
      %2142 = vmatmul.mubr.f32.gmra.mrb[0].mxu0 %v2024
      %v2143 = vpop.f32.mrb[0].mxu0
      %v2144 = vadd.f32 0.0, %v2143
      %v2145 = vpop.f32.mrb[0].mxu0
      %2146 = vdwg.mxu0
      %v2147 = vadd.f32 %v2109, 0.0
      %v2148 = vadd.f32 %v2114, 0.0
      %v2149 = vadd.f32 %v2119, 0.0
      %v2150 = vadd.f32 %v2124, 0.0
      %v2151 = vadd.f32 %v2129, 0.0
      %v2152 = vadd.f32 %v2134, 0.0
      %v2153 = vadd.f32 %v2139, 0.0
      %v2154 = vadd.f32 %v2144, 0.0
      %s2155 = scalar_lea.vmem %s4, 512
      %v2156 = vld [vmem:[%s2155] sm:$0xff]
      %v2157 = vld [vmem:[%s2155 + $0x8] sm:$0xff]
      %v2158 = vld [vmem:[%s2155 + $0x10] sm:$0xff]
      %v2159 = vld [vmem:[%s2155 + $0x18] sm:$0xff]
      %v2160 = vld [vmem:[%s2155 + $0x20] sm:$0xff]
      %v2161 = vld [vmem:[%s2155 + $0x28] sm:$0xff]
      %v2162 = vld [vmem:[%s2155 + $0x30] sm:$0xff]
      %v2163 = vld [vmem:[%s2155 + $0x38] sm:$0xff]
      %v2164 = vld [vmem:[%s2155 + $0x40] sm:$0xff]
      %v2165 = vld [vmem:[%s2155 + $0x48] sm:$0xff]
      %v2166 = vld [vmem:[%s2155 + $0x50] sm:$0xff]
      %v2167 = vld [vmem:[%s2155 + $0x58] sm:$0xff]
      %v2168 = vld [vmem:[%s2155 + $0x60] sm:$0xff]
      %v2169 = vld [vmem:[%s2155 + $0x68] sm:$0xff]
      %v2170 = vld [vmem:[%s2155 + $0x70] sm:$0xff]
      %v2171 = vld [vmem:[%s2155 + $0x78] sm:$0xff]
      %2172 = vmatprep.subr.mxu0 0.0
      %2173 = vmatpush1.msra.mxu0 %v2156
      %2174 = vmatprep.subr.mxu0 0.0
      %2175 = vmatpush1.msra.mxu0 %v2157
      %2176 = vmatprep.subr.mxu0 0.0
      %2177 = vmatpush1.msra.mxu0 %v2158
      %2178 = vmatprep.subr.mxu0 0.0
      %2179 = vmatpush1.msra.mxu0 %v2159
      %2180 = vmatprep.subr.mxu0 0.0
      %2181 = vmatpush1.msra.mxu0 %v2160
      %2182 = vmatprep.subr.mxu0 0.0
      %2183 = vmatpush1.msra.mxu0 %v2161
      %2184 = vmatprep.subr.mxu0 0.0
      %2185 = vmatpush1.msra.mxu0 %v2162
      %2186 = vmatprep.subr.mxu0 0.0
      %2187 = vmatpush1.msra.mxu0 %v2163
      %2188 = vmatprep.subr.mxu0 0.0
      %2189 = vmatpush1.msra.mxu0 %v2164
      %2190 = vmatprep.subr.mxu0 0.0
      %2191 = vmatpush1.msra.mxu0 %v2165
      %2192 = vmatprep.subr.mxu0 0.0
      %2193 = vmatpush1.msra.mxu0 %v2166
      %2194 = vmatprep.subr.mxu0 0.0
      %2195 = vmatpush1.msra.mxu0 %v2167
      %2196 = vmatprep.subr.mxu0 0.0
      %2197 = vmatpush1.msra.mxu0 %v2168
      %2198 = vmatprep.subr.mxu0 0.0
      %2199 = vmatpush1.msra.mxu0 %v2169
      %2200 = vmatprep.subr.mxu0 0.0
      %2201 = vmatpush1.msra.mxu0 %v2170
      %2202 = vmatprep.subr.mxu0 0.0
      %2203 = vmatpush1.msra.mxu0 %v2171
      %2204 = vmatprep.subr.mxu0 0.0
      %2205 = vmatpush1.msra.mxu0 0.0
      %2206 = vmatprep.subr.mxu0 0.0
      %2207 = vmatpush1.msra.mxu0 0.0
      %2208 = vmatprep.subr.mxu0 0.0
      %2209 = vmatpush1.msra.mxu0 0.0
      %2210 = vmatprep.subr.mxu0 0.0
      %2211 = vmatpush1.msra.mxu0 0.0
      %2212 = vmatprep.subr.mxu0 0.0
      %2213 = vmatpush1.msra.mxu0 0.0
      %2214 = vmatprep.subr.mxu0 0.0
      %2215 = vmatpush1.msra.mxu0 0.0
      %2216 = vmatprep.subr.mxu0 0.0
      %2217 = vmatpush1.msra.mxu0 0.0
      %2218 = vmatprep.subr.mxu0 0.0
      %2219 = vmatpush1.msra.mxu0 0.0
      %2220 = vmatprep.subr.mxu0 0.0
      %2221 = vmatpush1.msra.mxu0 0.0
      %2222 = vmatprep.subr.mxu0 0.0
      %2223 = vmatpush1.msra.mxu0 0.0
      %2224 = vmatprep.subr.mxu0 0.0
      %2225 = vmatpush1.msra.mxu0 0.0
      %2226 = vmatprep.subr.mxu0 0.0
      %2227 = vmatpush1.msra.mxu0 0.0
      %2228 = vmatprep.subr.mxu0 0.0
      %2229 = vmatpush1.msra.mxu0 0.0
      %2230 = vmatprep.subr.mxu0 0.0
      %2231 = vmatpush1.msra.mxu0 0.0
      %2232 = vmatprep.subr.mxu0 0.0
      %2233 = vmatpush1.msra.mxu0 0.0
      %2234 = vmatprep.subr.mxu0 0.0
      %2235 = vmatpush1.msra.mxu0 0.0
      %2236 = vmatprep.mubr.f32.mxu0 0.0
      %2237 = vmatmul.mubr.f32.gmra.mrb[0].mxu0 %v2001
      %v2238 = vpop.f32.mrb[0].mxu0
      %v2239 = vadd.f32 0.0, %v2238
      %v2240 = vpop.f32.mrb[0].mxu0
      %2241 = vmatprep.mubr.f32.mxu0 0.0
      %2242 = vmatmul.mubr.f32.gmra.mrb[0].mxu0 %v2002
      %v2243 = vpop.f32.mrb[0].mxu0
      %v2244 = vadd.f32 0.0, %v2243
      %v2245 = vpop.f32.mrb[0].mxu0
      %2246 = vmatprep.mubr.f32.mxu0 0.0
      %2247 = vmatmul.mubr.f32.gmra.mrb[0].mxu0 %v2003
      %v2248 = vpop.f32.mrb[0].mxu0
      %v2249 = vadd.f32 0.0, %v2248
      %v2250 = vpop.f32.mrb[0].mxu0
      %2251 = vmatprep.mubr.f32.mxu0 0.0
      %2252 = vmatmul.mubr.f32.gmra.mrb[0].mxu0 %v2004
      %v2253 = vpop.f32.mrb[0].mxu0
      %v2254 = vadd.f32 0.0, %v2253
      %v2255 = vpop.f32.mrb[0].mxu0
      %2256 = vmatprep.mubr.f32.mxu0 0.0
      %2257 = vmatmul.mubr.f32.gmra.mrb[0].mxu0 %v2005
      %v2258 = vpop.f32.mrb[0].mxu0
      %v2259 = vadd.f32 0.0, %v2258
      %v2260 = vpop.f32.mrb[0].mxu0
      %2261 = vmatprep.mubr.f32.mxu0 0.0
      %2262 = vmatmul.mubr.f32.gmra.mrb[0].mxu0 %v2006
      %v2263 = vpop.f32.mrb[0].mxu0
      %v2264 = vadd.f32 0.0, %v2263
      %v2265 = vpop.f32.mrb[0].mxu0
      %2266 = vmatprep.mubr.f32.mxu0 0.0
      %2267 = vmatmul.mubr.f32.gmra.mrb[0].mxu0 %v2007
      %v2268 = vpop.f32.mrb[0].mxu0
      %v2269 = vadd.f32 0.0, %v2268
      %v2270 = vpop.f32.mrb[0].mxu0
      %2271 = vmatprep.mubr.f32.mxu0 0.0
      %2272 = vmatmul.mubr.f32.gmra.mrb[0].mxu0 %v2008
      %v2273 = vpop.f32.mrb[0].mxu0
      %v2274 = vadd.f32 0.0, %v2273
      %v2275 = vpop.f32.mrb[0].mxu0
      %2276 = vdwg.mxu0
      %v2277 = vadd.f32 %v2147, %v2239
      %v2278 = vadd.f32 %v2148, %v2244
      %v2279 = vadd.f32 %v2149, %v2249
      %v2280 = vadd.f32 %v2150, %v2254
      %v2281 = vadd.f32 %v2151, %v2259
      %v2282 = vadd.f32 %v2152, %v2264
      %v2283 = vadd.f32 %v2153, %v2269
      %v2284 = vadd.f32 %v2154, %v2274
      %v2285 = vld [vmem:[#allocation2 + $0x4] sm:$0xff]
      %v2286 = vld [vmem:[#allocation2 + $0x14] sm:$0xff]
      %v2287 = vld [vmem:[#allocation2 + $0x24] sm:$0xff]
      %v2288 = vld [vmem:[#allocation2 + $0x34] sm:$0xff]
      %v2289 = vld [vmem:[#allocation2 + $0x44] sm:$0xff]
      %v2290 = vld [vmem:[#allocation2 + $0x54] sm:$0xff]
      %v2291 = vld [vmem:[#allocation2 + $0x64] sm:$0xff]
      %v2292 = vld [vmem:[#allocation2 + $0x74] sm:$0xff]
      %s2293 = scalar_lea.vmem %s4, 640
      %v2294 = vld [vmem:[%s2293] sm:$0xff]
      %v2295 = vld [vmem:[%s2293 + $0x8] sm:$0xff]
      %v2296 = vld [vmem:[%s2293 + $0x10] sm:$0xff]
      %v2297 = vld [vmem:[%s2293 + $0x18] sm:$0xff]
      %v2298 = vld [vmem:[%s2293 + $0x20] sm:$0xff]
      %v2299 = vld [vmem:[%s2293 + $0x28] sm:$0xff]
      %v2300 = vld [vmem:[%s2293 + $0x30] sm:$0xff]
      %v2301 = vld [vmem:[%s2293 + $0x38] sm:$0xff]
      %v2302 = vld [vmem:[%s2293 + $0x40] sm:$0xff]
      %v2303 = vld [vmem:[%s2293 + $0x48] sm:$0xff]
      %v2304 = vld [vmem:[%s2293 + $0x50] sm:$0xff]
      %v2305 = vld [vmem:[%s2293 + $0x58] sm:$0xff]
      %v2306 = vld [vmem:[%s2293 + $0x60] sm:$0xff]
      %v2307 = vld [vmem:[%s2293 + $0x68] sm:$0xff]
      %v2308 = vld [vmem:[%s2293 + $0x70] sm:$0xff]
      %v2309 = vld [vmem:[%s2293 + $0x78] sm:$0xff]
      %2310 = vmatprep.subr.mxu0 0.0
      %2311 = vmatpush1.msra.mxu0 %v2294
      %2312 = vmatprep.subr.mxu0 0.0
      %2313 = vmatpush1.msra.mxu0 %v2295
      %2314 = vmatprep.subr.mxu0 0.0
      %2315 = vmatpush1.msra.mxu0 %v2296
      %2316 = vmatprep.subr.mxu0 0.0
      %2317 = vmatpush1.msra.mxu0 %v2297
      %2318 = vmatprep.subr.mxu0 0.0
      %2319 = vmatpush1.msra.mxu0 %v2298
      %2320 = vmatprep.subr.mxu0 0.0
      %2321 = vmatpush1.msra.mxu0 %v2299
      %2322 = vmatprep.subr.mxu0 0.0
      %2323 = vmatpush1.msra.mxu0 %v2300
      %2324 = vmatprep.subr.mxu0 0.0
      %2325 = vmatpush1.msra.mxu0 %v2301
      %2326 = vmatprep.subr.mxu0 0.0
      %2327 = vmatpush1.msra.mxu0 %v2302
      %2328 = vmatprep.subr.mxu0 0.0
      %2329 = vmatpush1.msra.mxu0 %v2303
      %2330 = vmatprep.subr.mxu0 0.0
      %2331 = vmatpush1.msra.mxu0 %v2304
      %2332 = vmatprep.subr.mxu0 0.0
      %2333 = vmatpush1.msra.mxu0 %v2305
      %2334 = vmatprep.subr.mxu0 0.0
      %2335 = vmatpush1.msra.mxu0 %v2306
      %2336 = vmatprep.subr.mxu0 0.0
      %2337 = vmatpush1.msra.mxu0 %v2307
      %2338 = vmatprep.subr.mxu0 0.0
      %2339 = vmatpush1.msra.mxu0 %v2308
      %2340 = vmatprep.subr.mxu0 0.0
      %2341 = vmatpush1.msra.mxu0 %v2309
      %2342 = vmatprep.subr.mxu0 0.0
      %2343 = vmatpush1.msra.mxu0 0.0
      %2344 = vmatprep.subr.mxu0 0.0
      %2345 = vmatpush1.msra.mxu0 0.0
      %2346 = vmatprep.subr.mxu0 0.0
      %2347 = vmatpush1.msra.mxu0 0.0
      %2348 = vmatprep.subr.mxu0 0.0
      %2349 = vmatpush1.msra.mxu0 0.0
      %2350 = vmatprep.subr.mxu0 0.0
      %2351 = vmatpush1.msra.mxu0 0.0
      %2352 = vmatprep.subr.mxu0 0.0
      %2353 = vmatpush1.msra.mxu0 0.0
      %2354 = vmatprep.subr.mxu0 0.0
      %2355 = vmatpush1.msra.mxu0 0.0
      %2356 = vmatprep.subr.mxu0 0.0
      %2357 = vmatpush1.msra.mxu0 0.0
      %2358 = vmatprep.subr.mxu0 0.0
      %2359 = vmatpush1.msra.mxu0 0.0
      %2360 = vmatprep.subr.mxu0 0.0
      %2361 = vmatpush1.msra.mxu0 0.0
      %2362 = vmatprep.subr.mxu0 0.0
      %2363 = vmatpush1.msra.mxu0 0.0
      %2364 = vmatprep.subr.mxu0 0.0
      %2365 = vmatpush1.msra.mxu0 0.0
      %2366 = vmatprep.subr.mxu0 0.0
      %2367 = vmatpush1.msra.mxu0 0.0
      %2368 = vmatprep.subr.mxu0 0.0
      %2369 = vmatpush1.msra.mxu0 0.0
      %2370 = vmatprep.subr.mxu0 0.0
      %2371 = vmatpush1.msra.mxu0 0.0
      %2372 = vmatprep.subr.mxu0 0.0
      %2373 = vmatpush1.msra.mxu0 0.0
      %2374 = vmatprep.mubr.f32.mxu0 0.0
      %2375 = vmatmul.mubr.f32.gmra.mrb[0].mxu0 %v2285
      %v2376 = vpop.f32.mrb[0].mxu0
      %v2377 = vadd.f32 0.0, %v2376
      %v2378 = vpop.f32.mrb[0].mxu0
      %2379 = vmatprep.mubr.f32.mxu0 0.0
      %2380 = vmatmul.mubr.f32.gmra.mrb[0].mxu0 %v2286
      %v2381 = vpop.f32.mrb[0].mxu0
      %v2382 = vadd.f32 0.0, %v2381
      %v2383 = vpop.f32.mrb[0].mxu0
      %2384 = vmatprep.mubr.f32.mxu0 0.0
      %2385 = vmatmul.mubr.f32.gmra.mrb[0].mxu0 %v2287
      %v2386 = vpop.f32.mrb[0].mxu0
      %v2387 = vadd.f32 0.0, %v2386
      %v2388 = vpop.f32.mrb[0].mxu0
      %2389 = vmatprep.mubr.f32.mxu0 0.0
      %2390 = vmatmul.mubr.f32.gmra.mrb[0].mxu0 %v2288
      %v2391 = vpop.f32.mrb[0].mxu0
      %v2392 = vadd.f32 0.0, %v2391
      %v2393 = vpop.f32.mrb[0].mxu0
      %2394 = vmatprep.mubr.f32.mxu0 0.0
      %2395 = vmatmul.mubr.f32.gmra.mrb[0].mxu0 %v2289
      %v2396 = vpop.f32.mrb[0].mxu0
      %v2397 = vadd.f32 0.0, %v2396
      %v2398 = vpop.f32.mrb[0].mxu0
      %2399 = vmatprep.mubr.f32.mxu0 0.0
      %2400 = vmatmul.mubr.f32.gmra.mrb[0].mxu0 %v2290
      %v2401 = vpop.f32.mrb[0].mxu0
      %v2402 = vadd.f32 0.0, %v2401
      %v2403 = vpop.f32.mrb[0].mxu0
      %2404 = vmatprep.mubr.f32.mxu0 0.0
      %2405 = vmatmul.mubr.f32.gmra.mrb[0].mxu0 %v2291
      %v2406 = vpop.f32.mrb[0].mxu0
      %v2407 = vadd.f32 0.0, %v2406
      %v2408 = vpop.f32.mrb[0].mxu0
      %2409 = vmatprep.mubr.f32.mxu0 0.0
      %2410 = vmatmul.mubr.f32.gmra.mrb[0].mxu0 %v2292
      %v2411 = vpop.f32.mrb[0].mxu0
      %v2412 = vadd.f32 0.0, %v2411
      %v2413 = vpop.f32.mrb[0].mxu0
      %2414 = vdwg.mxu0
      %v2415 = vadd.f32 %v2277, %v2377
      %v2416 = vadd.f32 %v2278, %v2382
      %v2417 = vadd.f32 %v2279, %v2387
      %v2418 = vadd.f32 %v2280, %v2392
      %v2419 = vadd.f32 %v2281, %v2397
      %v2420 = vadd.f32 %v2282, %v2402
      %v2421 = vadd.f32 %v2283, %v2407
      %v2422 = vadd.f32 %v2284, %v2412
      %s2423 = scalar_lea.vmem %s5, 8
      %v2424 = vld [vmem:[%s2423] sm:$0x3f]
      %s2425 = scalar_lea.vmem %s6, 128
      %v2426 = vld [vmem:[%s2425] sm:$0xff]
      %v2427 = vld [vmem:[%s2425 + $0x8] sm:$0xff]
      %v2428 = vld [vmem:[%s2425 + $0x10] sm:$0xff]
      %v2429 = vld [vmem:[%s2425 + $0x18] sm:$0xff]
      %v2430 = vld [vmem:[%s2425 + $0x20] sm:$0xff]
      %v2431 = vld [vmem:[%s2425 + $0x28] sm:$0xff]
      %v2432 = vld [vmem:[%s2425 + $0x30] sm:$0xff]
      %v2433 = vld [vmem:[%s2425 + $0x38] sm:$0xff]
      %v2434 = vld [vmem:[%s2425 + $0x40] sm:$0xff]
      %v2435 = vld [vmem:[%s2425 + $0x48] sm:$0xff]
      %v2436 = vld [vmem:[%s2425 + $0x50] sm:$0xff]
      %v2437 = vld [vmem:[%s2425 + $0x58] sm:$0xff]
      %v2438 = vld [vmem:[%s2425 + $0x60] sm:$0xff]
      %v2439 = vld [vmem:[%s2425 + $0x68] sm:$0xff]
      %v2440 = vld [vmem:[%s2425 + $0x70] sm:$0xff]
      %v2441 = vld [vmem:[%s2425 + $0x78] sm:$0xff]
      %v2442 = vlaneseq
      %v2443 = vshrl.u32 %v2442, 7
      %v2444 = vsub.s32 0, %v2443
      %v2445 = vrot.slane %v2424, %v2444
      %v2446 = vadd.f32 %v2415, %v2445
      %v2447 = vadd.f32 %v2416, %v2445
      %v2448 = vadd.f32 %v2417, %v2445
      %v2449 = vadd.f32 %v2418, %v2445
      %v2450 = vadd.f32 %v2419, %v2445
      %v2451 = vadd.f32 %v2420, %v2445
      %v2452 = vadd.f32 %v2421, %v2445
      %v2453 = vadd.f32 %v2422, %v2445
      %v2454 = vmul.f32 %v2446, 0.5
      %v2455 = vmul.f32 %v2447, 0.5
      %v2456 = vmul.f32 %v2448, 0.5
      %v2457 = vmul.f32 %v2449, 0.5
      %v2458 = vmul.f32 %v2450, 0.5
      %v2459 = vmul.f32 %v2451, 0.5
      %v2460 = vmul.f32 %v2452, 0.5
      %v2461 = vmul.f32 %v2453, 0.5
      %v2462 = vmul.f32 %v2446, %v2446
      %v2463 = vmul.f32 %v2447, %v2447
      %v2464 = vmul.f32 %v2448, %v2448
      %v2465 = vmul.f32 %v2449, %v2449
      %v2466 = vmul.f32 %v2450, %v2450
      %v2467 = vmul.f32 %v2451, %v2451
      %v2468 = vmul.f32 %v2452, %v2452
      %v2469 = vmul.f32 %v2453, %v2453
      %v2470 = vmul.f32 %v2462, %v2446
      %v2471 = vmul.f32 %v2463, %v2447
      %v2472 = vmul.f32 %v2464, %v2448
      %v2473 = vmul.f32 %v2465, %v2449
      %v2474 = vmul.f32 %v2466, %v2450
      %v2475 = vmul.f32 %v2467, %v2451
      %v2476 = vmul.f32 %v2468, %v2452
      %v2477 = vmul.f32 %v2469, %v2453
      %v2478 = vmul.f32 %v2470, 0.044715
      %v2479 = vmul.f32 %v2471, 0.044715
      %v2480 = vmul.f32 %v2472, 0.044715
      %v2481 = vmul.f32 %v2473, 0.044715
      %v2482 = vmul.f32 %v2474, 0.044715
      %v2483 = vmul.f32 %v2475, 0.044715
      %v2484 = vmul.f32 %v2476, 0.044715
      %v2485 = vmul.f32 %v2477, 0.044715
      %v2486 = vadd.f32 %v2446, %v2478
      %v2487 = vadd.f32 %v2447, %v2479
      %v2488 = vadd.f32 %v2448, %v2480
      %v2489 = vadd.f32 %v2449, %v2481
      %v2490 = vadd.f32 %v2450, %v2482
      %v2491 = vadd.f32 %v2451, %v2483
      %v2492 = vadd.f32 %v2452, %v2484
      %v2493 = vadd.f32 %v2453, %v2485
      %v2494 = vmul.f32 %v2486, 0.7978846
      %v2495 = vmul.f32 %v2487, 0.7978846
      %v2496 = vmul.f32 %v2488, 0.7978846
      %v2497 = vmul.f32 %v2489, 0.7978846
      %v2498 = vmul.f32 %v2490, 0.7978846
      %v2499 = vmul.f32 %v2491, 0.7978846
      %v2500 = vmul.f32 %v2492, 0.7978846
      %v2501 = vmul.f32 %v2493, 0.7978846
      %v2502 = vtanh.pop %v2494
      %v2503 = vtanh.pop %v2495
      %v2504 = vtanh.pop %v2496
      %v2505 = vtanh.pop %v2497
      %v2506 = vtanh.pop %v2498
      %v2507 = vtanh.pop %v2499
      %v2508 = vtanh.pop %v2500
      %v2509 = vtanh.pop %v2501
      %v2510 = vadd.f32 %v2502, 1.0
      %v2511 = vadd.f32 %v2503, 1.0
      %v2512 = vadd.f32 %v2504, 1.0
      %v2513 = vadd.f32 %v2505, 1.0
      %v2514 = vadd.f32 %v2506, 1.0
      %v2515 = vadd.f32 %v2507, 1.0
      %v2516 = vadd.f32 %v2508, 1.0
      %v2517 = vadd.f32 %v2509, 1.0
      %v2518 = vmul.f32 %v2454, %v2510
      %v2519 = vmul.f32 %v2455, %v2511
      %v2520 = vmul.f32 %v2456, %v2512
      %v2521 = vmul.f32 %v2457, %v2513
      %v2522 = vmul.f32 %v2458, %v2514
      %v2523 = vmul.f32 %v2459, %v2515
      %v2524 = vmul.f32 %v2460, %v2516
      %v2525 = vmul.f32 %v2461, %v2517
      %v2526 = vlaneseq
      %v2527 = vshrl.u32 %v2526, 7
      %v2528 = vsub.s32 1, %v2527
      %v2529 = vrot.slane %v2424, %v2528
      %v2530 = vmul.f32 %v2518, %v2529
      %v2531 = vmul.f32 %v2519, %v2529
      %v2532 = vmul.f32 %v2520, %v2529
      %v2533 = vmul.f32 %v2521, %v2529
      %v2534 = vmul.f32 %v2522, %v2529
      %v2535 = vmul.f32 %v2523, %v2529
      %v2536 = vmul.f32 %v2524, %v2529
      %v2537 = vmul.f32 %v2525, %v2529
      %v2538 = vlaneseq
      %v2539 = vshrl.u32 %v2538, 7
      %v2540 = vsub.s32 2, %v2539
      %v2541 = vrot.slane %v2424, %v2540
      %v2542 = vadd.f32 %v2530, %v2541
      %v2543 = vadd.f32 %v2531, %v2541
      %v2544 = vadd.f32 %v2532, %v2541
      %v2545 = vadd.f32 %v2533, %v2541
      %v2546 = vadd.f32 %v2534, %v2541
      %v2547 = vadd.f32 %v2535, %v2541
      %v2548 = vadd.f32 %v2536, %v2541
      %v2549 = vadd.f32 %v2537, %v2541
      %v2550 = vadd.f32 %v2542, %v2001
      %v2551 = vadd.f32 %v2543, %v2002
      %v2552 = vadd.f32 %v2544, %v2003
      %v2553 = vadd.f32 %v2545, %v2004
      %v2554 = vadd.f32 %v2546, %v2005
      %v2555 = vadd.f32 %v2547, %v2006
      %v2556 = vadd.f32 %v2548, %v2007
      %v2557 = vadd.f32 %v2549, %v2008
      %2558 = vmatprep.subr.mxu0 0.0
      %2559 = vmatpush1.msra.mxu0 %v2426
      %2560 = vmatprep.subr.mxu0 0.0
      %2561 = vmatpush1.msra.mxu0 %v2427
      %2562 = vmatprep.subr.mxu0 0.0
      %2563 = vmatpush1.msra.mxu0 %v2428
      %2564 = vmatprep.subr.mxu0 0.0
      %2565 = vmatpush1.msra.mxu0 %v2429
      %2566 = vmatprep.subr.mxu0 0.0
      %2567 = vmatpush1.msra.mxu0 %v2430
      %2568 = vmatprep.subr.mxu0 0.0
      %2569 = vmatpush1.msra.mxu0 %v2431
      %2570 = vmatprep.subr.mxu0 0.0
      %2571 = vmatpush1.msra.mxu0 %v2432
      %2572 = vmatprep.subr.mxu0 0.0
      %2573 = vmatpush1.msra.mxu0 %v2433
      %2574 = vmatprep.subr.mxu0 0.0
      %2575 = vmatpush1.msra.mxu0 %v2434
      %2576 = vmatprep.subr.mxu0 0.0
      %2577 = vmatpush1.msra.mxu0 %v2435
      %2578 = vmatprep.subr.mxu0 0.0
      %2579 = vmatpush1.msra.mxu0 %v2436
      %2580 = vmatprep.subr.mxu0 0.0
      %2581 = vmatpush1.msra.mxu0 %v2437
      %2582 = vmatprep.subr.mxu0 0.0
      %2583 = vmatpush1.msra.mxu0 %v2438
      %2584 = vmatprep.subr.mxu0 0.0
      %2585 = vmatpush1.msra.mxu0 %v2439
      %2586 = vmatprep.subr.mxu0 0.0
      %2587 = vmatpush1.msra.mxu0 %v2440
      %2588 = vmatprep.subr.mxu0 0.0
      %2589 = vmatpush1.msra.mxu0 %v2441
      %2590 = vmatprep.subr.mxu0 0.0
      %2591 = vmatpush1.msra.mxu0 0.0
      %2592 = vmatprep.subr.mxu0 0.0
      %2593 = vmatpush1.msra.mxu0 0.0
      %2594 = vmatprep.subr.mxu0 0.0
      %2595 = vmatpush1.msra.mxu0 0.0
      %2596 = vmatprep.subr.mxu0 0.0
      %2597 = vmatpush1.msra.mxu0 0.0
      %2598 = vmatprep.subr.mxu0 0.0
      %2599 = vmatpush1.msra.mxu0 0.0
      %2600 = vmatprep.subr.mxu0 0.0
      %2601 = vmatpush1.msra.mxu0 0.0
      %2602 = vmatprep.subr.mxu0 0.0
      %2603 = vmatpush1.msra.mxu0 0.0
      %2604 = vmatprep.subr.mxu0 0.0
      %2605 = vmatpush1.msra.mxu0 0.0
      %2606 = vmatprep.subr.mxu0 0.0
      %2607 = vmatpush1.msra.mxu0 0.0
      %2608 = vmatprep.subr.mxu0 0.0
      %2609 = vmatpush1.msra.mxu0 0.0
      %2610 = vmatprep.subr.mxu0 0.0
      %2611 = vmatpush1.msra.mxu0 0.0
      %2612 = vmatprep.subr.mxu0 0.0
      %2613 = vmatpush1.msra.mxu0 0.0
      %2614 = vmatprep.subr.mxu0 0.0
      %2615 = vmatpush1.msra.mxu0 0.0
      %2616 = vmatprep.subr.mxu0 0.0
      %2617 = vmatpush1.msra.mxu0 0.0
      %2618 = vmatprep.subr.mxu0 0.0
      %2619 = vmatpush1.msra.mxu0 0.0
      %2620 = vmatprep.subr.mxu0 0.0
      %2621 = vmatpush1.msra.mxu0 0.0
      %2622 = vmatprep.mubr.f32.mxu0 0.0
      %2623 = vmatmul.mubr.f32.gmra.mrb[0].mxu0 %v2550
      %v2624 = vpop.f32.mrb[0].mxu0
      %v2625 = vadd.f32 0.0, %v2624
      %v2626 = vpop.f32.mrb[0].mxu0
      %2627 = vmatprep.mubr.f32.mxu0 0.0
      %2628 = vmatmul.mubr.f32.gmra.mrb[0].mxu0 %v2551
      %v2629 = vpop.f32.mrb[0].mxu0
      %v2630 = vadd.f32 0.0, %v2629
      %v2631 = vpop.f32.mrb[0].mxu0
      %2632 = vmatprep.mubr.f32.mxu0 0.0
      %2633 = vmatmul.mubr.f32.gmra.mrb[0].mxu0 %v2552
      %v2634 = vpop.f32.mrb[0].mxu0
      %v2635 = vadd.f32 0.0, %v2634
      %v2636 = vpop.f32.mrb[0].mxu0
      %2637 = vmatprep.mubr.f32.mxu0 0.0
      %2638 = vmatmul.mubr.f32.gmra.mrb[0].mxu0 %v2553
      %v2639 = vpop.f32.mrb[0].mxu0
      %v2640 = vadd.f32 0.0, %v2639
      %v2641 = vpop.f32.mrb[0].mxu0
      %2642 = vmatprep.mubr.f32.mxu0 0.0
      %2643 = vmatmul.mubr.f32.gmra.mrb[0].mxu0 %v2554
      %v2644 = vpop.f32.mrb[0].mxu0
      %v2645 = vadd.f32 0.0, %v2644
      %v2646 = vpop.f32.mrb[0].mxu0
      %2647 = vmatprep.mubr.f32.mxu0 0.0
      %2648 = vmatmul.mubr.f32.gmra.mrb[0].mxu0 %v2555
      %v2649 = vpop.f32.mrb[0].mxu0
      %v2650 = vadd.f32 0.0, %v2649
      %v2651 = vpop.f32.mrb[0].mxu0
      %2652 = vmatprep.mubr.f32.mxu0 0.0
      %2653 = vmatmul.mubr.f32.gmra.mrb[0].mxu0 %v2556
      %v2654 = vpop.f32.mrb[0].mxu0
      %v2655 = vadd.f32 0.0, %v2654
      %v2656 = vpop.f32.mrb[0].mxu0
      %2657 = vmatprep.mubr.f32.mxu0 0.0
      %2658 = vmatmul.mubr.f32.gmra.mrb[0].mxu0 %v2557
      %v2659 = vpop.f32.mrb[0].mxu0
      %v2660 = vadd.f32 0.0, %v2659
      %v2661 = vpop.f32.mrb[0].mxu0
      %2662 = vdwg.mxu0
      %v2663 = vlaneseq
      %v2664 = vshrl.u32 %v2663, 7
      %v2665 = vsub.s32 3, %v2664
      %v2666 = vrot.slane %v2424, %v2665
      %v2667 = vadd.f32 %v2625, %v2666
      %v2668 = vadd.f32 %v2630, %v2666
      %v2669 = vadd.f32 %v2635, %v2666
      %v2670 = vadd.f32 %v2640, %v2666
      %v2671 = vadd.f32 %v2645, %v2666
      %v2672 = vadd.f32 %v2650, %v2666
      %v2673 = vadd.f32 %v2655, %v2666
      %v2674 = vadd.f32 %v2660, %v2666
      %v2675 = vmul.f32 %v2667, 0.5
      %v2676 = vmul.f32 %v2668, 0.5
      %v2677 = vmul.f32 %v2669, 0.5
      %v2678 = vmul.f32 %v2670, 0.5
      %v2679 = vmul.f32 %v2671, 0.5
      %v2680 = vmul.f32 %v2672, 0.5
      %v2681 = vmul.f32 %v2673, 0.5
      %v2682 = vmul.f32 %v2674, 0.5
      %v2683 = vmul.f32 %v2667, %v2667
      %v2684 = vmul.f32 %v2668, %v2668
      %v2685 = vmul.f32 %v2669, %v2669
      %v2686 = vmul.f32 %v2670, %v2670
      %v2687 = vmul.f32 %v2671, %v2671
      %v2688 = vmul.f32 %v2672, %v2672
      %v2689 = vmul.f32 %v2673, %v2673
      %v2690 = vmul.f32 %v2674, %v2674
      %v2691 = vmul.f32 %v2683, %v2667
      %v2692 = vmul.f32 %v2684, %v2668
      %v2693 = vmul.f32 %v2685, %v2669
      %v2694 = vmul.f32 %v2686, %v2670
      %v2695 = vmul.f32 %v2687, %v2671
      %v2696 = vmul.f32 %v2688, %v2672
      %v2697 = vmul.f32 %v2689, %v2673
      %v2698 = vmul.f32 %v2690, %v2674
      %v2699 = vmul.f32 %v2691, 0.044715
      %v2700 = vmul.f32 %v2692, 0.044715
      %v2701 = vmul.f32 %v2693, 0.044715
      %v2702 = vmul.f32 %v2694, 0.044715
      %v2703 = vmul.f32 %v2695, 0.044715
      %v2704 = vmul.f32 %v2696, 0.044715
      %v2705 = vmul.f32 %v2697, 0.044715
      %v2706 = vmul.f32 %v2698, 0.044715
      %v2707 = vadd.f32 %v2667, %v2699
      %v2708 = vadd.f32 %v2668, %v2700
      %v2709 = vadd.f32 %v2669, %v2701
      %v2710 = vadd.f32 %v2670, %v2702
      %v2711 = vadd.f32 %v2671, %v2703
      %v2712 = vadd.f32 %v2672, %v2704
      %v2713 = vadd.f32 %v2673, %v2705
      %v2714 = vadd.f32 %v2674, %v2706
      %v2715 = vmul.f32 %v2707, 0.7978846
      %v2716 = vmul.f32 %v2708, 0.7978846
      %v2717 = vmul.f32 %v2709, 0.7978846
      %v2718 = vmul.f32 %v2710, 0.7978846
      %v2719 = vmul.f32 %v2711, 0.7978846
      %v2720 = vmul.f32 %v2712, 0.7978846
      %v2721 = vmul.f32 %v2713, 0.7978846
      %v2722 = vmul.f32 %v2714, 0.7978846
      %v2723 = vtanh.pop %v2715
      %v2724 = vtanh.pop %v2716
      %v2725 = vtanh.pop %v2717
      %v2726 = vtanh.pop %v2718
      %v2727 = vtanh.pop %v2719
      %v2728 = vtanh.pop %v2720
      %v2729 = vtanh.pop %v2721
      %v2730 = vtanh.pop %v2722
      %v2731 = vadd.f32 %v2723, 1.0
      %v2732 = vadd.f32 %v2724, 1.0
      %v2733 = vadd.f32 %v2725, 1.0
      %v2734 = vadd.f32 %v2726, 1.0
      %v2735 = vadd.f32 %v2727, 1.0
      %v2736 = vadd.f32 %v2728, 1.0
      %v2737 = vadd.f32 %v2729, 1.0
      %v2738 = vadd.f32 %v2730, 1.0
      %v2739 = vmul.f32 %v2675, %v2731
      %v2740 = vmul.f32 %v2676, %v2732
      %v2741 = vmul.f32 %v2677, %v2733
      %v2742 = vmul.f32 %v2678, %v2734
      %v2743 = vmul.f32 %v2679, %v2735
      %v2744 = vmul.f32 %v2680, %v2736
      %v2745 = vmul.f32 %v2681, %v2737
      %v2746 = vmul.f32 %v2682, %v2738
      %v2747 = vlaneseq
      %v2748 = vshrl.u32 %v2747, 7
      %v2749 = vsub.s32 4, %v2748
      %v2750 = vrot.slane %v2424, %v2749
      %v2751 = vmul.f32 %v2739, %v2750
      %v2752 = vmul.f32 %v2740, %v2750
      %v2753 = vmul.f32 %v2741, %v2750
      %v2754 = vmul.f32 %v2742, %v2750
      %v2755 = vmul.f32 %v2743, %v2750
      %v2756 = vmul.f32 %v2744, %v2750
      %v2757 = vmul.f32 %v2745, %v2750
      %v2758 = vmul.f32 %v2746, %v2750
      %v2759 = vlaneseq
      %v2760 = vshrl.u32 %v2759, 7
      %v2761 = vsub.s32 5, %v2760
      %v2762 = vrot.slane %v2424, %v2761
      %v2763 = vadd.f32 %v2751, %v2762
      %v2764 = vadd.f32 %v2752, %v2762
      %v2765 = vadd.f32 %v2753, %v2762
      %v2766 = vadd.f32 %v2754, %v2762
      %v2767 = vadd.f32 %v2755, %v2762
      %v2768 = vadd.f32 %v2756, %v2762
      %v2769 = vadd.f32 %v2757, %v2762
      %v2770 = vadd.f32 %v2758, %v2762
      %2771 = vst [vmem:[%s278] sm:$0xff] %v2763
      %2772 = vst [vmem:[%s278 + $0x8] sm:$0xff] %v2764
      %2773 = vst [vmem:[%s278 + $0x10] sm:$0xff] %v2765
      %2774 = vst [vmem:[%s278 + $0x18] sm:$0xff] %v2766
      %2775 = vst [vmem:[%s278 + $0x20] sm:$0xff] %v2767
      %2776 = vst [vmem:[%s278 + $0x28] sm:$0xff] %v2768
      %2777 = vst [vmem:[%s278 + $0x30] sm:$0xff] %v2769
      %2778 = vst [vmem:[%s278 + $0x38] sm:$0xff] %v2770
      %p2779 = scmp.lt.s32.totalorder %s18, 1
      %s2780 = scalar_select %p2779, %s18, 1
      %s2781 = smul.addr %s2780, 8
      %s2782 = smul.addr %s2781, 8
      %s2783 = scalar_lea.vmem %s7, %s2782
      // Predicated region
      $region49: #{mixer_block_forward.1} parent=47 // pred_check
        %p2784 = pneg %p188
      $region50: #{mixer_block_forward.1} parent=47 // pred_check_branch
        %2786 = sbr.rel (%p2784) target = $region52
      $region51: #{mixer_block_forward.1} parent=47 // pred_region
        _
      $region52: #{mixer_block_forward.1} parent=47 // pred_fallthru
        _
    $region48: #{mixer_block_forward.1} parent=5 // pred_fallthru
      _
    %p2787 = scmp.le.s32.totalorder 2, %s13
    // Predicated region
    $region53: #{mixer_block_forward.1} parent=5 // pred_check
      %p2788 = pneg %p2787
    $region54: #{mixer_block_forward.1} parent=5 // pred_check_branch
      %2790 = sbr.rel (%p2788) target = $region56
    $region55: #{mixer_block_forward.1} parent=5 // pred_region
      %s2791 = ssub.s32 %s13, 2
      // Predicated region
      $region57: #{mixer_block_forward.1} parent=55 // pred_check
        %p2792 = pneg %p194
      $region58: #{mixer_block_forward.1} parent=55 // pred_check_branch
        %2794 = sbr.rel (%p2792) target = $region60
      $region59: #{mixer_block_forward.1} parent=55 // pred_region
        %p2795 = scmp.lt.s32.totalorder %s19, 1
        %s2796 = scalar_select %p2795, %s19, 1
        %s2797 = smul.addr %s2796, 8
        %s2798 = smul.addr %s2797, 8
        %s2799 = scalar_lea.vmem %s7, %s2798
      $region60: #{mixer_block_forward.1} parent=55 // pred_fallthru
        _
    $region56: #{mixer_block_forward.1} parent=5 // pred_fallthru
      _
  $region6: #{mixer_block_forward.1} parent=0 // loop_footer
    %s17 = sadd.s32 1, %s13
  $region7: #{mixer_block_forward.1} parent=0 // loop_footer_branch
    %12 = sbr.rel target = $region3
  $region8: #{mixer_block_forward.1} parent=0 // loop_exit
    _

</llo_original>
